<compile_context>
chip_gen: v5e
topology: v5e:2x2
jax: 0.10.0
libtpu: 0.0.40
codegen_flags: <defaults>
</compile_context>

<pallas_src>
import functools

import jax
import jax.numpy as jnp
from jax.experimental import pallas as pl
from jax.experimental.pallas import tpu as pltpu

INPUT_DIM = 32
EMB_DIM = 128
N_HEADS = 4          # heads collapse: softmax over a single key is exactly 1
N_LAYERS = 2
FF_DIM = 256
LN_EPS = 1e-5
LANE = 128


def _layernorm(x, w, b):
    # PyTorch LayerNorm: biased variance, eps inside sqrt.
    mu = jnp.mean(x, axis=-1, keepdims=True)
    xc = x - mu
    var = jnp.mean(xc * xc, axis=-1, keepdims=True)
    inv = jax.lax.rsqrt(var + LN_EPS)
    return xc * inv * w + b


def transformer_kernel(
    x_ref,
    emb_w_ref, emb_b_ref,
    sa_w_ref, sa_b_ref,
    ln1_w_ref, ln1_b_ref,
    ff1_w_ref, ff1_b_ref,
    ff2_w_ref, ff2_b_ref,
    ln2_w_ref, ln2_b_ref,
    dec_w_ref, dec_b_ref,
    y_ref, z_ref,
):
    bf16 = jnp.bfloat16
    x = x_ref[...]                                  # (TB, 128) bf16, lane-padded input

    # embedding (padded input cols / weight rows are zero => exact)
    h = jnp.dot(x, emb_w_ref[...], preferred_element_type=jnp.float32) + emb_b_ref[...]

    for l in range(N_LAYERS):                       # static unroll, N_LAYERS = 2
        # --- self attention (seq_len == 1): context == V; V-proj and out-proj
        #     were folded offline into a single (E, E) matrix -> one MXU op.
        sa = (
            jnp.dot(h.astype(bf16), sa_w_ref[l], preferred_element_type=jnp.float32)
            + sa_b_ref[l]
        )
        h = _layernorm(h + sa, ln1_w_ref[l], ln1_b_ref[l])

        # --- feed-forward ---
        ff = (
            jnp.dot(h.astype(bf16), ff1_w_ref[l], preferred_element_type=jnp.float32)
            + ff1_b_ref[l]
        )
        ff = jnp.maximum(ff, 0.0)                   # relu
        ff = (
            jnp.dot(ff.astype(bf16), ff2_w_ref[l], preferred_element_type=jnp.float32)
            + ff2_b_ref[l]
        )
        h = _layernorm(h + ff, ln2_w_ref[l], ln2_b_ref[l])

    z_ref[...] = h                                  # (TB, 128) f32, lane dense
    # decoder, written lane-dense into a (TB, 128) block (cols >= INPUT_DIM are zero)
    y_ref[...] = (
        jnp.dot(h.astype(bf16), dec_w_ref[...], preferred_element_type=jnp.float32)
        + dec_b_ref[...]
    )


def _full_spec(shape):
    ndim = len(shape)
    return pl.BlockSpec(shape, lambda i, _n=ndim: (0,) * _n)


@functools.partial(jax.jit, static_argnames=("tile_b",))
def transformer_encoder(x, params, tile_b=128):
    B, D_in = x.shape
    E = EMB_DIM
    D_pad = pl.cdiv(D_in, LANE) * LANE              # lane-dense input/output width
    B_pad = pl.cdiv(B, tile_b) * tile_b             # pad batch to tile multiple

    # ---- offline (static-weight) algebra & layout prep ------------------------
    # V-only slice of the in-projection, folded with the output projection:
    #   sa = h @ (Wv @ Wout) + (bv @ Wout + bout)
    Wv = params["inproj_w"][:, :, 2 * E: 3 * E]     # (L, E, E)
    bv = params["inproj_b"][:, :, 2 * E: 3 * E]     # (L, 1, E)
    sa_w = jnp.einsum("lek,lkm->lem", Wv, params["outproj_w"])
    sa_b = jnp.einsum("lok,lkm->lom", bv, params["outproj_w"]) + params["outproj_b"]

    # Lane-dense padding of the 32-wide input / output projections.
    emb_w = jnp.zeros((D_pad, E), jnp.float32).at[:D_in].set(params["emb_w"])
    dec_w = jnp.zeros((E, D_pad), jnp.float32).at[:, :D_in].set(params["dec_w"])
    dec_b = jnp.zeros((1, D_pad), jnp.float32).at[:, :D_in].set(params["dec_b"])

    x_pad = jnp.zeros((B_pad, D_pad), jnp.float32).at[:B, :D_in].set(x)

    bf16 = jnp.bfloat16
    weights = [
        emb_w.astype(bf16), params["emb_b"],
        sa_w.astype(bf16), sa_b,
        params["ln1_w"], params["ln1_b"],
        params["ff1_w"].astype(bf16), params["ff1_b"],
        params["ff2_w"].astype(bf16), params["ff2_b"],
        params["ln2_w"], params["ln2_b"],
        dec_w.astype(bf16), dec_b,
    ]

    grid = (B_pad // tile_b,)
    in_specs = [pl.BlockSpec((tile_b, D_pad), lambda i: (i, 0))]
    in_specs += [_full_spec(tuple(w.shape)) for w in weights]

    out_shape = (
        jax.ShapeDtypeStruct((B_pad, D_pad), jnp.float32),   # decoder output y (padded)
        jax.ShapeDtypeStruct((B_pad, E), jnp.float32),       # latent z
    )
    out_specs = (
        pl.BlockSpec((tile_b, D_pad), lambda i: (i, 0)),
        pl.BlockSpec((tile_b, E), lambda i: (i, 0)),
    )

    y_full, z_full = pl.pallas_call(
        transformer_kernel,
        out_shape=out_shape,
        grid_spec=pltpu.PrefetchScalarGridSpec(
            num_scalar_prefetch=0,
            grid=grid,
            in_specs=in_specs,
            out_specs=out_specs,
        ),
        compiler_params=pltpu.CompilerParams(
            dimension_semantics=("parallel",),      # batch tiles shard across TCs (v7x)
        ),
    )(x_pad.astype(bf16), *weights)

    return y_full[:B, :D_in], z_full[:B]


def init_params(key):
    """Deterministic synthetic parameters (shapes follow the nn.Module __init__)."""
    def nrm(k, shape, scale=0.02):
        return (scale * jax.random.normal(k, shape)).astype(jnp.float32)

    keys = jax.random.split(key, 16)
    L, E, F, D = N_LAYERS, EMB_DIM, FF_DIM, INPUT_DIM
    params = {
        "emb_w": nrm(keys[0], (D, E)),
        "emb_b": nrm(keys[1], (1, E)),
        "inproj_w": nrm(keys[2], (L, E, 3 * E)),
        "inproj_b": nrm(keys[3], (L, 1, 3 * E)),
        "outproj_w": nrm(keys[4], (L, E, E)),
        "outproj_b": nrm(keys[5], (L, 1, E)),
        "ln1_w": jnp.ones((L, 1, E), jnp.float32),
        "ln1_b": jnp.zeros((L, 1, E), jnp.float32),
        "ff1_w": nrm(keys[6], (L, E, F)),
        "ff1_b": nrm(keys[7], (L, 1, F)),
        "ff2_w": nrm(keys[8], (L, F, E)),
        "ff2_b": nrm(keys[9], (L, 1, E)),
        "ln2_w": jnp.ones((L, 1, E), jnp.float32),
        "ln2_b": jnp.zeros((L, 1, E), jnp.float32),
        "dec_w": nrm(keys[10], (E, D)),
        "dec_b": nrm(keys[11], (1, D)),
    }
    return params


def reference(x, p):
    """Pure-JAX f32 reference of the same forward pass (for a sanity check)."""
    E = EMB_DIM
    h = x @ p["emb_w"] + p["emb_b"]
    for l in range(N_LAYERS):
        qkv = h @ p["inproj_w"][l] + p["inproj_b"][l]
        v = qkv[:, 2 * E: 3 * E]  # softmax over a single key == 1
        sa = v @ p["outproj_w"][l] + p["outproj_b"][l]
        h = _layernorm(h + sa, p["ln1_w"][l], p["ln1_b"][l])
        ff = jnp.maximum(h @ p["ff1_w"][l] + p["ff1_b"][l], 0.0)
        ff = ff @ p["ff2_w"][l] + p["ff2_b"][l]
        h = _layernorm(h + ff, p["ln2_w"][l], p["ln2_b"][l])
    y = h @ p["dec_w"] + p["dec_b"]
    return y, h


if __name__ == "__main__":
    key = jax.random.PRNGKey(0)
    k_x, k_p = jax.random.split(key)
    B = 256  # two 128-row tiles -> grid of 2 "parallel" programs (both v7x TCs busy)
    x = jax.random.normal(k_x, (B, INPUT_DIM), dtype=jnp.float32)
    params = init_params(k_p)

    y, z = transformer_encoder(x, params)
    jax.block_until_ready((y, z))

    y_ref, z_ref = reference(x, params)
    assert y.shape == (B, INPUT_DIM) and z.shape == (B, EMB_DIM)
    # bf16 matmul operands (f32 accumulation) -> loosened tolerance vs f32 reference.
    assert jnp.allclose(y, y_ref, atol=5e-2, rtol=5e-2), "decoder output mismatch"
    assert jnp.allclose(z, z_ref, atol=5e-2, rtol=5e-2), "latent output mismatch"

    print("KERNEL_OK")
</pallas_src>

<mosaic_0001>
module attributes {stable_mosaic.version = 11 : i64} {
  func.func @transformer_kernel(%arg0: i32, %arg1: memref<128x128xbf16, #tpu.memory_space<vmem>>, %arg2: memref<128x128xbf16, #tpu.memory_space<vmem>>, %arg3: memref<1x128xf32, #tpu.memory_space<vmem>>, %arg4: memref<2x128x128xbf16, #tpu.memory_space<vmem>>, %arg5: memref<2x1x128xf32, #tpu.memory_space<vmem>>, %arg6: memref<2x1x128xf32, #tpu.memory_space<vmem>>, %arg7: memref<2x1x128xf32, #tpu.memory_space<vmem>>, %arg8: memref<2x128x256xbf16, #tpu.memory_space<vmem>>, %arg9: memref<2x1x256xf32, #tpu.memory_space<vmem>>, %arg10: memref<2x256x128xbf16, #tpu.memory_space<vmem>>, %arg11: memref<2x1x128xf32, #tpu.memory_space<vmem>>, %arg12: memref<2x1x128xf32, #tpu.memory_space<vmem>>, %arg13: memref<2x1x128xf32, #tpu.memory_space<vmem>>, %arg14: memref<128x128xbf16, #tpu.memory_space<vmem>>, %arg15: memref<1x128xf32, #tpu.memory_space<vmem>>, %arg16: memref<128x128xf32, #tpu.memory_space<vmem>>, %arg17: memref<128x128xf32, #tpu.memory_space<vmem>>) attributes {dimension_semantics = [#tpu.dimension_semantics<parallel>], iteration_bounds = array<i64: 2>, scalar_prefetch = 0 : i64, scratch_operands = 0 : i64, tpu.core_type = #tpu.core_type<tc>, window_params = [{transform_indices = @transform_0, window_bounds = array<i64: 128, 128>}, {pipeline_mode = #tpu.pipeline_mode<synchronous>, transform_indices = @transform_1, window_bounds = array<i64: 128, 128>}, {pipeline_mode = #tpu.pipeline_mode<synchronous>, transform_indices = @transform_2, window_bounds = array<i64: 1, 128>}, {pipeline_mode = #tpu.pipeline_mode<synchronous>, transform_indices = @transform_3, window_bounds = array<i64: 2, 128, 128>}, {pipeline_mode = #tpu.pipeline_mode<synchronous>, transform_indices = @transform_4, window_bounds = array<i64: 2, 1, 128>}, {pipeline_mode = #tpu.pipeline_mode<synchronous>, transform_indices = @transform_5, window_bounds = array<i64: 2, 1, 128>}, {pipeline_mode = #tpu.pipeline_mode<synchronous>, transform_indices = @transform_6, window_bounds = array<i64: 2, 1, 128>}, {pipeline_mode = #tpu.pipeline_mode<synchronous>, transform_indices = @transform_7, window_bounds = array<i64: 2, 128, 256>}, {pipeline_mode = #tpu.pipeline_mode<synchronous>, transform_indices = @transform_8, window_bounds = array<i64: 2, 1, 256>}, {pipeline_mode = #tpu.pipeline_mode<synchronous>, transform_indices = @transform_9, window_bounds = array<i64: 2, 256, 128>}, {pipeline_mode = #tpu.pipeline_mode<synchronous>, transform_indices = @transform_10, window_bounds = array<i64: 2, 1, 128>}, {pipeline_mode = #tpu.pipeline_mode<synchronous>, transform_indices = @transform_11, window_bounds = array<i64: 2, 1, 128>}, {pipeline_mode = #tpu.pipeline_mode<synchronous>, transform_indices = @transform_12, window_bounds = array<i64: 2, 1, 128>}, {pipeline_mode = #tpu.pipeline_mode<synchronous>, transform_indices = @transform_13, window_bounds = array<i64: 128, 128>}, {pipeline_mode = #tpu.pipeline_mode<synchronous>, transform_indices = @transform_14, window_bounds = array<i64: 1, 128>}, {transform_indices = @transform_15, window_bounds = array<i64: 128, 128>}, {transform_indices = @transform_16, window_bounds = array<i64: 128, 128>}]} {
    %c0 = arith.constant 0 : index
    %c0_0 = arith.constant 0 : index
    %0 = vector.load %arg1[%c0, %c0_0] : memref<128x128xbf16, #tpu.memory_space<vmem>>, vector<128x128xbf16>
    %c0_1 = arith.constant 0 : index
    %c0_2 = arith.constant 0 : index
    %1 = vector.load %arg2[%c0_1, %c0_2] : memref<128x128xbf16, #tpu.memory_space<vmem>>, vector<128x128xbf16>
    %cst = arith.constant dense<0.000000e+00> : vector<128x128xf32>
    %2 = tpu.matmul %0, %1, %cst {dimension_numbers = #tpu.dot_dimension_numbers<[1], [0], [0], [1], [0, 0, 1, 1], [], []>} : vector<128x128xbf16>, vector<128x128xbf16>, vector<128x128xf32> -> vector<128x128xf32>
    %c0_3 = arith.constant 0 : index
    %c0_4 = arith.constant 0 : index
    %3 = vector.load %arg3[%c0_3, %c0_4] : memref<1x128xf32, #tpu.memory_space<vmem>>, vector<1x128xf32>
    %4 = vector.broadcast %3 : vector<1x128xf32> to vector<128x128xf32>
    %5 = arith.addf %2, %4 : vector<128x128xf32>
    %6 = arith.truncf %5 : vector<128x128xf32> to vector<128x128xbf16>
    %c0_5 = arith.constant 0 : index
    %c0_6 = arith.constant 0 : index
    %c0_7 = arith.constant 0 : index
    %7 = vector.load %arg4[%c0_5, %c0_6, %c0_7] : memref<2x128x128xbf16, #tpu.memory_space<vmem>>, vector<1x128x128xbf16>
    %8 = vector.shape_cast %7 : vector<1x128x128xbf16> to vector<128x128xbf16>
    %cst_8 = arith.constant dense<0.000000e+00> : vector<128x128xf32>
    %9 = tpu.matmul %6, %8, %cst_8 {dimension_numbers = #tpu.dot_dimension_numbers<[1], [0], [0], [1], [0, 0, 1, 1], [], []>} : vector<128x128xbf16>, vector<128x128xbf16>, vector<128x128xf32> -> vector<128x128xf32>
    %c0_9 = arith.constant 0 : index
    %c0_10 = arith.constant 0 : index
    %c0_11 = arith.constant 0 : index
    %10 = vector.load %arg5[%c0_9, %c0_10, %c0_11] : memref<2x1x128xf32, #tpu.memory_space<vmem>>, vector<1x1x128xf32>
    %11 = vector.shape_cast %10 : vector<1x1x128xf32> to vector<1x128xf32>
    %12 = vector.broadcast %11 : vector<1x128xf32> to vector<128x128xf32>
    %13 = arith.addf %9, %12 : vector<128x128xf32>
    %14 = arith.addf %5, %13 : vector<128x128xf32>
    %c0_12 = arith.constant 0 : index
    %c0_13 = arith.constant 0 : index
    %c0_14 = arith.constant 0 : index
    %15 = vector.load %arg6[%c0_12, %c0_13, %c0_14] : memref<2x1x128xf32, #tpu.memory_space<vmem>>, vector<1x1x128xf32>
    %16 = vector.shape_cast %15 : vector<1x1x128xf32> to vector<1x128xf32>
    %c0_15 = arith.constant 0 : index
    %c0_16 = arith.constant 0 : index
    %c0_17 = arith.constant 0 : index
    %17 = vector.load %arg7[%c0_15, %c0_16, %c0_17] : memref<2x1x128xf32, #tpu.memory_space<vmem>>, vector<1x1x128xf32>
    %18 = vector.shape_cast %17 : vector<1x1x128xf32> to vector<1x128xf32>
    %cst_18 = arith.constant dense<0.000000e+00> : vector<128xf32>
    %19 = vector.multi_reduction <add>, %14, %cst_18 [1] : vector<128x128xf32> to vector<128xf32>
    %20 = vector.shape_cast %19 : vector<128xf32> to vector<128x1xf32>
    %cst_19 = arith.constant 1.280000e+02 : f32
    %21 = vector.broadcast %cst_19 : f32 to vector<128x1xf32>
    %22 = arith.divf %20, %21 : vector<128x1xf32>
    %23 = vector.broadcast %22 : vector<128x1xf32> to vector<128x128xf32>
    %24 = arith.subf %14, %23 : vector<128x128xf32>
    %25 = arith.mulf %24, %24 : vector<128x128xf32>
    %cst_20 = arith.constant dense<0.000000e+00> : vector<128xf32>
    %26 = vector.multi_reduction <add>, %25, %cst_20 [1] : vector<128x128xf32> to vector<128xf32>
    %27 = vector.shape_cast %26 : vector<128xf32> to vector<128x1xf32>
    %cst_21 = arith.constant 1.280000e+02 : f32
    %28 = vector.broadcast %cst_21 : f32 to vector<128x1xf32>
    %29 = arith.divf %27, %28 : vector<128x1xf32>
    %cst_22 = arith.constant 9.99999974E-6 : f32
    %30 = vector.broadcast %cst_22 : f32 to vector<128x1xf32>
    %31 = arith.addf %29, %30 : vector<128x1xf32>
    %32 = math.rsqrt %31 : vector<128x1xf32>
    %33 = vector.broadcast %32 : vector<128x1xf32> to vector<128x128xf32>
    %34 = arith.mulf %24, %33 : vector<128x128xf32>
    %35 = vector.broadcast %16 : vector<1x128xf32> to vector<128x128xf32>
    %36 = arith.mulf %34, %35 : vector<128x128xf32>
    %37 = vector.broadcast %18 : vector<1x128xf32> to vector<128x128xf32>
    %38 = arith.addf %36, %37 : vector<128x128xf32>
    %39 = arith.truncf %38 : vector<128x128xf32> to vector<128x128xbf16>
    %c0_23 = arith.constant 0 : index
    %c0_24 = arith.constant 0 : index
    %c0_25 = arith.constant 0 : index
    %40 = vector.load %arg8[%c0_23, %c0_24, %c0_25] : memref<2x128x256xbf16, #tpu.memory_space<vmem>>, vector<1x128x256xbf16>
    %41 = vector.shape_cast %40 : vector<1x128x256xbf16> to vector<128x256xbf16>
    %cst_26 = arith.constant dense<0.000000e+00> : vector<128x256xf32>
    %42 = tpu.matmul %39, %41, %cst_26 {dimension_numbers = #tpu.dot_dimension_numbers<[1], [0], [0], [1], [0, 0, 1, 1], [], []>} : vector<128x128xbf16>, vector<128x256xbf16>, vector<128x256xf32> -> vector<128x256xf32>
    %c0_27 = arith.constant 0 : index
    %c0_28 = arith.constant 0 : index
    %c0_29 = arith.constant 0 : index
    %43 = vector.load %arg9[%c0_27, %c0_28, %c0_29] : memref<2x1x256xf32, #tpu.memory_space<vmem>>, vector<1x1x256xf32>
    %44 = vector.shape_cast %43 : vector<1x1x256xf32> to vector<1x256xf32>
    %45 = vector.broadcast %44 : vector<1x256xf32> to vector<128x256xf32>
    %46 = arith.addf %42, %45 : vector<128x256xf32>
    %cst_30 = arith.constant 0.000000e+00 : f32
    %47 = vector.broadcast %cst_30 : f32 to vector<128x256xf32>
    %48 = arith.maximumf %46, %47 : vector<128x256xf32>
    %49 = arith.truncf %48 : vector<128x256xf32> to vector<128x256xbf16>
    %c0_31 = arith.constant 0 : index
    %c0_32 = arith.constant 0 : index
    %c0_33 = arith.constant 0 : index
    %50 = vector.load %arg10[%c0_31, %c0_32, %c0_33] : memref<2x256x128xbf16, #tpu.memory_space<vmem>>, vector<1x256x128xbf16>
    %51 = vector.shape_cast %50 : vector<1x256x128xbf16> to vector<256x128xbf16>
    %cst_34 = arith.constant dense<0.000000e+00> : vector<128x128xf32>
    %52 = tpu.matmul %49, %51, %cst_34 {dimension_numbers = #tpu.dot_dimension_numbers<[1], [0], [0], [1], [0, 0, 1, 1], [], []>} : vector<128x256xbf16>, vector<256x128xbf16>, vector<128x128xf32> -> vector<128x128xf32>
    %c0_35 = arith.constant 0 : index
    %c0_36 = arith.constant 0 : index
    %c0_37 = arith.constant 0 : index
    %53 = vector.load %arg11[%c0_35, %c0_36, %c0_37] : memref<2x1x128xf32, #tpu.memory_space<vmem>>, vector<1x1x128xf32>
    %54 = vector.shape_cast %53 : vector<1x1x128xf32> to vector<1x128xf32>
    %55 = vector.broadcast %54 : vector<1x128xf32> to vector<128x128xf32>
    %56 = arith.addf %52, %55 : vector<128x128xf32>
    %57 = arith.addf %38, %56 : vector<128x128xf32>
    %c0_38 = arith.constant 0 : index
    %c0_39 = arith.constant 0 : index
    %c0_40 = arith.constant 0 : index
    %58 = vector.load %arg12[%c0_38, %c0_39, %c0_40] : memref<2x1x128xf32, #tpu.memory_space<vmem>>, vector<1x1x128xf32>
    %59 = vector.shape_cast %58 : vector<1x1x128xf32> to vector<1x128xf32>
    %c0_41 = arith.constant 0 : index
    %c0_42 = arith.constant 0 : index
    %c0_43 = arith.constant 0 : index
    %60 = vector.load %arg13[%c0_41, %c0_42, %c0_43] : memref<2x1x128xf32, #tpu.memory_space<vmem>>, vector<1x1x128xf32>
    %61 = vector.shape_cast %60 : vector<1x1x128xf32> to vector<1x128xf32>
    %cst_44 = arith.constant dense<0.000000e+00> : vector<128xf32>
    %62 = vector.multi_reduction <add>, %57, %cst_44 [1] : vector<128x128xf32> to vector<128xf32>
    %63 = vector.shape_cast %62 : vector<128xf32> to vector<128x1xf32>
    %cst_45 = arith.constant 1.280000e+02 : f32
    %64 = vector.broadcast %cst_45 : f32 to vector<128x1xf32>
    %65 = arith.divf %63, %64 : vector<128x1xf32>
    %66 = vector.broadcast %65 : vector<128x1xf32> to vector<128x128xf32>
    %67 = arith.subf %57, %66 : vector<128x128xf32>
    %68 = arith.mulf %67, %67 : vector<128x128xf32>
    %cst_46 = arith.constant dense<0.000000e+00> : vector<128xf32>
    %69 = vector.multi_reduction <add>, %68, %cst_46 [1] : vector<128x128xf32> to vector<128xf32>
    %70 = vector.shape_cast %69 : vector<128xf32> to vector<128x1xf32>
    %cst_47 = arith.constant 1.280000e+02 : f32
    %71 = vector.broadcast %cst_47 : f32 to vector<128x1xf32>
    %72 = arith.divf %70, %71 : vector<128x1xf32>
    %cst_48 = arith.constant 9.99999974E-6 : f32
    %73 = vector.broadcast %cst_48 : f32 to vector<128x1xf32>
    %74 = arith.addf %72, %73 : vector<128x1xf32>
    %75 = math.rsqrt %74 : vector<128x1xf32>
    %76 = vector.broadcast %75 : vector<128x1xf32> to vector<128x128xf32>
    %77 = arith.mulf %67, %76 : vector<128x128xf32>
    %78 = vector.broadcast %59 : vector<1x128xf32> to vector<128x128xf32>
    %79 = arith.mulf %77, %78 : vector<128x128xf32>
    %80 = vector.broadcast %61 : vector<1x128xf32> to vector<128x128xf32>
    %81 = arith.addf %79, %80 : vector<128x128xf32>
    %82 = arith.truncf %81 : vector<128x128xf32> to vector<128x128xbf16>
    %c1 = arith.constant 1 : index
    %c0_49 = arith.constant 0 : index
    %c0_50 = arith.constant 0 : index
    %83 = vector.load %arg4[%c1, %c0_49, %c0_50] : memref<2x128x128xbf16, #tpu.memory_space<vmem>>, vector<1x128x128xbf16>
    %84 = vector.shape_cast %83 : vector<1x128x128xbf16> to vector<128x128xbf16>
    %cst_51 = arith.constant dense<0.000000e+00> : vector<128x128xf32>
    %85 = tpu.matmul %82, %84, %cst_51 {dimension_numbers = #tpu.dot_dimension_numbers<[1], [0], [0], [1], [0, 0, 1, 1], [], []>} : vector<128x128xbf16>, vector<128x128xbf16>, vector<128x128xf32> -> vector<128x128xf32>
    %c1_52 = arith.constant 1 : index
    %c0_53 = arith.constant 0 : index
    %c0_54 = arith.constant 0 : index
    %86 = vector.load %arg5[%c1_52, %c0_53, %c0_54] : memref<2x1x128xf32, #tpu.memory_space<vmem>>, vector<1x1x128xf32>
    %87 = vector.shape_cast %86 : vector<1x1x128xf32> to vector<1x128xf32>
    %88 = vector.broadcast %87 : vector<1x128xf32> to vector<128x128xf32>
    %89 = arith.addf %85, %88 : vector<128x128xf32>
    %90 = arith.addf %81, %89 : vector<128x128xf32>
    %c1_55 = arith.constant 1 : index
    %c0_56 = arith.constant 0 : index
    %c0_57 = arith.constant 0 : index
    %91 = vector.load %arg6[%c1_55, %c0_56, %c0_57] : memref<2x1x128xf32, #tpu.memory_space<vmem>>, vector<1x1x128xf32>
    %92 = vector.shape_cast %91 : vector<1x1x128xf32> to vector<1x128xf32>
    %c1_58 = arith.constant 1 : index
    %c0_59 = arith.constant 0 : index
    %c0_60 = arith.constant 0 : index
    %93 = vector.load %arg7[%c1_58, %c0_59, %c0_60] : memref<2x1x128xf32, #tpu.memory_space<vmem>>, vector<1x1x128xf32>
    %94 = vector.shape_cast %93 : vector<1x1x128xf32> to vector<1x128xf32>
    %cst_61 = arith.constant dense<0.000000e+00> : vector<128xf32>
    %95 = vector.multi_reduction <add>, %90, %cst_61 [1] : vector<128x128xf32> to vector<128xf32>
    %96 = vector.shape_cast %95 : vector<128xf32> to vector<128x1xf32>
    %cst_62 = arith.constant 1.280000e+02 : f32
    %97 = vector.broadcast %cst_62 : f32 to vector<128x1xf32>
    %98 = arith.divf %96, %97 : vector<128x1xf32>
    %99 = vector.broadcast %98 : vector<128x1xf32> to vector<128x128xf32>
    %100 = arith.subf %90, %99 : vector<128x128xf32>
    %101 = arith.mulf %100, %100 : vector<128x128xf32>
    %cst_63 = arith.constant dense<0.000000e+00> : vector<128xf32>
    %102 = vector.multi_reduction <add>, %101, %cst_63 [1] : vector<128x128xf32> to vector<128xf32>
    %103 = vector.shape_cast %102 : vector<128xf32> to vector<128x1xf32>
    %cst_64 = arith.constant 1.280000e+02 : f32
    %104 = vector.broadcast %cst_64 : f32 to vector<128x1xf32>
    %105 = arith.divf %103, %104 : vector<128x1xf32>
    %cst_65 = arith.constant 9.99999974E-6 : f32
    %106 = vector.broadcast %cst_65 : f32 to vector<128x1xf32>
    %107 = arith.addf %105, %106 : vector<128x1xf32>
    %108 = math.rsqrt %107 : vector<128x1xf32>
    %109 = vector.broadcast %108 : vector<128x1xf32> to vector<128x128xf32>
    %110 = arith.mulf %100, %109 : vector<128x128xf32>
    %111 = vector.broadcast %92 : vector<1x128xf32> to vector<128x128xf32>
    %112 = arith.mulf %110, %111 : vector<128x128xf32>
    %113 = vector.broadcast %94 : vector<1x128xf32> to vector<128x128xf32>
    %114 = arith.addf %112, %113 : vector<128x128xf32>
    %115 = arith.truncf %114 : vector<128x128xf32> to vector<128x128xbf16>
    %c1_66 = arith.constant 1 : index
    %c0_67 = arith.constant 0 : index
    %c0_68 = arith.constant 0 : index
    %116 = vector.load %arg8[%c1_66, %c0_67, %c0_68] : memref<2x128x256xbf16, #tpu.memory_space<vmem>>, vector<1x128x256xbf16>
    %117 = vector.shape_cast %116 : vector<1x128x256xbf16> to vector<128x256xbf16>
    %cst_69 = arith.constant dense<0.000000e+00> : vector<128x256xf32>
    %118 = tpu.matmul %115, %117, %cst_69 {dimension_numbers = #tpu.dot_dimension_numbers<[1], [0], [0], [1], [0, 0, 1, 1], [], []>} : vector<128x128xbf16>, vector<128x256xbf16>, vector<128x256xf32> -> vector<128x256xf32>
    %c1_70 = arith.constant 1 : index
    %c0_71 = arith.constant 0 : index
    %c0_72 = arith.constant 0 : index
    %119 = vector.load %arg9[%c1_70, %c0_71, %c0_72] : memref<2x1x256xf32, #tpu.memory_space<vmem>>, vector<1x1x256xf32>
    %120 = vector.shape_cast %119 : vector<1x1x256xf32> to vector<1x256xf32>
    %121 = vector.broadcast %120 : vector<1x256xf32> to vector<128x256xf32>
    %122 = arith.addf %118, %121 : vector<128x256xf32>
    %cst_73 = arith.constant 0.000000e+00 : f32
    %123 = vector.broadcast %cst_73 : f32 to vector<128x256xf32>
    %124 = arith.maximumf %122, %123 : vector<128x256xf32>
    %125 = arith.truncf %124 : vector<128x256xf32> to vector<128x256xbf16>
    %c1_74 = arith.constant 1 : index
    %c0_75 = arith.constant 0 : index
    %c0_76 = arith.constant 0 : index
    %126 = vector.load %arg10[%c1_74, %c0_75, %c0_76] : memref<2x256x128xbf16, #tpu.memory_space<vmem>>, vector<1x256x128xbf16>
    %127 = vector.shape_cast %126 : vector<1x256x128xbf16> to vector<256x128xbf16>
    %cst_77 = arith.constant dense<0.000000e+00> : vector<128x128xf32>
    %128 = tpu.matmul %125, %127, %cst_77 {dimension_numbers = #tpu.dot_dimension_numbers<[1], [0], [0], [1], [0, 0, 1, 1], [], []>} : vector<128x256xbf16>, vector<256x128xbf16>, vector<128x128xf32> -> vector<128x128xf32>
    %c1_78 = arith.constant 1 : index
    %c0_79 = arith.constant 0 : index
    %c0_80 = arith.constant 0 : index
    %129 = vector.load %arg11[%c1_78, %c0_79, %c0_80] : memref<2x1x128xf32, #tpu.memory_space<vmem>>, vector<1x1x128xf32>
    %130 = vector.shape_cast %129 : vector<1x1x128xf32> to vector<1x128xf32>
    %131 = vector.broadcast %130 : vector<1x128xf32> to vector<128x128xf32>
    %132 = arith.addf %128, %131 : vector<128x128xf32>
    %133 = arith.addf %114, %132 : vector<128x128xf32>
    %c1_81 = arith.constant 1 : index
    %c0_82 = arith.constant 0 : index
    %c0_83 = arith.constant 0 : index
    %134 = vector.load %arg12[%c1_81, %c0_82, %c0_83] : memref<2x1x128xf32, #tpu.memory_space<vmem>>, vector<1x1x128xf32>
    %135 = vector.shape_cast %134 : vector<1x1x128xf32> to vector<1x128xf32>
    %c1_84 = arith.constant 1 : index
    %c0_85 = arith.constant 0 : index
    %c0_86 = arith.constant 0 : index
    %136 = vector.load %arg13[%c1_84, %c0_85, %c0_86] : memref<2x1x128xf32, #tpu.memory_space<vmem>>, vector<1x1x128xf32>
    %137 = vector.shape_cast %136 : vector<1x1x128xf32> to vector<1x128xf32>
    %cst_87 = arith.constant dense<0.000000e+00> : vector<128xf32>
    %138 = vector.multi_reduction <add>, %133, %cst_87 [1] : vector<128x128xf32> to vector<128xf32>
    %139 = vector.shape_cast %138 : vector<128xf32> to vector<128x1xf32>
    %cst_88 = arith.constant 1.280000e+02 : f32
    %140 = vector.broadcast %cst_88 : f32 to vector<128x1xf32>
    %141 = arith.divf %139, %140 : vector<128x1xf32>
    %142 = vector.broadcast %141 : vector<128x1xf32> to vector<128x128xf32>
    %143 = arith.subf %133, %142 : vector<128x128xf32>
    %144 = arith.mulf %143, %143 : vector<128x128xf32>
    %cst_89 = arith.constant dense<0.000000e+00> : vector<128xf32>
    %145 = vector.multi_reduction <add>, %144, %cst_89 [1] : vector<128x128xf32> to vector<128xf32>
    %146 = vector.shape_cast %145 : vector<128xf32> to vector<128x1xf32>
    %cst_90 = arith.constant 1.280000e+02 : f32
    %147 = vector.broadcast %cst_90 : f32 to vector<128x1xf32>
    %148 = arith.divf %146, %147 : vector<128x1xf32>
    %cst_91 = arith.constant 9.99999974E-6 : f32
    %149 = vector.broadcast %cst_91 : f32 to vector<128x1xf32>
    %150 = arith.addf %148, %149 : vector<128x1xf32>
    %151 = math.rsqrt %150 : vector<128x1xf32>
    %152 = vector.broadcast %151 : vector<128x1xf32> to vector<128x128xf32>
    %153 = arith.mulf %143, %152 : vector<128x128xf32>
    %154 = vector.broadcast %135 : vector<1x128xf32> to vector<128x128xf32>
    %155 = arith.mulf %153, %154 : vector<128x128xf32>
    %156 = vector.broadcast %137 : vector<1x128xf32> to vector<128x128xf32>
    %157 = arith.addf %155, %156 : vector<128x128xf32>
    %c0_92 = arith.constant 0 : index
    %c0_93 = arith.constant 0 : index
    %158 = vector.load %arg17[%c0_92, %c0_93] : memref<128x128xf32, #tpu.memory_space<vmem>>, vector<128x128xf32>
    tpu.vector_store %arg17[%c0_92, %c0_93], %157 {strides = array<i32>} : memref<128x128xf32, #tpu.memory_space<vmem>>, vector<128x128xf32>,
    %159 = arith.truncf %157 : vector<128x128xf32> to vector<128x128xbf16>
    %c0_94 = arith.constant 0 : index
    %c0_95 = arith.constant 0 : index
    %160 = vector.load %arg14[%c0_94, %c0_95] : memref<128x128xbf16, #tpu.memory_space<vmem>>, vector<128x128xbf16>
    %cst_96 = arith.constant dense<0.000000e+00> : vector<128x128xf32>
    %161 = tpu.matmul %159, %160, %cst_96 {dimension_numbers = #tpu.dot_dimension_numbers<[1], [0], [0], [1], [0, 0, 1, 1], [], []>} : vector<128x128xbf16>, vector<128x128xbf16>, vector<128x128xf32> -> vector<128x128xf32>
    %c0_97 = arith.constant 0 : index
    %c0_98 = arith.constant 0 : index
    %162 = vector.load %arg15[%c0_97, %c0_98] : memref<1x128xf32, #tpu.memory_space<vmem>>, vector<1x128xf32>
    %163 = vector.broadcast %162 : vector<1x128xf32> to vector<128x128xf32>
    %164 = arith.addf %161, %163 : vector<128x128xf32>
    %c0_99 = arith.constant 0 : index
    %c0_100 = arith.constant 0 : index
    %165 = vector.load %arg16[%c0_99, %c0_100] : memref<128x128xf32, #tpu.memory_space<vmem>>, vector<128x128xf32>
    tpu.vector_store %arg16[%c0_99, %c0_100], %164 {strides = array<i32>} : memref<128x128xf32, #tpu.memory_space<vmem>>, vector<128x128xf32>,
    return
  }
  func.func @transform_0(%arg0: i32) -> (i32, i32) {
    %c0_i32 = arith.constant 0 : i32
    %c0_i32_0 = arith.constant 0 : i32
    return %arg0, %c0_i32 : i32, i32
  }
  func.func @transform_1(%arg0: i32) -> (i32, i32) {
    %c0_i32 = arith.constant 0 : i32
    %c0_i32_0 = arith.constant 0 : i32
    %c0_i32_1 = arith.constant 0 : i32
    return %c0_i32, %c0_i32_0 : i32, i32
  }
  func.func @transform_2(%arg0: i32) -> (i32, i32) {
    %c0_i32 = arith.constant 0 : i32
    %c0_i32_0 = arith.constant 0 : i32
    %c0_i32_1 = arith.constant 0 : i32
    return %c0_i32, %c0_i32_0 : i32, i32
  }
  func.func @transform_3(%arg0: i32) -> (i32, i32, i32) {
    %c0_i32 = arith.constant 0 : i32
    %c0_i32_0 = arith.constant 0 : i32
    %c0_i32_1 = arith.constant 0 : i32
    %c0_i32_2 = arith.constant 0 : i32
    return %c0_i32, %c0_i32_0, %c0_i32_1 : i32, i32, i32
  }
  func.func @transform_4(%arg0: i32) -> (i32, i32, i32) {
    %c0_i32 = arith.constant 0 : i32
    %c0_i32_0 = arith.constant 0 : i32
    %c0_i32_1 = arith.constant 0 : i32
    %c0_i32_2 = arith.constant 0 : i32
    return %c0_i32, %c0_i32_0, %c0_i32_1 : i32, i32, i32
  }
  func.func @transform_5(%arg0: i32) -> (i32, i32, i32) {
    %c0_i32 = arith.constant 0 : i32
    %c0_i32_0 = arith.constant 0 : i32
    %c0_i32_1 = arith.constant 0 : i32
    %c0_i32_2 = arith.constant 0 : i32
    return %c0_i32, %c0_i32_0, %c0_i32_1 : i32, i32, i32
  }
  func.func @transform_6(%arg0: i32) -> (i32, i32, i32) {
    %c0_i32 = arith.constant 0 : i32
    %c0_i32_0 = arith.constant 0 : i32
    %c0_i32_1 = arith.constant 0 : i32
    %c0_i32_2 = arith.constant 0 : i32
    return %c0_i32, %c0_i32_0, %c0_i32_1 : i32, i32, i32
  }
  func.func @transform_7(%arg0: i32) -> (i32, i32, i32) {
    %c0_i32 = arith.constant 0 : i32
    %c0_i32_0 = arith.constant 0 : i32
    %c0_i32_1 = arith.constant 0 : i32
    %c0_i32_2 = arith.constant 0 : i32
    return %c0_i32, %c0_i32_0, %c0_i32_1 : i32, i32, i32
  }
  func.func @transform_8(%arg0: i32) -> (i32, i32, i32) {
    %c0_i32 = arith.constant 0 : i32
    %c0_i32_0 = arith.constant 0 : i32
    %c0_i32_1 = arith.constant 0 : i32
    %c0_i32_2 = arith.constant 0 : i32
    return %c0_i32, %c0_i32_0, %c0_i32_1 : i32, i32, i32
  }
  func.func @transform_9(%arg0: i32) -> (i32, i32, i32) {
    %c0_i32 = arith.constant 0 : i32
    %c0_i32_0 = arith.constant 0 : i32
    %c0_i32_1 = arith.constant 0 : i32
    %c0_i32_2 = arith.constant 0 : i32
    return %c0_i32, %c0_i32_0, %c0_i32_1 : i32, i32, i32
  }
  func.func @transform_10(%arg0: i32) -> (i32, i32, i32) {
    %c0_i32 = arith.constant 0 : i32
    %c0_i32_0 = arith.constant 0 : i32
    %c0_i32_1 = arith.constant 0 : i32
    %c0_i32_2 = arith.constant 0 : i32
    return %c0_i32, %c0_i32_0, %c0_i32_1 : i32, i32, i32
  }
  func.func @transform_11(%arg0: i32) -> (i32, i32, i32) {
    %c0_i32 = arith.constant 0 : i32
    %c0_i32_0 = arith.constant 0 : i32
    %c0_i32_1 = arith.constant 0 : i32
    %c0_i32_2 = arith.constant 0 : i32
    return %c0_i32, %c0_i32_0, %c0_i32_1 : i32, i32, i32
  }
  func.func @transform_12(%arg0: i32) -> (i32, i32, i32) {
    %c0_i32 = arith.constant 0 : i32
    %c0_i32_0 = arith.constant 0 : i32
    %c0_i32_1 = arith.constant 0 : i32
    %c0_i32_2 = arith.constant 0 : i32
    return %c0_i32, %c0_i32_0, %c0_i32_1 : i32, i32, i32
  }
  func.func @transform_13(%arg0: i32) -> (i32, i32) {
    %c0_i32 = arith.constant 0 : i32
    %c0_i32_0 = arith.constant 0 : i32
    %c0_i32_1 = arith.constant 0 : i32
    return %c0_i32, %c0_i32_0 : i32, i32
  }
  func.func @transform_14(%arg0: i32) -> (i32, i32) {
    %c0_i32 = arith.constant 0 : i32
    %c0_i32_0 = arith.constant 0 : i32
    %c0_i32_1 = arith.constant 0 : i32
    return %c0_i32, %c0_i32_0 : i32, i32
  }
  func.func @transform_15(%arg0: i32) -> (i32, i32) {
    %c0_i32 = arith.constant 0 : i32
    %c0_i32_0 = arith.constant 0 : i32
    return %arg0, %c0_i32 : i32, i32
  }
  func.func @transform_16(%arg0: i32) -> (i32, i32) {
    %c0_i32 = arith.constant 0 : i32
    %c0_i32_0 = arith.constant 0 : i32
    return %arg0, %c0_i32 : i32, i32
  }
}

</mosaic_0001>

<llo_original>
// kernel: transformer_encoder.1
$region0: #{transformer_encoder.1}
  #allocation0 [shape = 'u32[]', space=smem, size = 0x4, offset = 0x4, fixed_abs, tag = 'smem constant byte address 0x4 - core index']
  #allocation1 [shape = 'u32[72,128]{1,0:T(1,128)}', space=vmem, size = 0x9000, scoped, tag = 'internal scratch']
  %s0 = inlined_call_operand.vmem [shape: bf16[256,128], index: 0, kind: input, shape index: {}]
  %s1 = inlined_call_operand.vmem [shape: bf16[128,128], index: 1, kind: input, shape index: {}]
  %s2 = inlined_call_operand.vmem [shape: f32[1,128], index: 2, kind: input, shape index: {}]
  %s3 = inlined_call_operand.vmem [shape: bf16[2,128,128], index: 3, kind: input, shape index: {}]
  %s4 = inlined_call_operand.vmem [shape: f32[2,1,128], index: 4, kind: input, shape index: {}]
  %s5 = inlined_call_operand.vmem [shape: f32[2,1,128], index: 5, kind: input, shape index: {}]
  %s6 = inlined_call_operand.vmem [shape: f32[2,1,128], index: 6, kind: input, shape index: {}]
  %s7 = inlined_call_operand.vmem [shape: bf16[2,128,256], index: 7, kind: input, shape index: {}]
  %s8 = inlined_call_operand.vmem [shape: f32[2,1,256], index: 8, kind: input, shape index: {}]
  %s9 = inlined_call_operand.vmem [shape: bf16[2,256,128], index: 9, kind: input, shape index: {}]
  %s10 = inlined_call_operand.vmem [shape: f32[2,1,128], index: 10, kind: input, shape index: {}]
  %s11 = inlined_call_operand.vmem [shape: f32[2,1,128], index: 11, kind: input, shape index: {}]
  %s12 = inlined_call_operand.vmem [shape: f32[2,1,128], index: 12, kind: input, shape index: {}]
  %s13 = inlined_call_operand.vmem [shape: bf16[128,128], index: 13, kind: input, shape index: {}]
  %s14 = inlined_call_operand.vmem [shape: f32[1,128], index: 14, kind: input, shape index: {}]
  %s15 = inlined_call_operand.vmem [shape: f32[256,128], index: 15, kind: output, shape index: {0}]
  %s16 = inlined_call_operand.hbm [shape: f32[256,128], index: 16, kind: output, shape index: {1}]
  %17 = xla_tuple %s15, %s16
  %s18 = sld [smem:[#allocation0]]
  $region101: #{transformer_encoder.1} parent=0
    _
  %s20 = ssub.s32 1, %s18
  %s21 = scalar_select 0, %s20, %s18
  $region1: #{transformer_encoder.1} parent=0
    #allocation2 [shape = 'u8[131072]{0}', space=vmem, size = 0x20000, scoped, tag = 'output window, operand 1']
    #allocation3 [shape = 's32[2]{0}', space=sflag, size = 0x8, scoped, tag = 'scoped memory for transformer_encoder.1']
    %22 = vsyncpa [#allocation3], 0
    %s23 = scalar_lea.sflag [#allocation3], 1
    %24 = vsyncpa %s23, 0
    loop: start=0, step=1, limit=4
    $region2: #{transformer_encoder.1} parent=1 // loop_pre_header
      _
    $region3: #{transformer_encoder.1} parent=1 // loop_header
      %s26 = sphi 0, %s30
      %p27 = scmp.ge.s32.totalorder %s26, 4
      %s36 = sphi 0, %s38
      %s39 = sphi 0, %s36
      %s40 = sphi 0, %s39
      %s56 = sphi 0, %s40
      %s60 = sphi 0, %s60
      %s62 = sphi 0, %s60
      %s63 = sphi 0, %s62
      %s77 = sphi 0, %s63
      %s81 = sphi 0, %s81
      %s83 = sphi 0, %s81
      %s84 = sphi 0, %s83
      %s98 = sphi 0, %s84
      %s102 = sphi 0, %s102
      %s104 = sphi 0, %s102
      %s105 = sphi 0, %s104
      %s119 = sphi 0, %s105
      %s123 = sphi 0, %s123
      %s125 = sphi 0, %s123
      %s126 = sphi 0, %s125
      %s140 = sphi 0, %s126
      %s144 = sphi 0, %s144
      %s146 = sphi 0, %s144
      %s147 = sphi 0, %s146
      %s161 = sphi 0, %s147
      %s165 = sphi 0, %s165
      %s167 = sphi 0, %s165
      %s168 = sphi 0, %s167
      %s182 = sphi 0, %s168
      %s186 = sphi 0, %s186
      %s188 = sphi 0, %s186
      %s189 = sphi 0, %s188
      %s203 = sphi 0, %s189
      %s207 = sphi 0, %s207
      %s209 = sphi 0, %s207
      %s210 = sphi 0, %s209
      %s224 = sphi 0, %s210
      %s228 = sphi 0, %s228
      %s230 = sphi 0, %s228
      %s231 = sphi 0, %s230
      %s245 = sphi 0, %s231
      %s249 = sphi 0, %s249
      %s251 = sphi 0, %s249
      %s252 = sphi 0, %s251
      %s266 = sphi 0, %s252
      %s270 = sphi 0, %s270
      %s272 = sphi 0, %s270
      %s273 = sphi 0, %s272
      %s287 = sphi 0, %s273
      %s291 = sphi 0, %s291
      %s293 = sphi 0, %s291
      %s294 = sphi 0, %s293
      %s308 = sphi 0, %s294
      %s312 = sphi 0, %s312
      %s314 = sphi 0, %s312
      %s315 = sphi 0, %s314
      %s329 = sphi 0, %s315
      %s333 = sphi 0, %s333
      %s335 = sphi 0, %s333
      %s336 = sphi 0, %s335
      %s350 = sphi 0, %s336
      %s356 = sphi 0, %s358
      %s359 = sphi 0, %s356
      %s360 = sphi 0, %s359
      %s376 = sphi 0, %s360
      %s382 = sphi 0, %s384
      %s385 = sphi 0, %s382
      %s386 = sphi 0, %s385
      %s402 = sphi 0, %s386
    $region4: #{transformer_encoder.1} parent=1 // loop_header_branch
      %29 = sbr.rel (%p27) target = $region8
    $region5: #{transformer_encoder.1} parent=1 // loop_body
      %s31 = ssub.s32 %s26, 1
      %s32 = ssub.s32 %s26, 2
      %s33 = sadd.s32 %s26, 1
      %s34 = ssub.s32 %s26, %s33
      %p35 = scmp.eq.s32.totalorder %s34, 0
      %s37 = sadd.s32 %s36, 1
      %s38 = scalar_select %p35, %s36, %s37
      %p41 = pneg %p35
      %p42 = scmp.eq.s32.totalorder %s26, 1
      %p43 = por %p41, %p42
      %p44 = scmp.ne.s32.totalorder %s36, %s39
      %p45 = scmp.eq.s32.totalorder %s26, 0
      %p46 = por %p44, %p45
      %p47 = scmp.ne.s32.totalorder %s36, %s39
      %p48 = scmp.eq.s32.totalorder %s31, 1
      %p49 = por %p47, %p48
      %p50 = scmp.ne.s32.totalorder %s39, %s40
      %p51 = scmp.eq.s32.totalorder %s31, 0
      %p52 = por %p50, %p51
      %p53 = scmp.ne.s32.totalorder %s39, %s40
      %p54 = scmp.eq.s32.totalorder %s32, 1
      %p55 = por %p53, %p54
      %p57 = scmp.ne.s32.totalorder %s40, %s56
      %p58 = scmp.eq.s32.totalorder %s32, 0
      %p59 = por %p57, %p58
      %s61 = sadd.s32 %s60, 1
      %p64 = scmp.eq.s32.totalorder %s26, 1
      %p65 = scmp.ne.s32.totalorder %s60, %s62
      %p66 = scmp.eq.s32.totalorder %s26, 0
      %p67 = por %p65, %p66
      %p68 = scmp.ne.s32.totalorder %s60, %s62
      %p69 = scmp.eq.s32.totalorder %s31, 1
      %p70 = por %p68, %p69
      %p71 = scmp.ne.s32.totalorder %s62, %s63
      %p72 = scmp.eq.s32.totalorder %s31, 0
      %p73 = por %p71, %p72
      %p74 = scmp.ne.s32.totalorder %s62, %s63
      %p75 = scmp.eq.s32.totalorder %s32, 1
      %p76 = por %p74, %p75
      %p78 = scmp.ne.s32.totalorder %s63, %s77
      %p79 = scmp.eq.s32.totalorder %s32, 0
      %p80 = por %p78, %p79
      %s82 = sadd.s32 %s81, 1
      %p85 = scmp.eq.s32.totalorder %s26, 1
      %p86 = scmp.ne.s32.totalorder %s81, %s83
      %p87 = scmp.eq.s32.totalorder %s26, 0
      %p88 = por %p86, %p87
      %p89 = scmp.ne.s32.totalorder %s81, %s83
      %p90 = scmp.eq.s32.totalorder %s31, 1
      %p91 = por %p89, %p90
      %p92 = scmp.ne.s32.totalorder %s83, %s84
      %p93 = scmp.eq.s32.totalorder %s31, 0
      %p94 = por %p92, %p93
      %p95 = scmp.ne.s32.totalorder %s83, %s84
      %p96 = scmp.eq.s32.totalorder %s32, 1
      %p97 = por %p95, %p96
      %p99 = scmp.ne.s32.totalorder %s84, %s98
      %p100 = scmp.eq.s32.totalorder %s32, 0
      %p101 = por %p99, %p100
      %s103 = sadd.s32 %s102, 1
      %p106 = scmp.eq.s32.totalorder %s26, 1
      %p107 = scmp.ne.s32.totalorder %s102, %s104
      %p108 = scmp.eq.s32.totalorder %s26, 0
      %p109 = por %p107, %p108
      %p110 = scmp.ne.s32.totalorder %s102, %s104
      %p111 = scmp.eq.s32.totalorder %s31, 1
      %p112 = por %p110, %p111
      %p113 = scmp.ne.s32.totalorder %s104, %s105
      %p114 = scmp.eq.s32.totalorder %s31, 0
      %p115 = por %p113, %p114
      %p116 = scmp.ne.s32.totalorder %s104, %s105
      %p117 = scmp.eq.s32.totalorder %s32, 1
      %p118 = por %p116, %p117
      %p120 = scmp.ne.s32.totalorder %s105, %s119
      %p121 = scmp.eq.s32.totalorder %s32, 0
      %p122 = por %p120, %p121
      %s124 = sadd.s32 %s123, 1
      %p127 = scmp.eq.s32.totalorder %s26, 1
      %p128 = scmp.ne.s32.totalorder %s123, %s125
      %p129 = scmp.eq.s32.totalorder %s26, 0
      %p130 = por %p128, %p129
      %p131 = scmp.ne.s32.totalorder %s123, %s125
      %p132 = scmp.eq.s32.totalorder %s31, 1
      %p133 = por %p131, %p132
      %p134 = scmp.ne.s32.totalorder %s125, %s126
      %p135 = scmp.eq.s32.totalorder %s31, 0
      %p136 = por %p134, %p135
      %p137 = scmp.ne.s32.totalorder %s125, %s126
      %p138 = scmp.eq.s32.totalorder %s32, 1
      %p139 = por %p137, %p138
      %p141 = scmp.ne.s32.totalorder %s126, %s140
      %p142 = scmp.eq.s32.totalorder %s32, 0
      %p143 = por %p141, %p142
      %s145 = sadd.s32 %s144, 1
      %p148 = scmp.eq.s32.totalorder %s26, 1
      %p149 = scmp.ne.s32.totalorder %s144, %s146
      %p150 = scmp.eq.s32.totalorder %s26, 0
      %p151 = por %p149, %p150
      %p152 = scmp.ne.s32.totalorder %s144, %s146
      %p153 = scmp.eq.s32.totalorder %s31, 1
      %p154 = por %p152, %p153
      %p155 = scmp.ne.s32.totalorder %s146, %s147
      %p156 = scmp.eq.s32.totalorder %s31, 0
      %p157 = por %p155, %p156
      %p158 = scmp.ne.s32.totalorder %s146, %s147
      %p159 = scmp.eq.s32.totalorder %s32, 1
      %p160 = por %p158, %p159
      %p162 = scmp.ne.s32.totalorder %s147, %s161
      %p163 = scmp.eq.s32.totalorder %s32, 0
      %p164 = por %p162, %p163
      %s166 = sadd.s32 %s165, 1
      %p169 = scmp.eq.s32.totalorder %s26, 1
      %p170 = scmp.ne.s32.totalorder %s165, %s167
      %p171 = scmp.eq.s32.totalorder %s26, 0
      %p172 = por %p170, %p171
      %p173 = scmp.ne.s32.totalorder %s165, %s167
      %p174 = scmp.eq.s32.totalorder %s31, 1
      %p175 = por %p173, %p174
      %p176 = scmp.ne.s32.totalorder %s167, %s168
      %p177 = scmp.eq.s32.totalorder %s31, 0
      %p178 = por %p176, %p177
      %p179 = scmp.ne.s32.totalorder %s167, %s168
      %p180 = scmp.eq.s32.totalorder %s32, 1
      %p181 = por %p179, %p180
      %p183 = scmp.ne.s32.totalorder %s168, %s182
      %p184 = scmp.eq.s32.totalorder %s32, 0
      %p185 = por %p183, %p184
      %s187 = sadd.s32 %s186, 1
      %p190 = scmp.eq.s32.totalorder %s26, 1
      %p191 = scmp.ne.s32.totalorder %s186, %s188
      %p192 = scmp.eq.s32.totalorder %s26, 0
      %p193 = por %p191, %p192
      %p194 = scmp.ne.s32.totalorder %s186, %s188
      %p195 = scmp.eq.s32.totalorder %s31, 1
      %p196 = por %p194, %p195
      %p197 = scmp.ne.s32.totalorder %s188, %s189
      %p198 = scmp.eq.s32.totalorder %s31, 0
      %p199 = por %p197, %p198
      %p200 = scmp.ne.s32.totalorder %s188, %s189
      %p201 = scmp.eq.s32.totalorder %s32, 1
      %p202 = por %p200, %p201
      %p204 = scmp.ne.s32.totalorder %s189, %s203
      %p205 = scmp.eq.s32.totalorder %s32, 0
      %p206 = por %p204, %p205
      %s208 = sadd.s32 %s207, 1
      %p211 = scmp.eq.s32.totalorder %s26, 1
      %p212 = scmp.ne.s32.totalorder %s207, %s209
      %p213 = scmp.eq.s32.totalorder %s26, 0
      %p214 = por %p212, %p213
      %p215 = scmp.ne.s32.totalorder %s207, %s209
      %p216 = scmp.eq.s32.totalorder %s31, 1
      %p217 = por %p215, %p216
      %p218 = scmp.ne.s32.totalorder %s209, %s210
      %p219 = scmp.eq.s32.totalorder %s31, 0
      %p220 = por %p218, %p219
      %p221 = scmp.ne.s32.totalorder %s209, %s210
      %p222 = scmp.eq.s32.totalorder %s32, 1
      %p223 = por %p221, %p222
      %p225 = scmp.ne.s32.totalorder %s210, %s224
      %p226 = scmp.eq.s32.totalorder %s32, 0
      %p227 = por %p225, %p226
      %s229 = sadd.s32 %s228, 1
      %p232 = scmp.eq.s32.totalorder %s26, 1
      %p233 = scmp.ne.s32.totalorder %s228, %s230
      %p234 = scmp.eq.s32.totalorder %s26, 0
      %p235 = por %p233, %p234
      %p236 = scmp.ne.s32.totalorder %s228, %s230
      %p237 = scmp.eq.s32.totalorder %s31, 1
      %p238 = por %p236, %p237
      %p239 = scmp.ne.s32.totalorder %s230, %s231
      %p240 = scmp.eq.s32.totalorder %s31, 0
      %p241 = por %p239, %p240
      %p242 = scmp.ne.s32.totalorder %s230, %s231
      %p243 = scmp.eq.s32.totalorder %s32, 1
      %p244 = por %p242, %p243
      %p246 = scmp.ne.s32.totalorder %s231, %s245
      %p247 = scmp.eq.s32.totalorder %s32, 0
      %p248 = por %p246, %p247
      %s250 = sadd.s32 %s249, 1
      %p253 = scmp.eq.s32.totalorder %s26, 1
      %p254 = scmp.ne.s32.totalorder %s249, %s251
      %p255 = scmp.eq.s32.totalorder %s26, 0
      %p256 = por %p254, %p255
      %p257 = scmp.ne.s32.totalorder %s249, %s251
      %p258 = scmp.eq.s32.totalorder %s31, 1
      %p259 = por %p257, %p258
      %p260 = scmp.ne.s32.totalorder %s251, %s252
      %p261 = scmp.eq.s32.totalorder %s31, 0
      %p262 = por %p260, %p261
      %p263 = scmp.ne.s32.totalorder %s251, %s252
      %p264 = scmp.eq.s32.totalorder %s32, 1
      %p265 = por %p263, %p264
      %p267 = scmp.ne.s32.totalorder %s252, %s266
      %p268 = scmp.eq.s32.totalorder %s32, 0
      %p269 = por %p267, %p268
      %s271 = sadd.s32 %s270, 1
      %p274 = scmp.eq.s32.totalorder %s26, 1
      %p275 = scmp.ne.s32.totalorder %s270, %s272
      %p276 = scmp.eq.s32.totalorder %s26, 0
      %p277 = por %p275, %p276
      %p278 = scmp.ne.s32.totalorder %s270, %s272
      %p279 = scmp.eq.s32.totalorder %s31, 1
      %p280 = por %p278, %p279
      %p281 = scmp.ne.s32.totalorder %s272, %s273
      %p282 = scmp.eq.s32.totalorder %s31, 0
      %p283 = por %p281, %p282
      %p284 = scmp.ne.s32.totalorder %s272, %s273
      %p285 = scmp.eq.s32.totalorder %s32, 1
      %p286 = por %p284, %p285
      %p288 = scmp.ne.s32.totalorder %s273, %s287
      %p289 = scmp.eq.s32.totalorder %s32, 0
      %p290 = por %p288, %p289
      %s292 = sadd.s32 %s291, 1
      %p295 = scmp.eq.s32.totalorder %s26, 1
      %p296 = scmp.ne.s32.totalorder %s291, %s293
      %p297 = scmp.eq.s32.totalorder %s26, 0
      %p298 = por %p296, %p297
      %p299 = scmp.ne.s32.totalorder %s291, %s293
      %p300 = scmp.eq.s32.totalorder %s31, 1
      %p301 = por %p299, %p300
      %p302 = scmp.ne.s32.totalorder %s293, %s294
      %p303 = scmp.eq.s32.totalorder %s31, 0
      %p304 = por %p302, %p303
      %p305 = scmp.ne.s32.totalorder %s293, %s294
      %p306 = scmp.eq.s32.totalorder %s32, 1
      %p307 = por %p305, %p306
      %p309 = scmp.ne.s32.totalorder %s294, %s308
      %p310 = scmp.eq.s32.totalorder %s32, 0
      %p311 = por %p309, %p310
      %s313 = sadd.s32 %s312, 1
      %p316 = scmp.eq.s32.totalorder %s26, 1
      %p317 = scmp.ne.s32.totalorder %s312, %s314
      %p318 = scmp.eq.s32.totalorder %s26, 0
      %p319 = por %p317, %p318
      %p320 = scmp.ne.s32.totalorder %s312, %s314
      %p321 = scmp.eq.s32.totalorder %s31, 1
      %p322 = por %p320, %p321
      %p323 = scmp.ne.s32.totalorder %s314, %s315
      %p324 = scmp.eq.s32.totalorder %s31, 0
      %p325 = por %p323, %p324
      %p326 = scmp.ne.s32.totalorder %s314, %s315
      %p327 = scmp.eq.s32.totalorder %s32, 1
      %p328 = por %p326, %p327
      %p330 = scmp.ne.s32.totalorder %s315, %s329
      %p331 = scmp.eq.s32.totalorder %s32, 0
      %p332 = por %p330, %p331
      %s334 = sadd.s32 %s333, 1
      %p337 = scmp.eq.s32.totalorder %s26, 1
      %p338 = scmp.ne.s32.totalorder %s333, %s335
      %p339 = scmp.eq.s32.totalorder %s26, 0
      %p340 = por %p338, %p339
      %p341 = scmp.ne.s32.totalorder %s333, %s335
      %p342 = scmp.eq.s32.totalorder %s31, 1
      %p343 = por %p341, %p342
      %p344 = scmp.ne.s32.totalorder %s335, %s336
      %p345 = scmp.eq.s32.totalorder %s31, 0
      %p346 = por %p344, %p345
      %p347 = scmp.ne.s32.totalorder %s335, %s336
      %p348 = scmp.eq.s32.totalorder %s32, 1
      %p349 = por %p347, %p348
      %p351 = scmp.ne.s32.totalorder %s336, %s350
      %p352 = scmp.eq.s32.totalorder %s32, 0
      %p353 = por %p351, %p352
      %s354 = ssub.s32 %s26, %s33
      %p355 = scmp.eq.s32.totalorder %s354, 0
      %s357 = sadd.s32 %s356, 1
      %s358 = scalar_select %p355, %s356, %s357
      %p361 = pneg %p355
      %p362 = scmp.eq.s32.totalorder %s26, 1
      %p363 = por %p361, %p362
      %p364 = scmp.ne.s32.totalorder %s356, %s359
      %p365 = scmp.eq.s32.totalorder %s26, 0
      %p366 = por %p364, %p365
      %p367 = scmp.ne.s32.totalorder %s356, %s359
      %p368 = scmp.eq.s32.totalorder %s31, 1
      %p369 = por %p367, %p368
      %p370 = scmp.ne.s32.totalorder %s359, %s360
      %p371 = scmp.eq.s32.totalorder %s31, 0
      %p372 = por %p370, %p371
      %p373 = scmp.ne.s32.totalorder %s359, %s360
      %p374 = scmp.eq.s32.totalorder %s32, 1
      %p375 = por %p373, %p374
      %p377 = scmp.ne.s32.totalorder %s360, %s376
      %p378 = scmp.eq.s32.totalorder %s32, 0
      %p379 = por %p377, %p378
      %s380 = ssub.s32 %s26, %s33
      %p381 = scmp.eq.s32.totalorder %s380, 0
      %s383 = sadd.s32 %s382, 1
      %s384 = scalar_select %p381, %s382, %s383
      %p387 = pneg %p381
      %p388 = scmp.eq.s32.totalorder %s26, 1
      %p389 = por %p387, %p388
      %p390 = scmp.ne.s32.totalorder %s382, %s385
      %p391 = scmp.eq.s32.totalorder %s26, 0
      %p392 = por %p390, %p391
      %p393 = scmp.ne.s32.totalorder %s382, %s385
      %p394 = scmp.eq.s32.totalorder %s31, 1
      %p395 = por %p393, %p394
      %p396 = scmp.ne.s32.totalorder %s385, %s386
      %p397 = scmp.eq.s32.totalorder %s31, 0
      %p398 = por %p396, %p397
      %p399 = scmp.ne.s32.totalorder %s385, %s386
      %p400 = scmp.eq.s32.totalorder %s32, 1
      %p401 = por %p399, %p400
      %p403 = scmp.ne.s32.totalorder %s386, %s402
      %p404 = scmp.eq.s32.totalorder %s32, 0
      %p405 = por %p403, %p404
      %p406 = scmp.le.s32.totalorder 1, %s26
      %p407 = scmp.lt.s32.totalorder %s26, 3
      %p408 = pnand %p406, %p407
      %p409 = pneg %p408
      // Predicated region
      $region9: #{transformer_encoder.1} parent=5 // pred_check
        _
      $region10: #{transformer_encoder.1} parent=5 // pred_check_branch
        %411 = sbr.rel (%p408) target = $region12
      $region11: #{transformer_encoder.1} parent=5 // pred_region
        %s412 = ssub.s32 %s26, 1
        // Predicated region
        $region13: #{transformer_encoder.1} parent=11 // pred_check
          %p413 = pneg %p73
        $region14: #{transformer_encoder.1} parent=11 // pred_check_branch
          %415 = sbr.rel (%p413) target = $region16
        $region15: #{transformer_encoder.1} parent=11 // pred_region
          _
        $region16: #{transformer_encoder.1} parent=11 // pred_fallthru
          _
        // Predicated region
        $region17: #{transformer_encoder.1} parent=11 // pred_check
          %p416 = pneg %p94
        $region18: #{transformer_encoder.1} parent=11 // pred_check_branch
          %418 = sbr.rel (%p416) target = $region20
        $region19: #{transformer_encoder.1} parent=11 // pred_region
          _
        $region20: #{transformer_encoder.1} parent=11 // pred_fallthru
          _
        // Predicated region
        $region21: #{transformer_encoder.1} parent=11 // pred_check
          %p419 = pneg %p115
        $region22: #{transformer_encoder.1} parent=11 // pred_check_branch
          %421 = sbr.rel (%p419) target = $region24
        $region23: #{transformer_encoder.1} parent=11 // pred_region
          _
        $region24: #{transformer_encoder.1} parent=11 // pred_fallthru
          _
        // Predicated region
        $region25: #{transformer_encoder.1} parent=11 // pred_check
          %p422 = pneg %p136
        $region26: #{transformer_encoder.1} parent=11 // pred_check_branch
          %424 = sbr.rel (%p422) target = $region28
        $region27: #{transformer_encoder.1} parent=11 // pred_region
          _
        $region28: #{transformer_encoder.1} parent=11 // pred_fallthru
          _
        // Predicated region
        $region29: #{transformer_encoder.1} parent=11 // pred_check
          %p425 = pneg %p157
        $region30: #{transformer_encoder.1} parent=11 // pred_check_branch
          %427 = sbr.rel (%p425) target = $region32
        $region31: #{transformer_encoder.1} parent=11 // pred_region
          _
        $region32: #{transformer_encoder.1} parent=11 // pred_fallthru
          _
        // Predicated region
        $region33: #{transformer_encoder.1} parent=11 // pred_check
          %p428 = pneg %p178
        $region34: #{transformer_encoder.1} parent=11 // pred_check_branch
          %430 = sbr.rel (%p428) target = $region36
        $region35: #{transformer_encoder.1} parent=11 // pred_region
          _
        $region36: #{transformer_encoder.1} parent=11 // pred_fallthru
          _
        // Predicated region
        $region37: #{transformer_encoder.1} parent=11 // pred_check
          %p431 = pneg %p199
        $region38: #{transformer_encoder.1} parent=11 // pred_check_branch
          %433 = sbr.rel (%p431) target = $region40
        $region39: #{transformer_encoder.1} parent=11 // pred_region
          _
        $region40: #{transformer_encoder.1} parent=11 // pred_fallthru
          _
        // Predicated region
        $region41: #{transformer_encoder.1} parent=11 // pred_check
          %p434 = pneg %p220
        $region42: #{transformer_encoder.1} parent=11 // pred_check_branch
          %436 = sbr.rel (%p434) target = $region44
        $region43: #{transformer_encoder.1} parent=11 // pred_region
          _
        $region44: #{transformer_encoder.1} parent=11 // pred_fallthru
          _
        // Predicated region
        $region45: #{transformer_encoder.1} parent=11 // pred_check
          %p437 = pneg %p241
        $region46: #{transformer_encoder.1} parent=11 // pred_check_branch
          %439 = sbr.rel (%p437) target = $region48
        $region47: #{transformer_encoder.1} parent=11 // pred_region
          _
        $region48: #{transformer_encoder.1} parent=11 // pred_fallthru
          _
        // Predicated region
        $region49: #{transformer_encoder.1} parent=11 // pred_check
          %p440 = pneg %p262
        $region50: #{transformer_encoder.1} parent=11 // pred_check_branch
          %442 = sbr.rel (%p440) target = $region52
        $region51: #{transformer_encoder.1} parent=11 // pred_region
          _
        $region52: #{transformer_encoder.1} parent=11 // pred_fallthru
          _
        // Predicated region
        $region53: #{transformer_encoder.1} parent=11 // pred_check
          %p443 = pneg %p283
        $region54: #{transformer_encoder.1} parent=11 // pred_check_branch
          %445 = sbr.rel (%p443) target = $region56
        $region55: #{transformer_encoder.1} parent=11 // pred_region
          _
        $region56: #{transformer_encoder.1} parent=11 // pred_fallthru
          _
        // Predicated region
        $region57: #{transformer_encoder.1} parent=11 // pred_check
          %p446 = pneg %p304
        $region58: #{transformer_encoder.1} parent=11 // pred_check_branch
          %448 = sbr.rel (%p446) target = $region60
        $region59: #{transformer_encoder.1} parent=11 // pred_region
          _
        $region60: #{transformer_encoder.1} parent=11 // pred_fallthru
          _
        // Predicated region
        $region61: #{transformer_encoder.1} parent=11 // pred_check
          %p449 = pneg %p325
        $region62: #{transformer_encoder.1} parent=11 // pred_check_branch
          %451 = sbr.rel (%p449) target = $region64
        $region63: #{transformer_encoder.1} parent=11 // pred_region
          _
        $region64: #{transformer_encoder.1} parent=11 // pred_fallthru
          _
        // Predicated region
        $region65: #{transformer_encoder.1} parent=11 // pred_check
          %p452 = pneg %p346
        $region66: #{transformer_encoder.1} parent=11 // pred_check_branch
          %454 = sbr.rel (%p452) target = $region68
        $region67: #{transformer_encoder.1} parent=11 // pred_region
          _
        $region68: #{transformer_encoder.1} parent=11 // pred_fallthru
          _
      $region12: #{transformer_encoder.1} parent=5 // pred_fallthru
        _
      %p455 = scmp.lt.s32.totalorder %s26, 2
      // Predicated region
      $region69: #{transformer_encoder.1} parent=5 // pred_check
        %p456 = pneg %p455
      $region70: #{transformer_encoder.1} parent=5 // pred_check_branch
        %458 = sbr.rel (%p456) target = $region72
      $region71: #{transformer_encoder.1} parent=5 // pred_region
        // Predicated region
        $region73: #{transformer_encoder.1} parent=71 // pred_check
          %p459 = pneg %p46
        $region74: #{transformer_encoder.1} parent=71 // pred_check_branch
          %461 = sbr.rel (%p459) target = $region76
        $region75: #{transformer_encoder.1} parent=71 // pred_region
          %s462 = smul.u32 16, %s26
          %p463 = scmp.lt.s32.totalorder %s462, 31
          %s464 = scalar_select %p463, %s462, 31
          %s465 = smul.addr %s464, 4
          %s466 = scalar_lea.vmem %s0, %s465
          %s467 = smul.u32 16, %s26
        $region76: #{transformer_encoder.1} parent=71 // pred_fallthru
          _
      $region72: #{transformer_encoder.1} parent=5 // pred_fallthru
        _
      %p468 = scmp.le.s32.totalorder 1, %s26
      %p469 = scmp.lt.s32.totalorder %s26, 3
      %p470 = pnand %p468, %p469
      %p471 = pneg %p470
      // Predicated region
      $region77: #{transformer_encoder.1} parent=5 // pred_check
        _
      $region78: #{transformer_encoder.1} parent=5 // pred_check_branch
        %473 = sbr.rel (%p470) target = $region80
      $region79: #{transformer_encoder.1} parent=5 // pred_region
        %s474 = ssub.s32 %s26, 1
        %s475 = smul.u32 16, %s31
        %p476 = scmp.lt.s32.totalorder %s475, 31
        %s477 = scalar_select %p476, %s475, 31
        %s478 = smul.addr %s477, 4
        %s479 = scalar_lea.vmem %s0, %s478
        %p480 = pneg %p52
        %p481 = pneg %p49
        %p482 = pneg %p73
        %p483 = pneg %p70
        %p484 = pneg %p94
        %p485 = pneg %p91
        %p486 = pneg %p115
        %p487 = pneg %p112
        %p488 = pneg %p136
        %p489 = pneg %p133
        %p490 = pneg %p157
        %p491 = pneg %p154
        %p492 = pneg %p178
        %p493 = pneg %p175
        %p494 = pneg %p199
        %p495 = pneg %p196
        %p496 = pneg %p220
        %p497 = pneg %p217
        %p498 = pneg %p241
        %p499 = pneg %p238
        %p500 = pneg %p262
        %p501 = pneg %p259
        %p502 = pneg %p283
        %p503 = pneg %p280
        %p504 = pneg %p304
        %p505 = pneg %p301
        %p506 = pneg %p325
        %p507 = pneg %p322
        %p508 = pneg %p346
        %p509 = pneg %p343
        %p510 = pneg %p372
        %p511 = pneg %p369
        %s512 = smul.u32 16, %s31
        %p513 = scmp.lt.s32.totalorder %s512, 31
        %s514 = scalar_select %p513, %s512, 31
        %s515 = smul.addr %s514, 8
        %s516 = scalar_lea.vmem %s15, %s515
        %p517 = pneg %p398
        %p518 = pneg %p395
        %s519 = sand.u32 %s385, 1
        %s520 = scalar_lea.sflag [#allocation3], %s519
        %s521 = sand.u32 %s385, 1
        %s522 = smul.addr %s521, 128
        %s523 = scalar_lea.vmem [#allocation2], %s522
        %s524 = smul.u32 16, %s31
        %p525 = scmp.lt.s32.totalorder %s524, 31
        %s526 = scalar_select %p525, %s524, 31
        %s527 = smul.addr %s526, 4
        %s528 = scalar_lea.vmem %s0, %s527
        %s529 = smul.u32 16, %s31
        %s530 = smul.u32 16, %s31
        %p531 = scmp.lt.s32.totalorder %s530, 31
        %s532 = scalar_select %p531, %s530, 31
        %s533 = smul.addr %s532, 8
        %s534 = scalar_lea.vmem %s15, %s533
        %s535 = smul.u32 16, %s31
        %s536 = smul.u32 16, %s31
        %v537 = vld [vmem:[%s528] sm:$0xf]
        %v538 = vld [vmem:[%s528 + $0x4] sm:$0xf]
        %v539 = vld [vmem:[%s528 + $0x8] sm:$0xf]
        %v540 = vld [vmem:[%s528 + $0xc] sm:$0xf]
        %v541 = vld [vmem:[%s528 + $0x10] sm:$0xf]
        %v542 = vld [vmem:[%s528 + $0x14] sm:$0xf]
        %v543 = vld [vmem:[%s528 + $0x18] sm:$0xf]
        %v544 = vld [vmem:[%s528 + $0x1c] sm:$0xf]
        %v545 = vld [vmem:[%s528 + $0x20] sm:$0xf]
        %v546 = vld [vmem:[%s528 + $0x24] sm:$0xf]
        %v547 = vld [vmem:[%s528 + $0x28] sm:$0xf]
        %v548 = vld [vmem:[%s528 + $0x2c] sm:$0xf]
        %v549 = vld [vmem:[%s528 + $0x30] sm:$0xf]
        %v550 = vld [vmem:[%s528 + $0x34] sm:$0xf]
        %v551 = vld [vmem:[%s528 + $0x38] sm:$0xf]
        %v552 = vld [vmem:[%s528 + $0x3c] sm:$0xf]
        %v553 = vld [vmem:[%s1] sm:$0xf]
        %v554 = vld [vmem:[%s1 + $0x4] sm:$0xf]
        %v555 = vld [vmem:[%s1 + $0x8] sm:$0xf]
        %v556 = vld [vmem:[%s1 + $0xc] sm:$0xf]
        %v557 = vld [vmem:[%s1 + $0x10] sm:$0xf]
        %v558 = vld [vmem:[%s1 + $0x14] sm:$0xf]
        %v559 = vld [vmem:[%s1 + $0x18] sm:$0xf]
        %v560 = vld [vmem:[%s1 + $0x1c] sm:$0xf]
        %v561 = vld [vmem:[%s1 + $0x20] sm:$0xf]
        %v562 = vld [vmem:[%s1 + $0x24] sm:$0xf]
        %v563 = vld [vmem:[%s1 + $0x28] sm:$0xf]
        %v564 = vld [vmem:[%s1 + $0x2c] sm:$0xf]
        %v565 = vld [vmem:[%s1 + $0x30] sm:$0xf]
        %v566 = vld [vmem:[%s1 + $0x34] sm:$0xf]
        %v567 = vld [vmem:[%s1 + $0x38] sm:$0xf]
        %v568 = vld [vmem:[%s1 + $0x3c] sm:$0xf]
        %v569 = vld [vmem:[%s2] sm:$0x1]
        %v571 = vperm.slane %v569, 0
        %v589 = vunpack.c.l.b16 %v537
        %v590 = vunpack.c.l.b16 %v538
        %v591 = vunpack.c.l.b16 %v539
        %v592 = vunpack.c.l.b16 %v540
        %v593 = vunpack.c.l.b16 %v541
        %v594 = vunpack.c.l.b16 %v542
        %v595 = vunpack.c.l.b16 %v543
        %v596 = vunpack.c.l.b16 %v544
        %v597 = vunpack.c.l.b16 %v545
        %v598 = vunpack.c.l.b16 %v546
        %v599 = vunpack.c.l.b16 %v547
        %v600 = vunpack.c.l.b16 %v548
        %v601 = vunpack.c.l.b16 %v549
        %v602 = vunpack.c.l.b16 %v550
        %v603 = vunpack.c.l.b16 %v551
        %v604 = vunpack.c.l.b16 %v552
        %v605 = vpack.c.b16 %v590, %v589
        %v606 = vpack.c.b16 %v592, %v591
        %v607 = vpack.c.b16 %v594, %v593
        %v608 = vpack.c.b16 %v596, %v595
        %v609 = vpack.c.b16 %v598, %v597
        %v610 = vpack.c.b16 %v600, %v599
        %v611 = vpack.c.b16 %v602, %v601
        %v612 = vpack.c.b16 %v604, %v603
        %v637 = vunpack.c.l.b16 %v553
        %v638 = vunpack.c.l.b16 %v554
        %v639 = vunpack.c.l.b16 %v555
        %v640 = vunpack.c.l.b16 %v556
        %v641 = vunpack.c.l.b16 %v557
        %v642 = vunpack.c.l.b16 %v558
        %v643 = vunpack.c.l.b16 %v559
        %v644 = vunpack.c.l.b16 %v560
        %v645 = vunpack.c.l.b16 %v561
        %v646 = vunpack.c.l.b16 %v562
        %v647 = vunpack.c.l.b16 %v563
        %v648 = vunpack.c.l.b16 %v564
        %v649 = vunpack.c.l.b16 %v565
        %v650 = vunpack.c.l.b16 %v566
        %v651 = vunpack.c.l.b16 %v567
        %v652 = vunpack.c.l.b16 %v568
        %v653 = vpack.c.b16 %v638, %v637
        %v654 = vpack.c.b16 %v640, %v639
        %v655 = vpack.c.b16 %v642, %v641
        %v656 = vpack.c.b16 %v644, %v643
        %v657 = vpack.c.b16 %v646, %v645
        %v658 = vpack.c.b16 %v648, %v647
        %v659 = vpack.c.b16 %v650, %v649
        %v660 = vpack.c.b16 %v652, %v651
        %669 = vmatpush.bf16.msra.mxu0 %v660
        %670 = vmatpush.bf16.msra.mxu0 %v659
        %671 = vmatpush.bf16.msra.mxu0 %v658
        %672 = vmatpush.bf16.msra.mxu0 %v657
        %673 = vmatpush.bf16.msra.mxu0 %v656
        %674 = vmatpush.bf16.msra.mxu0 %v655
        %675 = vmatpush.bf16.msra.mxu0 %v654
        %676 = vmatpush.bf16.msra.mxu0 %v653
        %677 = vmatmul.bf16.gmra.mxu0 %v605
        %v678 = vpop.f32.mrf.mxu0
        %v679 = vadd.f32 %v571, %v678
        %v680 = vpop.f32.mrf.mxu0
        %v681 = vadd.f32 %v571, %v680
        %682 = vmatmul.bf16.gmra.mxu0 %v606
        %v683 = vpop.f32.mrf.mxu0
        %v684 = vadd.f32 %v571, %v683
        %v685 = vpop.f32.mrf.mxu0
        %v686 = vadd.f32 %v571, %v685
        %687 = vmatmul.bf16.gmra.mxu0 %v607
        %v688 = vpop.f32.mrf.mxu0
        %v689 = vadd.f32 %v571, %v688
        %v690 = vpop.f32.mrf.mxu0
        %v691 = vadd.f32 %v571, %v690
        %692 = vmatmul.bf16.gmra.mxu0 %v608
        %v693 = vpop.f32.mrf.mxu0
        %v694 = vadd.f32 %v571, %v693
        %v695 = vpop.f32.mrf.mxu0
        %v696 = vadd.f32 %v571, %v695
        %697 = vmatmul.bf16.gmra.mxu0 %v609
        %v698 = vpop.f32.mrf.mxu0
        %v699 = vadd.f32 %v571, %v698
        %v700 = vpop.f32.mrf.mxu0
        %v701 = vadd.f32 %v571, %v700
        %702 = vmatmul.bf16.gmra.mxu0 %v610
        %v703 = vpop.f32.mrf.mxu0
        %v704 = vadd.f32 %v571, %v703
        %v705 = vpop.f32.mrf.mxu0
        %v706 = vadd.f32 %v571, %v705
        %707 = vmatmul.bf16.gmra.mxu0 %v611
        %v708 = vpop.f32.mrf.mxu0
        %v709 = vadd.f32 %v571, %v708
        %v710 = vpop.f32.mrf.mxu0
        %v711 = vadd.f32 %v571, %v710
        %712 = vmatmul.bf16.gmra.mxu0 %v612
        %v713 = vpop.f32.mrf.mxu0
        %v714 = vadd.f32 %v571, %v713
        %v715 = vpop.f32.mrf.mxu0
        %v716 = vadd.f32 %v571, %v715
        %717 = vdwg.mxu0
        %v718 = vpack.c.bf16 %v681, %v679
        %v719 = vpack.c.bf16 %v686, %v684
        %v720 = vpack.c.bf16 %v691, %v689
        %v721 = vpack.c.bf16 %v696, %v694
        %v722 = vpack.c.bf16 %v701, %v699
        %v723 = vpack.c.bf16 %v706, %v704
        %v724 = vpack.c.bf16 %v711, %v709
        %v725 = vpack.c.bf16 %v716, %v714
        %v726 = vld [vmem:[%s3] sm:$0xf]
        %v727 = vld [vmem:[%s3 + $0x4] sm:$0xf]
        %v728 = vld [vmem:[%s3 + $0x8] sm:$0xf]
        %v729 = vld [vmem:[%s3 + $0xc] sm:$0xf]
        %v730 = vld [vmem:[%s3 + $0x10] sm:$0xf]
        %v731 = vld [vmem:[%s3 + $0x14] sm:$0xf]
        %v732 = vld [vmem:[%s3 + $0x18] sm:$0xf]
        %v733 = vld [vmem:[%s3 + $0x1c] sm:$0xf]
        %v734 = vld [vmem:[%s3 + $0x20] sm:$0xf]
        %v735 = vld [vmem:[%s3 + $0x24] sm:$0xf]
        %v736 = vld [vmem:[%s3 + $0x28] sm:$0xf]
        %v737 = vld [vmem:[%s3 + $0x2c] sm:$0xf]
        %v738 = vld [vmem:[%s3 + $0x30] sm:$0xf]
        %v739 = vld [vmem:[%s3 + $0x34] sm:$0xf]
        %v740 = vld [vmem:[%s3 + $0x38] sm:$0xf]
        %v741 = vld [vmem:[%s3 + $0x3c] sm:$0xf]
        %v742 = vld [vmem:[%s4] sm:$0x1]
        %v744 = vperm.slane %v742, 0
        %v762 = vunpack.c.l.b16 %v726
        %v763 = vunpack.c.l.b16 %v727
        %v764 = vunpack.c.l.b16 %v728
        %v765 = vunpack.c.l.b16 %v729
        %v766 = vunpack.c.l.b16 %v730
        %v767 = vunpack.c.l.b16 %v731
        %v768 = vunpack.c.l.b16 %v732
        %v769 = vunpack.c.l.b16 %v733
        %v770 = vunpack.c.l.b16 %v734
        %v771 = vunpack.c.l.b16 %v735
        %v772 = vunpack.c.l.b16 %v736
        %v773 = vunpack.c.l.b16 %v737
        %v774 = vunpack.c.l.b16 %v738
        %v775 = vunpack.c.l.b16 %v739
        %v776 = vunpack.c.l.b16 %v740
        %v777 = vunpack.c.l.b16 %v741
        %v778 = vpack.c.b16 %v763, %v762
        %v779 = vpack.c.b16 %v765, %v764
        %v780 = vpack.c.b16 %v767, %v766
        %v781 = vpack.c.b16 %v769, %v768
        %v782 = vpack.c.b16 %v771, %v770
        %v783 = vpack.c.b16 %v773, %v772
        %v784 = vpack.c.b16 %v775, %v774
        %v785 = vpack.c.b16 %v777, %v776
        %794 = vmatpush.bf16.msra.mxu0 %v785
        %795 = vmatpush.bf16.msra.mxu0 %v784
        %796 = vmatpush.bf16.msra.mxu0 %v783
        %797 = vmatpush.bf16.msra.mxu0 %v782
        %798 = vmatpush.bf16.msra.mxu0 %v781
        %799 = vmatpush.bf16.msra.mxu0 %v780
        %800 = vmatpush.bf16.msra.mxu0 %v779
        %801 = vmatpush.bf16.msra.mxu0 %v778
        %802 = vmatmul.bf16.gmra.mxu0 %v718
        %v803 = vpop.f32.mrf.mxu0
        %v804 = vadd.f32 %v744, %v803
        %v805 = vpop.f32.mrf.mxu0
        %v806 = vadd.f32 %v744, %v805
        %807 = vmatmul.bf16.gmra.mxu0 %v719
        %v808 = vpop.f32.mrf.mxu0
        %v809 = vadd.f32 %v744, %v808
        %v810 = vpop.f32.mrf.mxu0
        %v811 = vadd.f32 %v744, %v810
        %812 = vmatmul.bf16.gmra.mxu0 %v720
        %v813 = vpop.f32.mrf.mxu0
        %v814 = vadd.f32 %v744, %v813
        %v815 = vpop.f32.mrf.mxu0
        %v816 = vadd.f32 %v744, %v815
        %817 = vmatmul.bf16.gmra.mxu0 %v721
        %v818 = vpop.f32.mrf.mxu0
        %v819 = vadd.f32 %v744, %v818
        %v820 = vpop.f32.mrf.mxu0
        %v821 = vadd.f32 %v744, %v820
        %822 = vmatmul.bf16.gmra.mxu0 %v722
        %v823 = vpop.f32.mrf.mxu0
        %v824 = vadd.f32 %v744, %v823
        %v825 = vpop.f32.mrf.mxu0
        %v826 = vadd.f32 %v744, %v825
        %827 = vmatmul.bf16.gmra.mxu0 %v723
        %v828 = vpop.f32.mrf.mxu0
        %v829 = vadd.f32 %v744, %v828
        %v830 = vpop.f32.mrf.mxu0
        %v831 = vadd.f32 %v744, %v830
        %832 = vmatmul.bf16.gmra.mxu0 %v724
        %v833 = vpop.f32.mrf.mxu0
        %v834 = vadd.f32 %v744, %v833
        %v835 = vpop.f32.mrf.mxu0
        %v836 = vadd.f32 %v744, %v835
        %837 = vmatmul.bf16.gmra.mxu0 %v725
        %v838 = vpop.f32.mrf.mxu0
        %v839 = vadd.f32 %v744, %v838
        %v840 = vpop.f32.mrf.mxu0
        %v841 = vadd.f32 %v744, %v840
        %842 = vdwg.mxu0
        %v843 = vadd.f32 %v679, %v804
        %v844 = vadd.f32 %v681, %v806
        %v845 = vadd.f32 %v684, %v809
        %v846 = vadd.f32 %v686, %v811
        %v847 = vadd.f32 %v689, %v814
        %v848 = vadd.f32 %v691, %v816
        %v849 = vadd.f32 %v694, %v819
        %v850 = vadd.f32 %v696, %v821
        %v851 = vadd.f32 %v699, %v824
        %v852 = vadd.f32 %v701, %v826
        %v853 = vadd.f32 %v704, %v829
        %v854 = vadd.f32 %v706, %v831
        %v855 = vadd.f32 %v709, %v834
        %v856 = vadd.f32 %v711, %v836
        %v857 = vadd.f32 %v714, %v839
        %v858 = vadd.f32 %v716, %v841
        %v859 = vld [vmem:[%s5] sm:$0x1]
        %v860 = vld [vmem:[%s6] sm:$0x1]
        %861 = vadd.xlane.f32.xlu0 %v843
        %v862 = vpop.xlane.xlu0 %861
        %863 = vadd.xlane.f32.xlu0 %v844
        %v864 = vpop.xlane.xlu0 %863
        %865 = vadd.xlane.f32.xlu0 %v845
        %v866 = vpop.xlane.xlu0 %865
        %867 = vadd.xlane.f32.xlu0 %v846
        %v868 = vpop.xlane.xlu0 %867
        %869 = vadd.xlane.f32.xlu0 %v847
        %v870 = vpop.xlane.xlu0 %869
        %871 = vadd.xlane.f32.xlu0 %v848
        %v872 = vpop.xlane.xlu0 %871
        %873 = vadd.xlane.f32.xlu0 %v849
        %v874 = vpop.xlane.xlu0 %873
        %875 = vadd.xlane.f32.xlu0 %v850
        %v876 = vpop.xlane.xlu0 %875
        %877 = vadd.xlane.f32.xlu0 %v851
        %v878 = vpop.xlane.xlu0 %877
        %879 = vadd.xlane.f32.xlu0 %v852
        %v880 = vpop.xlane.xlu0 %879
        %881 = vadd.xlane.f32.xlu0 %v853
        %v882 = vpop.xlane.xlu0 %881
        %883 = vadd.xlane.f32.xlu0 %v854
        %v884 = vpop.xlane.xlu0 %883
        %885 = vadd.xlane.f32.xlu0 %v855
        %v886 = vpop.xlane.xlu0 %885
        %887 = vadd.xlane.f32.xlu0 %v856
        %v888 = vpop.xlane.xlu0 %887
        %889 = vadd.xlane.f32.xlu0 %v857
        %v890 = vpop.xlane.xlu0 %889
        %891 = vadd.xlane.f32.xlu0 %v858
        %v892 = vpop.xlane.xlu0 %891
        %v893 = vrcp.pop 128.0
        %v894 = vmul.f32 128.0, %v893
        %v895 = vsub.f32 1.0, %v894
        %v896 = vmul.f32 %v893, %v895
        %v897 = vadd.f32 %v893, %v896
        %vm898 = vweird.f32 %v893
        %v899 = vsel %vm898, %v893, %v897
        %v900 = vmul.f32 %v862, %v899
        %v901 = vmul.f32 %v864, %v899
        %v902 = vmul.f32 %v866, %v899
        %v903 = vmul.f32 %v868, %v899
        %v904 = vmul.f32 %v870, %v899
        %v905 = vmul.f32 %v872, %v899
        %v906 = vmul.f32 %v874, %v899
        %v907 = vmul.f32 %v876, %v899
        %v908 = vmul.f32 %v878, %v899
        %v909 = vmul.f32 %v880, %v899
        %v910 = vmul.f32 %v882, %v899
        %v911 = vmul.f32 %v884, %v899
        %v912 = vmul.f32 %v886, %v899
        %v913 = vmul.f32 %v888, %v899
        %v914 = vmul.f32 %v890, %v899
        %v915 = vmul.f32 %v892, %v899
        %v916 = vsub.f32 %v843, %v900
        %v917 = vsub.f32 %v844, %v901
        %v918 = vsub.f32 %v845, %v902
        %v919 = vsub.f32 %v846, %v903
        %v920 = vsub.f32 %v847, %v904
        %v921 = vsub.f32 %v848, %v905
        %v922 = vsub.f32 %v849, %v906
        %v923 = vsub.f32 %v850, %v907
        %v924 = vsub.f32 %v851, %v908
        %v925 = vsub.f32 %v852, %v909
        %v926 = vsub.f32 %v853, %v910
        %v927 = vsub.f32 %v854, %v911
        %v928 = vsub.f32 %v855, %v912
        %v929 = vsub.f32 %v856, %v913
        %v930 = vsub.f32 %v857, %v914
        %v931 = vsub.f32 %v858, %v915
        %v932 = vmul.f32 %v916, %v916
        %v933 = vmul.f32 %v917, %v917
        %v934 = vmul.f32 %v918, %v918
        %v935 = vmul.f32 %v919, %v919
        %v936 = vmul.f32 %v920, %v920
        %v937 = vmul.f32 %v921, %v921
        %v938 = vmul.f32 %v922, %v922
        %v939 = vmul.f32 %v923, %v923
        %v940 = vmul.f32 %v924, %v924
        %v941 = vmul.f32 %v925, %v925
        %v942 = vmul.f32 %v926, %v926
        %v943 = vmul.f32 %v927, %v927
        %v944 = vmul.f32 %v928, %v928
        %v945 = vmul.f32 %v929, %v929
        %v946 = vmul.f32 %v930, %v930
        %v947 = vmul.f32 %v931, %v931
        %948 = vadd.xlane.f32.xlu0 %v932
        %v949 = vpop.xlane.xlu0 %948
        %950 = vadd.xlane.f32.xlu0 %v933
        %v951 = vpop.xlane.xlu0 %950
        %952 = vadd.xlane.f32.xlu0 %v934
        %v953 = vpop.xlane.xlu0 %952
        %954 = vadd.xlane.f32.xlu0 %v935
        %v955 = vpop.xlane.xlu0 %954
        %956 = vadd.xlane.f32.xlu0 %v936
        %v957 = vpop.xlane.xlu0 %956
        %958 = vadd.xlane.f32.xlu0 %v937
        %v959 = vpop.xlane.xlu0 %958
        %960 = vadd.xlane.f32.xlu0 %v938
        %v961 = vpop.xlane.xlu0 %960
        %962 = vadd.xlane.f32.xlu0 %v939
        %v963 = vpop.xlane.xlu0 %962
        %964 = vadd.xlane.f32.xlu0 %v940
        %v965 = vpop.xlane.xlu0 %964
        %966 = vadd.xlane.f32.xlu0 %v941
        %v967 = vpop.xlane.xlu0 %966
        %968 = vadd.xlane.f32.xlu0 %v942
        %v969 = vpop.xlane.xlu0 %968
        %970 = vadd.xlane.f32.xlu0 %v943
        %v971 = vpop.xlane.xlu0 %970
        %972 = vadd.xlane.f32.xlu0 %v944
        %v973 = vpop.xlane.xlu0 %972
        %974 = vadd.xlane.f32.xlu0 %v945
        %v975 = vpop.xlane.xlu0 %974
        %976 = vadd.xlane.f32.xlu0 %v946
        %v977 = vpop.xlane.xlu0 %976
        %978 = vadd.xlane.f32.xlu0 %v947
        %v979 = vpop.xlane.xlu0 %978
        %v980 = vmul.f32 %v949, %v899
        %v981 = vmul.f32 %v951, %v899
        %v982 = vmul.f32 %v953, %v899
        %v983 = vmul.f32 %v955, %v899
        %v984 = vmul.f32 %v957, %v899
        %v985 = vmul.f32 %v959, %v899
        %v986 = vmul.f32 %v961, %v899
        %v987 = vmul.f32 %v963, %v899
        %v988 = vmul.f32 %v965, %v899
        %v989 = vmul.f32 %v967, %v899
        %v990 = vmul.f32 %v969, %v899
        %v991 = vmul.f32 %v971, %v899
        %v992 = vmul.f32 %v973, %v899
        %v993 = vmul.f32 %v975, %v899
        %v994 = vmul.f32 %v977, %v899
        %v995 = vmul.f32 %v979, %v899
        %v996 = vadd.f32 %v980, 1e-05
        %v997 = vadd.f32 %v981, 1e-05
        %v998 = vadd.f32 %v982, 1e-05
        %v999 = vadd.f32 %v983, 1e-05
        %v1000 = vadd.f32 %v984, 1e-05
        %v1001 = vadd.f32 %v985, 1e-05
        %v1002 = vadd.f32 %v986, 1e-05
        %v1003 = vadd.f32 %v987, 1e-05
        %v1004 = vadd.f32 %v988, 1e-05
        %v1005 = vadd.f32 %v989, 1e-05
        %v1006 = vadd.f32 %v990, 1e-05
        %v1007 = vadd.f32 %v991, 1e-05
        %v1008 = vadd.f32 %v992, 1e-05
        %v1009 = vadd.f32 %v993, 1e-05
        %v1010 = vadd.f32 %v994, 1e-05
        %v1011 = vadd.f32 %v995, 1e-05
        %v1012 = vrsqrt.pop %v996
        %v1013 = vmul.f32 %v1012, %v996
        %v1014 = vmul.f32 %v1013, %v1012
        %v1015 = vmul.f32 0.5, %v1014
        %v1016 = vsub.f32 1.5, %v1015
        %v1017 = vmul.f32 %v1012, %v1016
        %vm1018 = vweird.f32 %v996
        %vm1019 = vweird.f32 %v1012
        %vm1020 = vmor %vm1018, %vm1019
        %v1021 = vsel %vm1020, %v1012, %v1017
        %v1022 = vrsqrt.pop %v997
        %v1023 = vmul.f32 %v1022, %v997
        %v1024 = vmul.f32 %v1023, %v1022
        %v1025 = vmul.f32 0.5, %v1024
        %v1026 = vsub.f32 1.5, %v1025
        %v1027 = vmul.f32 %v1022, %v1026
        %vm1028 = vweird.f32 %v997
        %vm1029 = vweird.f32 %v1022
        %vm1030 = vmor %vm1028, %vm1029
        %v1031 = vsel %vm1030, %v1022, %v1027
        %v1032 = vrsqrt.pop %v998
        %v1033 = vmul.f32 %v1032, %v998
        %v1034 = vmul.f32 %v1033, %v1032
        %v1035 = vmul.f32 0.5, %v1034
        %v1036 = vsub.f32 1.5, %v1035
        %v1037 = vmul.f32 %v1032, %v1036
        %vm1038 = vweird.f32 %v998
        %vm1039 = vweird.f32 %v1032
        %vm1040 = vmor %vm1038, %vm1039
        %v1041 = vsel %vm1040, %v1032, %v1037
        %v1042 = vrsqrt.pop %v999
        %v1043 = vmul.f32 %v1042, %v999
        %v1044 = vmul.f32 %v1043, %v1042
        %v1045 = vmul.f32 0.5, %v1044
        %v1046 = vsub.f32 1.5, %v1045
        %v1047 = vmul.f32 %v1042, %v1046
        %vm1048 = vweird.f32 %v999
        %vm1049 = vweird.f32 %v1042
        %vm1050 = vmor %vm1048, %vm1049
        %v1051 = vsel %vm1050, %v1042, %v1047
        %v1052 = vrsqrt.pop %v1000
        %v1053 = vmul.f32 %v1052, %v1000
        %v1054 = vmul.f32 %v1053, %v1052
        %v1055 = vmul.f32 0.5, %v1054
        %v1056 = vsub.f32 1.5, %v1055
        %v1057 = vmul.f32 %v1052, %v1056
        %vm1058 = vweird.f32 %v1000
        %vm1059 = vweird.f32 %v1052
        %vm1060 = vmor %vm1058, %vm1059
        %v1061 = vsel %vm1060, %v1052, %v1057
        %v1062 = vrsqrt.pop %v1001
        %v1063 = vmul.f32 %v1062, %v1001
        %v1064 = vmul.f32 %v1063, %v1062
        %v1065 = vmul.f32 0.5, %v1064
        %v1066 = vsub.f32 1.5, %v1065
        %v1067 = vmul.f32 %v1062, %v1066
        %vm1068 = vweird.f32 %v1001
        %vm1069 = vweird.f32 %v1062
        %vm1070 = vmor %vm1068, %vm1069
        %v1071 = vsel %vm1070, %v1062, %v1067
        %v1072 = vrsqrt.pop %v1002
        %v1073 = vmul.f32 %v1072, %v1002
        %v1074 = vmul.f32 %v1073, %v1072
        %v1075 = vmul.f32 0.5, %v1074
        %v1076 = vsub.f32 1.5, %v1075
        %v1077 = vmul.f32 %v1072, %v1076
        %vm1078 = vweird.f32 %v1002
        %vm1079 = vweird.f32 %v1072
        %vm1080 = vmor %vm1078, %vm1079
        %v1081 = vsel %vm1080, %v1072, %v1077
        %v1082 = vrsqrt.pop %v1003
        %v1083 = vmul.f32 %v1082, %v1003
        %v1084 = vmul.f32 %v1083, %v1082
        %v1085 = vmul.f32 0.5, %v1084
        %v1086 = vsub.f32 1.5, %v1085
        %v1087 = vmul.f32 %v1082, %v1086
        %vm1088 = vweird.f32 %v1003
        %vm1089 = vweird.f32 %v1082
        %vm1090 = vmor %vm1088, %vm1089
        %v1091 = vsel %vm1090, %v1082, %v1087
        %v1092 = vrsqrt.pop %v1004
        %v1093 = vmul.f32 %v1092, %v1004
        %v1094 = vmul.f32 %v1093, %v1092
        %v1095 = vmul.f32 0.5, %v1094
        %v1096 = vsub.f32 1.5, %v1095
        %v1097 = vmul.f32 %v1092, %v1096
        %vm1098 = vweird.f32 %v1004
        %vm1099 = vweird.f32 %v1092
        %vm1100 = vmor %vm1098, %vm1099
        %v1101 = vsel %vm1100, %v1092, %v1097
        %v1102 = vrsqrt.pop %v1005
        %v1103 = vmul.f32 %v1102, %v1005
        %v1104 = vmul.f32 %v1103, %v1102
        %v1105 = vmul.f32 0.5, %v1104
        %v1106 = vsub.f32 1.5, %v1105
        %v1107 = vmul.f32 %v1102, %v1106
        %vm1108 = vweird.f32 %v1005
        %vm1109 = vweird.f32 %v1102
        %vm1110 = vmor %vm1108, %vm1109
        %v1111 = vsel %vm1110, %v1102, %v1107
        %v1112 = vrsqrt.pop %v1006
        %v1113 = vmul.f32 %v1112, %v1006
        %v1114 = vmul.f32 %v1113, %v1112
        %v1115 = vmul.f32 0.5, %v1114
        %v1116 = vsub.f32 1.5, %v1115
        %v1117 = vmul.f32 %v1112, %v1116
        %vm1118 = vweird.f32 %v1006
        %vm1119 = vweird.f32 %v1112
        %vm1120 = vmor %vm1118, %vm1119
        %v1121 = vsel %vm1120, %v1112, %v1117
        %v1122 = vrsqrt.pop %v1007
        %v1123 = vmul.f32 %v1122, %v1007
        %v1124 = vmul.f32 %v1123, %v1122
        %v1125 = vmul.f32 0.5, %v1124
        %v1126 = vsub.f32 1.5, %v1125
        %v1127 = vmul.f32 %v1122, %v1126
        %vm1128 = vweird.f32 %v1007
        %vm1129 = vweird.f32 %v1122
        %vm1130 = vmor %vm1128, %vm1129
        %v1131 = vsel %vm1130, %v1122, %v1127
        %v1132 = vrsqrt.pop %v1008
        %v1133 = vmul.f32 %v1132, %v1008
        %v1134 = vmul.f32 %v1133, %v1132
        %v1135 = vmul.f32 0.5, %v1134
        %v1136 = vsub.f32 1.5, %v1135
        %v1137 = vmul.f32 %v1132, %v1136
        %vm1138 = vweird.f32 %v1008
        %vm1139 = vweird.f32 %v1132
        %vm1140 = vmor %vm1138, %vm1139
        %v1141 = vsel %vm1140, %v1132, %v1137
        %v1142 = vrsqrt.pop %v1009
        %v1143 = vmul.f32 %v1142, %v1009
        %v1144 = vmul.f32 %v1143, %v1142
        %v1145 = vmul.f32 0.5, %v1144
        %v1146 = vsub.f32 1.5, %v1145
        %v1147 = vmul.f32 %v1142, %v1146
        %vm1148 = vweird.f32 %v1009
        %vm1149 = vweird.f32 %v1142
        %vm1150 = vmor %vm1148, %vm1149
        %v1151 = vsel %vm1150, %v1142, %v1147
        %v1152 = vrsqrt.pop %v1010
        %v1153 = vmul.f32 %v1152, %v1010
        %v1154 = vmul.f32 %v1153, %v1152
        %v1155 = vmul.f32 0.5, %v1154
        %v1156 = vsub.f32 1.5, %v1155
        %v1157 = vmul.f32 %v1152, %v1156
        %vm1158 = vweird.f32 %v1010
        %vm1159 = vweird.f32 %v1152
        %vm1160 = vmor %vm1158, %vm1159
        %v1161 = vsel %vm1160, %v1152, %v1157
        %v1162 = vrsqrt.pop %v1011
        %v1163 = vmul.f32 %v1162, %v1011
        %v1164 = vmul.f32 %v1163, %v1162
        %v1165 = vmul.f32 0.5, %v1164
        %v1166 = vsub.f32 1.5, %v1165
        %v1167 = vmul.f32 %v1162, %v1166
        %vm1168 = vweird.f32 %v1011
        %vm1169 = vweird.f32 %v1162
        %vm1170 = vmor %vm1168, %vm1169
        %v1171 = vsel %vm1170, %v1162, %v1167
        %v1172 = vmul.f32 %v916, %v1021
        %v1173 = vmul.f32 %v917, %v1031
        %v1174 = vmul.f32 %v918, %v1041
        %v1175 = vmul.f32 %v919, %v1051
        %v1176 = vmul.f32 %v920, %v1061
        %v1177 = vmul.f32 %v921, %v1071
        %v1178 = vmul.f32 %v922, %v1081
        %v1179 = vmul.f32 %v923, %v1091
        %v1180 = vmul.f32 %v924, %v1101
        %v1181 = vmul.f32 %v925, %v1111
        %v1182 = vmul.f32 %v926, %v1121
        %v1183 = vmul.f32 %v927, %v1131
        %v1184 = vmul.f32 %v928, %v1141
        %v1185 = vmul.f32 %v929, %v1151
        %v1186 = vmul.f32 %v930, %v1161
        %v1187 = vmul.f32 %v931, %v1171
        %v1189 = vperm.slane %v859, 0
        %v1191 = vmul.f32 %v1172, %v1189
        %v1192 = vmul.f32 %v1173, %v1189
        %v1193 = vmul.f32 %v1174, %v1189
        %v1194 = vmul.f32 %v1175, %v1189
        %v1195 = vmul.f32 %v1176, %v1189
        %v1196 = vmul.f32 %v1177, %v1189
        %v1197 = vmul.f32 %v1178, %v1189
        %v1198 = vmul.f32 %v1179, %v1189
        %v1199 = vmul.f32 %v1180, %v1189
        %v1200 = vmul.f32 %v1181, %v1189
        %v1201 = vmul.f32 %v1182, %v1189
        %v1202 = vmul.f32 %v1183, %v1189
        %v1203 = vmul.f32 %v1184, %v1189
        %v1204 = vmul.f32 %v1185, %v1189
        %v1205 = vmul.f32 %v1186, %v1189
        %v1206 = vmul.f32 %v1187, %v1189
        %v1208 = vperm.slane %v860, 0
        %v1210 = vadd.f32 %v1191, %v1208
        %v1211 = vadd.f32 %v1192, %v1208
        %v1212 = vadd.f32 %v1193, %v1208
        %v1213 = vadd.f32 %v1194, %v1208
        %v1214 = vadd.f32 %v1195, %v1208
        %v1215 = vadd.f32 %v1196, %v1208
        %v1216 = vadd.f32 %v1197, %v1208
        %v1217 = vadd.f32 %v1198, %v1208
        %v1218 = vadd.f32 %v1199, %v1208
        %v1219 = vadd.f32 %v1200, %v1208
        %v1220 = vadd.f32 %v1201, %v1208
        %v1221 = vadd.f32 %v1202, %v1208
        %v1222 = vadd.f32 %v1203, %v1208
        %v1223 = vadd.f32 %v1204, %v1208
        %v1224 = vadd.f32 %v1205, %v1208
        %v1225 = vadd.f32 %v1206, %v1208
        %v1226 = vpack.c.bf16 %v1211, %v1210
        %v1227 = vpack.c.bf16 %v1213, %v1212
        %v1228 = vpack.c.bf16 %v1215, %v1214
        %v1229 = vpack.c.bf16 %v1217, %v1216
        %v1230 = vpack.c.bf16 %v1219, %v1218
        %v1231 = vpack.c.bf16 %v1221, %v1220
        %v1232 = vpack.c.bf16 %v1223, %v1222
        %v1233 = vpack.c.bf16 %v1225, %v1224
        %v1234 = vld [vmem:[%s7] sm:$0xff]
        %v1235 = vld [vmem:[%s7 + $0x8] sm:$0xff]
        %v1236 = vld [vmem:[%s7 + $0x10] sm:$0xff]
        %v1237 = vld [vmem:[%s7 + $0x18] sm:$0xff]
        %v1238 = vld [vmem:[%s7 + $0x20] sm:$0xff]
        %v1239 = vld [vmem:[%s7 + $0x28] sm:$0xff]
        %v1240 = vld [vmem:[%s7 + $0x30] sm:$0xff]
        %v1241 = vld [vmem:[%s7 + $0x38] sm:$0xff]
        %v1242 = vld [vmem:[%s7 + $0x40] sm:$0xff]
        %v1243 = vld [vmem:[%s7 + $0x48] sm:$0xff]
        %v1244 = vld [vmem:[%s7 + $0x50] sm:$0xff]
        %v1245 = vld [vmem:[%s7 + $0x58] sm:$0xff]
        %v1246 = vld [vmem:[%s7 + $0x60] sm:$0xff]
        %v1247 = vld [vmem:[%s7 + $0x68] sm:$0xff]
        %v1248 = vld [vmem:[%s7 + $0x70] sm:$0xff]
        %v1249 = vld [vmem:[%s7 + $0x78] sm:$0xff]
        %v1250 = vld [vmem:[%s8] sm:$0x3]
        %v1252 = vperm.slane %v1250, 0
        %v1253 = vperm.slane %v1250, 1
        %v1272 = vunpack.c.l.b16 %v1234
        %v1273 = vunpack.c.h.b16 %v1234
        %v1274 = vunpack.c.l.b16 %v1235
        %v1275 = vunpack.c.h.b16 %v1235
        %v1276 = vunpack.c.l.b16 %v1236
        %v1277 = vunpack.c.h.b16 %v1236
        %v1278 = vunpack.c.l.b16 %v1237
        %v1279 = vunpack.c.h.b16 %v1237
        %v1280 = vunpack.c.l.b16 %v1238
        %v1281 = vunpack.c.h.b16 %v1238
        %v1282 = vunpack.c.l.b16 %v1239
        %v1283 = vunpack.c.h.b16 %v1239
        %v1284 = vunpack.c.l.b16 %v1240
        %v1285 = vunpack.c.h.b16 %v1240
        %v1286 = vunpack.c.l.b16 %v1241
        %v1287 = vunpack.c.h.b16 %v1241
        %v1288 = vunpack.c.l.b16 %v1242
        %v1289 = vunpack.c.h.b16 %v1242
        %v1290 = vunpack.c.l.b16 %v1243
        %v1291 = vunpack.c.h.b16 %v1243
        %v1292 = vunpack.c.l.b16 %v1244
        %v1293 = vunpack.c.h.b16 %v1244
        %v1294 = vunpack.c.l.b16 %v1245
        %v1295 = vunpack.c.h.b16 %v1245
        %v1296 = vunpack.c.l.b16 %v1246
        %v1297 = vunpack.c.h.b16 %v1246
        %v1298 = vunpack.c.l.b16 %v1247
        %v1299 = vunpack.c.h.b16 %v1247
        %v1300 = vunpack.c.l.b16 %v1248
        %v1301 = vunpack.c.h.b16 %v1248
        %v1302 = vunpack.c.l.b16 %v1249
        %v1303 = vunpack.c.h.b16 %v1249
        %v1304 = vpack.c.b16 %v1274, %v1272
        %v1305 = vpack.c.b16 %v1275, %v1273
        %v1306 = vpack.c.b16 %v1278, %v1276
        %v1307 = vpack.c.b16 %v1279, %v1277
        %v1308 = vpack.c.b16 %v1282, %v1280
        %v1309 = vpack.c.b16 %v1283, %v1281
        %v1310 = vpack.c.b16 %v1286, %v1284
        %v1311 = vpack.c.b16 %v1287, %v1285
        %v1312 = vpack.c.b16 %v1290, %v1288
        %v1313 = vpack.c.b16 %v1291, %v1289
        %v1314 = vpack.c.b16 %v1294, %v1292
        %v1315 = vpack.c.b16 %v1295, %v1293
        %v1316 = vpack.c.b16 %v1298, %v1296
        %v1317 = vpack.c.b16 %v1299, %v1297
        %v1318 = vpack.c.b16 %v1302, %v1300
        %v1319 = vpack.c.b16 %v1303, %v1301
        %1336 = vmatpush.bf16.msra.mxu0 %v1318
        %1337 = vmatpush.bf16.msra.mxu0 %v1316
        %1338 = vmatpush.bf16.msra.mxu0 %v1314
        %1339 = vmatpush.bf16.msra.mxu0 %v1312
        %1340 = vmatpush.bf16.msra.mxu0 %v1310
        %1341 = vmatpush.bf16.msra.mxu0 %v1308
        %1342 = vmatpush.bf16.msra.mxu0 %v1306
        %1343 = vmatpush.bf16.msra.mxu0 %v1304
        %1344 = vmatmul.bf16.gmra.mxu0 %v1226
        %v1345 = vpop.f32.mrf.mxu0
        %v1346 = vadd.f32 %v1252, %v1345
        %v1347 = vpop.f32.mrf.mxu0
        %v1348 = vadd.f32 %v1252, %v1347
        %1349 = vmatmul.bf16.gmra.mxu0 %v1227
        %v1350 = vpop.f32.mrf.mxu0
        %v1351 = vadd.f32 %v1252, %v1350
        %v1352 = vpop.f32.mrf.mxu0
        %v1353 = vadd.f32 %v1252, %v1352
        %1354 = vmatmul.bf16.gmra.mxu0 %v1228
        %v1355 = vpop.f32.mrf.mxu0
        %v1356 = vadd.f32 %v1252, %v1355
        %v1357 = vpop.f32.mrf.mxu0
        %v1358 = vadd.f32 %v1252, %v1357
        %1359 = vmatmul.bf16.gmra.mxu0 %v1229
        %v1360 = vpop.f32.mrf.mxu0
        %v1361 = vadd.f32 %v1252, %v1360
        %v1362 = vpop.f32.mrf.mxu0
        %v1363 = vadd.f32 %v1252, %v1362
        %1364 = vmatmul.bf16.gmra.mxu0 %v1230
        %v1365 = vpop.f32.mrf.mxu0
        %v1366 = vadd.f32 %v1252, %v1365
        %v1367 = vpop.f32.mrf.mxu0
        %v1368 = vadd.f32 %v1252, %v1367
        %1369 = vmatmul.bf16.gmra.mxu0 %v1231
        %v1370 = vpop.f32.mrf.mxu0
        %v1371 = vadd.f32 %v1252, %v1370
        %v1372 = vpop.f32.mrf.mxu0
        %v1373 = vadd.f32 %v1252, %v1372
        %1374 = vmatmul.bf16.gmra.mxu0 %v1232
        %v1375 = vpop.f32.mrf.mxu0
        %v1376 = vadd.f32 %v1252, %v1375
        %v1377 = vpop.f32.mrf.mxu0
        %v1378 = vadd.f32 %v1252, %v1377
        %1379 = vmatmul.bf16.gmra.mxu0 %v1233
        %v1380 = vpop.f32.mrf.mxu0
        %v1381 = vadd.f32 %v1252, %v1380
        %v1382 = vpop.f32.mrf.mxu0
        %v1383 = vadd.f32 %v1252, %v1382
        %1384 = vdwg.mxu0
        %1385 = vmatpush.bf16.msra.mxu0 %v1319
        %1386 = vmatpush.bf16.msra.mxu0 %v1317
        %1387 = vmatpush.bf16.msra.mxu0 %v1315
        %1388 = vmatpush.bf16.msra.mxu0 %v1313
        %1389 = vmatpush.bf16.msra.mxu0 %v1311
        %1390 = vmatpush.bf16.msra.mxu0 %v1309
        %1391 = vmatpush.bf16.msra.mxu0 %v1307
        %1392 = vmatpush.bf16.msra.mxu0 %v1305
        %1393 = vmatmul.bf16.gmra.mxu0 %v1226
        %v1394 = vpop.f32.mrf.mxu0
        %v1395 = vadd.f32 %v1253, %v1394
        %v1396 = vpop.f32.mrf.mxu0
        %v1397 = vadd.f32 %v1253, %v1396
        %1398 = vmatmul.bf16.gmra.mxu0 %v1227
        %v1399 = vpop.f32.mrf.mxu0
        %v1400 = vadd.f32 %v1253, %v1399
        %v1401 = vpop.f32.mrf.mxu0
        %v1402 = vadd.f32 %v1253, %v1401
        %1403 = vmatmul.bf16.gmra.mxu0 %v1228
        %v1404 = vpop.f32.mrf.mxu0
        %v1405 = vadd.f32 %v1253, %v1404
        %v1406 = vpop.f32.mrf.mxu0
        %v1407 = vadd.f32 %v1253, %v1406
        %1408 = vmatmul.bf16.gmra.mxu0 %v1229
        %v1409 = vpop.f32.mrf.mxu0
        %v1410 = vadd.f32 %v1253, %v1409
        %v1411 = vpop.f32.mrf.mxu0
        %v1412 = vadd.f32 %v1253, %v1411
        %1413 = vmatmul.bf16.gmra.mxu0 %v1230
        %v1414 = vpop.f32.mrf.mxu0
        %v1415 = vadd.f32 %v1253, %v1414
        %v1416 = vpop.f32.mrf.mxu0
        %v1417 = vadd.f32 %v1253, %v1416
        %1418 = vmatmul.bf16.gmra.mxu0 %v1231
        %v1419 = vpop.f32.mrf.mxu0
        %v1420 = vadd.f32 %v1253, %v1419
        %v1421 = vpop.f32.mrf.mxu0
        %v1422 = vadd.f32 %v1253, %v1421
        %1423 = vmatmul.bf16.gmra.mxu0 %v1232
        %v1424 = vpop.f32.mrf.mxu0
        %v1425 = vadd.f32 %v1253, %v1424
        %v1426 = vpop.f32.mrf.mxu0
        %v1427 = vadd.f32 %v1253, %v1426
        %1428 = vmatmul.bf16.gmra.mxu0 %v1233
        %v1429 = vpop.f32.mrf.mxu0
        %v1430 = vadd.f32 %v1253, %v1429
        %v1431 = vpop.f32.mrf.mxu0
        %v1432 = vadd.f32 %v1253, %v1431
        %1433 = vdwg.mxu0
        %v1434 = vmax.f32 %v1346, 0.0
        %v1435 = vmax.f32 %v1395, 0.0
        %v1436 = vmax.f32 %v1348, 0.0
        %v1437 = vmax.f32 %v1397, 0.0
        %v1438 = vmax.f32 %v1351, 0.0
        %v1439 = vmax.f32 %v1400, 0.0
        %v1440 = vmax.f32 %v1353, 0.0
        %v1441 = vmax.f32 %v1402, 0.0
        %v1442 = vmax.f32 %v1356, 0.0
        %v1443 = vmax.f32 %v1405, 0.0
        %v1444 = vmax.f32 %v1358, 0.0
        %v1445 = vmax.f32 %v1407, 0.0
        %v1446 = vmax.f32 %v1361, 0.0
        %v1447 = vmax.f32 %v1410, 0.0
        %v1448 = vmax.f32 %v1363, 0.0
        %v1449 = vmax.f32 %v1412, 0.0
        %v1450 = vmax.f32 %v1366, 0.0
        %v1451 = vmax.f32 %v1415, 0.0
        %v1452 = vmax.f32 %v1368, 0.0
        %v1453 = vmax.f32 %v1417, 0.0
        %v1454 = vmax.f32 %v1371, 0.0
        %v1455 = vmax.f32 %v1420, 0.0
        %v1456 = vmax.f32 %v1373, 0.0
        %v1457 = vmax.f32 %v1422, 0.0
        %v1458 = vmax.f32 %v1376, 0.0
        %v1459 = vmax.f32 %v1425, 0.0
        %v1460 = vmax.f32 %v1378, 0.0
        %v1461 = vmax.f32 %v1427, 0.0
        %v1462 = vmax.f32 %v1381, 0.0
        %v1463 = vmax.f32 %v1430, 0.0
        %v1464 = vmax.f32 %v1383, 0.0
        %v1465 = vmax.f32 %v1432, 0.0
        %v1466 = vpack.c.bf16 %v1436, %v1434
        %v1467 = vpack.c.bf16 %v1437, %v1435
        %v1468 = vpack.c.bf16 %v1440, %v1438
        %v1469 = vpack.c.bf16 %v1441, %v1439
        %v1470 = vpack.c.bf16 %v1444, %v1442
        %v1471 = vpack.c.bf16 %v1445, %v1443
        %v1472 = vpack.c.bf16 %v1448, %v1446
        %v1473 = vpack.c.bf16 %v1449, %v1447
        %v1474 = vpack.c.bf16 %v1452, %v1450
        %v1475 = vpack.c.bf16 %v1453, %v1451
        %v1476 = vpack.c.bf16 %v1456, %v1454
        %v1477 = vpack.c.bf16 %v1457, %v1455
        %v1478 = vpack.c.bf16 %v1460, %v1458
        %v1479 = vpack.c.bf16 %v1461, %v1459
        %v1480 = vpack.c.bf16 %v1464, %v1462
        %v1481 = vpack.c.bf16 %v1465, %v1463
        %v1482 = vld [vmem:[%s9] sm:$0xf]
        %v1483 = vld [vmem:[%s9 + $0x4] sm:$0xf]
        %v1484 = vld [vmem:[%s9 + $0x8] sm:$0xf]
        %v1485 = vld [vmem:[%s9 + $0xc] sm:$0xf]
        %v1486 = vld [vmem:[%s9 + $0x10] sm:$0xf]
        %v1487 = vld [vmem:[%s9 + $0x14] sm:$0xf]
        %v1488 = vld [vmem:[%s9 + $0x18] sm:$0xf]
        %v1489 = vld [vmem:[%s9 + $0x1c] sm:$0xf]
        %v1490 = vld [vmem:[%s9 + $0x20] sm:$0xf]
        %v1491 = vld [vmem:[%s9 + $0x24] sm:$0xf]
        %v1492 = vld [vmem:[%s9 + $0x28] sm:$0xf]
        %v1493 = vld [vmem:[%s9 + $0x2c] sm:$0xf]
        %v1494 = vld [vmem:[%s9 + $0x30] sm:$0xf]
        %v1495 = vld [vmem:[%s9 + $0x34] sm:$0xf]
        %v1496 = vld [vmem:[%s9 + $0x38] sm:$0xf]
        %v1497 = vld [vmem:[%s9 + $0x3c] sm:$0xf]
        %v1498 = vld [vmem:[%s9 + $0x40] sm:$0xf]
        %v1499 = vld [vmem:[%s9 + $0x44] sm:$0xf]
        %v1500 = vld [vmem:[%s9 + $0x48] sm:$0xf]
        %v1501 = vld [vmem:[%s9 + $0x4c] sm:$0xf]
        %v1502 = vld [vmem:[%s9 + $0x50] sm:$0xf]
        %v1503 = vld [vmem:[%s9 + $0x54] sm:$0xf]
        %v1504 = vld [vmem:[%s9 + $0x58] sm:$0xf]
        %v1505 = vld [vmem:[%s9 + $0x5c] sm:$0xf]
        %v1506 = vld [vmem:[%s9 + $0x60] sm:$0xf]
        %v1507 = vld [vmem:[%s9 + $0x64] sm:$0xf]
        %v1508 = vld [vmem:[%s9 + $0x68] sm:$0xf]
        %v1509 = vld [vmem:[%s9 + $0x6c] sm:$0xf]
        %v1510 = vld [vmem:[%s9 + $0x70] sm:$0xf]
        %v1511 = vld [vmem:[%s9 + $0x74] sm:$0xf]
        %v1512 = vld [vmem:[%s9 + $0x78] sm:$0xf]
        %v1513 = vld [vmem:[%s9 + $0x7c] sm:$0xf]
        %v1514 = vld [vmem:[%s10] sm:$0x1]
        %v1516 = vperm.slane %v1514, 0
        %v1550 = vunpack.c.l.b16 %v1482
        %v1551 = vunpack.c.l.b16 %v1483
        %v1552 = vunpack.c.l.b16 %v1484
        %v1553 = vunpack.c.l.b16 %v1485
        %v1554 = vunpack.c.l.b16 %v1486
        %v1555 = vunpack.c.l.b16 %v1487
        %v1556 = vunpack.c.l.b16 %v1488
        %v1557 = vunpack.c.l.b16 %v1489
        %v1558 = vunpack.c.l.b16 %v1490
        %v1559 = vunpack.c.l.b16 %v1491
        %v1560 = vunpack.c.l.b16 %v1492
        %v1561 = vunpack.c.l.b16 %v1493
        %v1562 = vunpack.c.l.b16 %v1494
        %v1563 = vunpack.c.l.b16 %v1495
        %v1564 = vunpack.c.l.b16 %v1496
        %v1565 = vunpack.c.l.b16 %v1497
        %v1566 = vunpack.c.l.b16 %v1498
        %v1567 = vunpack.c.l.b16 %v1499
        %v1568 = vunpack.c.l.b16 %v1500
        %v1569 = vunpack.c.l.b16 %v1501
        %v1570 = vunpack.c.l.b16 %v1502
        %v1571 = vunpack.c.l.b16 %v1503
        %v1572 = vunpack.c.l.b16 %v1504
        %v1573 = vunpack.c.l.b16 %v1505
        %v1574 = vunpack.c.l.b16 %v1506
        %v1575 = vunpack.c.l.b16 %v1507
        %v1576 = vunpack.c.l.b16 %v1508
        %v1577 = vunpack.c.l.b16 %v1509
        %v1578 = vunpack.c.l.b16 %v1510
        %v1579 = vunpack.c.l.b16 %v1511
        %v1580 = vunpack.c.l.b16 %v1512
        %v1581 = vunpack.c.l.b16 %v1513
        %v1582 = vpack.c.b16 %v1551, %v1550
        %v1583 = vpack.c.b16 %v1553, %v1552
        %v1584 = vpack.c.b16 %v1555, %v1554
        %v1585 = vpack.c.b16 %v1557, %v1556
        %v1586 = vpack.c.b16 %v1559, %v1558
        %v1587 = vpack.c.b16 %v1561, %v1560
        %v1588 = vpack.c.b16 %v1563, %v1562
        %v1589 = vpack.c.b16 %v1565, %v1564
        %v1590 = vpack.c.b16 %v1567, %v1566
        %v1591 = vpack.c.b16 %v1569, %v1568
        %v1592 = vpack.c.b16 %v1571, %v1570
        %v1593 = vpack.c.b16 %v1573, %v1572
        %v1594 = vpack.c.b16 %v1575, %v1574
        %v1595 = vpack.c.b16 %v1577, %v1576
        %v1596 = vpack.c.b16 %v1579, %v1578
        %v1597 = vpack.c.b16 %v1581, %v1580
        %1614 = vmatpush.bf16.msra.mxu0 %v1589
        %1615 = vmatpush.bf16.msra.mxu0 %v1588
        %1616 = vmatpush.bf16.msra.mxu0 %v1587
        %1617 = vmatpush.bf16.msra.mxu0 %v1586
        %1618 = vmatpush.bf16.msra.mxu0 %v1585
        %1619 = vmatpush.bf16.msra.mxu0 %v1584
        %1620 = vmatpush.bf16.msra.mxu0 %v1583
        %1621 = vmatpush.bf16.msra.mxu0 %v1582
        %1622 = vmatmul.bf16.gmra.mxu0 %v1466
        %v1623 = vpop.f32.mrf.mxu0
        %v1624 = vadd.f32 %v1516, %v1623
        %v1625 = vpop.f32.mrf.mxu0
        %v1626 = vadd.f32 %v1516, %v1625
        %1627 = vmatmul.bf16.gmra.mxu0 %v1468
        %v1628 = vpop.f32.mrf.mxu0
        %v1629 = vadd.f32 %v1516, %v1628
        %v1630 = vpop.f32.mrf.mxu0
        %v1631 = vadd.f32 %v1516, %v1630
        %1632 = vmatmul.bf16.gmra.mxu0 %v1470
        %v1633 = vpop.f32.mrf.mxu0
        %v1634 = vadd.f32 %v1516, %v1633
        %v1635 = vpop.f32.mrf.mxu0
        %v1636 = vadd.f32 %v1516, %v1635
        %1637 = vmatmul.bf16.gmra.mxu0 %v1472
        %v1638 = vpop.f32.mrf.mxu0
        %v1639 = vadd.f32 %v1516, %v1638
        %v1640 = vpop.f32.mrf.mxu0
        %v1641 = vadd.f32 %v1516, %v1640
        %1642 = vmatmul.bf16.gmra.mxu0 %v1474
        %v1643 = vpop.f32.mrf.mxu0
        %v1644 = vadd.f32 %v1516, %v1643
        %v1645 = vpop.f32.mrf.mxu0
        %v1646 = vadd.f32 %v1516, %v1645
        %1647 = vmatmul.bf16.gmra.mxu0 %v1476
        %v1648 = vpop.f32.mrf.mxu0
        %v1649 = vadd.f32 %v1516, %v1648
        %v1650 = vpop.f32.mrf.mxu0
        %v1651 = vadd.f32 %v1516, %v1650
        %1652 = vmatmul.bf16.gmra.mxu0 %v1478
        %v1653 = vpop.f32.mrf.mxu0
        %v1654 = vadd.f32 %v1516, %v1653
        %v1655 = vpop.f32.mrf.mxu0
        %v1656 = vadd.f32 %v1516, %v1655
        %1657 = vmatmul.bf16.gmra.mxu0 %v1480
        %v1658 = vpop.f32.mrf.mxu0
        %v1659 = vadd.f32 %v1516, %v1658
        %v1660 = vpop.f32.mrf.mxu0
        %v1661 = vadd.f32 %v1516, %v1660
        %1662 = vdwg.mxu0
        %1663 = vmatpush.bf16.msra.mxu0 %v1597
        %1664 = vmatpush.bf16.msra.mxu0 %v1596
        %1665 = vmatpush.bf16.msra.mxu0 %v1595
        %1666 = vmatpush.bf16.msra.mxu0 %v1594
        %1667 = vmatpush.bf16.msra.mxu0 %v1593
        %1668 = vmatpush.bf16.msra.mxu0 %v1592
        %1669 = vmatpush.bf16.msra.mxu0 %v1591
        %1670 = vmatpush.bf16.msra.mxu0 %v1590
        %1671 = vmatmul.bf16.gmra.mxu0 %v1467
        %v1672 = vpop.f32.mrf.mxu0
        %v1673 = vadd.f32 %v1624, %v1672
        %v1674 = vpop.f32.mrf.mxu0
        %v1675 = vadd.f32 %v1626, %v1674
        %1676 = vmatmul.bf16.gmra.mxu0 %v1469
        %v1677 = vpop.f32.mrf.mxu0
        %v1678 = vadd.f32 %v1629, %v1677
        %v1679 = vpop.f32.mrf.mxu0
        %v1680 = vadd.f32 %v1631, %v1679
        %1681 = vmatmul.bf16.gmra.mxu0 %v1471
        %v1682 = vpop.f32.mrf.mxu0
        %v1683 = vadd.f32 %v1634, %v1682
        %v1684 = vpop.f32.mrf.mxu0
        %v1685 = vadd.f32 %v1636, %v1684
        %1686 = vmatmul.bf16.gmra.mxu0 %v1473
        %v1687 = vpop.f32.mrf.mxu0
        %v1688 = vadd.f32 %v1639, %v1687
        %v1689 = vpop.f32.mrf.mxu0
        %v1690 = vadd.f32 %v1641, %v1689
        %1691 = vmatmul.bf16.gmra.mxu0 %v1475
        %v1692 = vpop.f32.mrf.mxu0
        %v1693 = vadd.f32 %v1644, %v1692
        %v1694 = vpop.f32.mrf.mxu0
        %v1695 = vadd.f32 %v1646, %v1694
        %1696 = vmatmul.bf16.gmra.mxu0 %v1477
        %v1697 = vpop.f32.mrf.mxu0
        %v1698 = vadd.f32 %v1649, %v1697
        %v1699 = vpop.f32.mrf.mxu0
        %v1700 = vadd.f32 %v1651, %v1699
        %1701 = vmatmul.bf16.gmra.mxu0 %v1479
        %v1702 = vpop.f32.mrf.mxu0
        %v1703 = vadd.f32 %v1654, %v1702
        %v1704 = vpop.f32.mrf.mxu0
        %v1705 = vadd.f32 %v1656, %v1704
        %1706 = vmatmul.bf16.gmra.mxu0 %v1481
        %v1707 = vpop.f32.mrf.mxu0
        %v1708 = vadd.f32 %v1659, %v1707
        %v1709 = vpop.f32.mrf.mxu0
        %v1710 = vadd.f32 %v1661, %v1709
        %1711 = vdwg.mxu0
        %v1712 = vadd.f32 %v1210, %v1673
        %v1713 = vadd.f32 %v1211, %v1675
        %v1714 = vadd.f32 %v1212, %v1678
        %v1715 = vadd.f32 %v1213, %v1680
        %v1716 = vadd.f32 %v1214, %v1683
        %v1717 = vadd.f32 %v1215, %v1685
        %v1718 = vadd.f32 %v1216, %v1688
        %v1719 = vadd.f32 %v1217, %v1690
        %v1720 = vadd.f32 %v1218, %v1693
        %v1721 = vadd.f32 %v1219, %v1695
        %v1722 = vadd.f32 %v1220, %v1698
        %v1723 = vadd.f32 %v1221, %v1700
        %v1724 = vadd.f32 %v1222, %v1703
        %v1725 = vadd.f32 %v1223, %v1705
        %v1726 = vadd.f32 %v1224, %v1708
        %v1727 = vadd.f32 %v1225, %v1710
        %v1728 = vld [vmem:[%s11] sm:$0x1]
        %v1729 = vld [vmem:[%s12] sm:$0x1]
        %1730 = vadd.xlane.f32.xlu0 %v1712
        %v1731 = vpop.xlane.xlu0 %1730
        %1732 = vadd.xlane.f32.xlu0 %v1713
        %v1733 = vpop.xlane.xlu0 %1732
        %1734 = vadd.xlane.f32.xlu0 %v1714
        %v1735 = vpop.xlane.xlu0 %1734
        %1736 = vadd.xlane.f32.xlu0 %v1715
        %v1737 = vpop.xlane.xlu0 %1736
        %1738 = vadd.xlane.f32.xlu0 %v1716
        %v1739 = vpop.xlane.xlu0 %1738
        %1740 = vadd.xlane.f32.xlu0 %v1717
        %v1741 = vpop.xlane.xlu0 %1740
        %1742 = vadd.xlane.f32.xlu0 %v1718
        %v1743 = vpop.xlane.xlu0 %1742
        %1744 = vadd.xlane.f32.xlu0 %v1719
        %v1745 = vpop.xlane.xlu0 %1744
        %1746 = vadd.xlane.f32.xlu0 %v1720
        %v1747 = vpop.xlane.xlu0 %1746
        %1748 = vadd.xlane.f32.xlu0 %v1721
        %v1749 = vpop.xlane.xlu0 %1748
        %1750 = vadd.xlane.f32.xlu0 %v1722
        %v1751 = vpop.xlane.xlu0 %1750
        %1752 = vadd.xlane.f32.xlu0 %v1723
        %v1753 = vpop.xlane.xlu0 %1752
        %1754 = vadd.xlane.f32.xlu0 %v1724
        %v1755 = vpop.xlane.xlu0 %1754
        %1756 = vadd.xlane.f32.xlu0 %v1725
        %v1757 = vpop.xlane.xlu0 %1756
        %1758 = vadd.xlane.f32.xlu0 %v1726
        %v1759 = vpop.xlane.xlu0 %1758
        %1760 = vadd.xlane.f32.xlu0 %v1727
        %v1761 = vpop.xlane.xlu0 %1760
        %v1762 = vmul.f32 %v1731, %v899
        %v1763 = vmul.f32 %v1733, %v899
        %v1764 = vmul.f32 %v1735, %v899
        %v1765 = vmul.f32 %v1737, %v899
        %v1766 = vmul.f32 %v1739, %v899
        %v1767 = vmul.f32 %v1741, %v899
        %v1768 = vmul.f32 %v1743, %v899
        %v1769 = vmul.f32 %v1745, %v899
        %v1770 = vmul.f32 %v1747, %v899
        %v1771 = vmul.f32 %v1749, %v899
        %v1772 = vmul.f32 %v1751, %v899
        %v1773 = vmul.f32 %v1753, %v899
        %v1774 = vmul.f32 %v1755, %v899
        %v1775 = vmul.f32 %v1757, %v899
        %v1776 = vmul.f32 %v1759, %v899
        %v1777 = vmul.f32 %v1761, %v899
        %v1778 = vsub.f32 %v1712, %v1762
        %v1779 = vsub.f32 %v1713, %v1763
        %v1780 = vsub.f32 %v1714, %v1764
        %v1781 = vsub.f32 %v1715, %v1765
        %v1782 = vsub.f32 %v1716, %v1766
        %v1783 = vsub.f32 %v1717, %v1767
        %v1784 = vsub.f32 %v1718, %v1768
        %v1785 = vsub.f32 %v1719, %v1769
        %v1786 = vsub.f32 %v1720, %v1770
        %v1787 = vsub.f32 %v1721, %v1771
        %v1788 = vsub.f32 %v1722, %v1772
        %v1789 = vsub.f32 %v1723, %v1773
        %v1790 = vsub.f32 %v1724, %v1774
        %v1791 = vsub.f32 %v1725, %v1775
        %v1792 = vsub.f32 %v1726, %v1776
        %v1793 = vsub.f32 %v1727, %v1777
        %v1794 = vmul.f32 %v1778, %v1778
        %v1795 = vmul.f32 %v1779, %v1779
        %v1796 = vmul.f32 %v1780, %v1780
        %v1797 = vmul.f32 %v1781, %v1781
        %v1798 = vmul.f32 %v1782, %v1782
        %v1799 = vmul.f32 %v1783, %v1783
        %v1800 = vmul.f32 %v1784, %v1784
        %v1801 = vmul.f32 %v1785, %v1785
        %v1802 = vmul.f32 %v1786, %v1786
        %v1803 = vmul.f32 %v1787, %v1787
        %v1804 = vmul.f32 %v1788, %v1788
        %v1805 = vmul.f32 %v1789, %v1789
        %v1806 = vmul.f32 %v1790, %v1790
        %v1807 = vmul.f32 %v1791, %v1791
        %v1808 = vmul.f32 %v1792, %v1792
        %v1809 = vmul.f32 %v1793, %v1793
        %1810 = vadd.xlane.f32.xlu0 %v1794
        %v1811 = vpop.xlane.xlu0 %1810
        %1812 = vadd.xlane.f32.xlu0 %v1795
        %v1813 = vpop.xlane.xlu0 %1812
        %1814 = vadd.xlane.f32.xlu0 %v1796
        %v1815 = vpop.xlane.xlu0 %1814
        %1816 = vadd.xlane.f32.xlu0 %v1797
        %v1817 = vpop.xlane.xlu0 %1816
        %1818 = vadd.xlane.f32.xlu0 %v1798
        %v1819 = vpop.xlane.xlu0 %1818
        %1820 = vadd.xlane.f32.xlu0 %v1799
        %v1821 = vpop.xlane.xlu0 %1820
        %1822 = vadd.xlane.f32.xlu0 %v1800
        %v1823 = vpop.xlane.xlu0 %1822
        %1824 = vadd.xlane.f32.xlu0 %v1801
        %v1825 = vpop.xlane.xlu0 %1824
        %1826 = vadd.xlane.f32.xlu0 %v1802
        %v1827 = vpop.xlane.xlu0 %1826
        %1828 = vadd.xlane.f32.xlu0 %v1803
        %v1829 = vpop.xlane.xlu0 %1828
        %1830 = vadd.xlane.f32.xlu0 %v1804
        %v1831 = vpop.xlane.xlu0 %1830
        %1832 = vadd.xlane.f32.xlu0 %v1805
        %v1833 = vpop.xlane.xlu0 %1832
        %1834 = vadd.xlane.f32.xlu0 %v1806
        %v1835 = vpop.xlane.xlu0 %1834
        %1836 = vadd.xlane.f32.xlu0 %v1807
        %v1837 = vpop.xlane.xlu0 %1836
        %1838 = vadd.xlane.f32.xlu0 %v1808
        %v1839 = vpop.xlane.xlu0 %1838
        %1840 = vadd.xlane.f32.xlu0 %v1809
        %v1841 = vpop.xlane.xlu0 %1840
        %v1842 = vmul.f32 %v1811, %v899
        %v1843 = vmul.f32 %v1813, %v899
        %v1844 = vmul.f32 %v1815, %v899
        %v1845 = vmul.f32 %v1817, %v899
        %v1846 = vmul.f32 %v1819, %v899
        %v1847 = vmul.f32 %v1821, %v899
        %v1848 = vmul.f32 %v1823, %v899
        %v1849 = vmul.f32 %v1825, %v899
        %v1850 = vmul.f32 %v1827, %v899
        %v1851 = vmul.f32 %v1829, %v899
        %v1852 = vmul.f32 %v1831, %v899
        %v1853 = vmul.f32 %v1833, %v899
        %v1854 = vmul.f32 %v1835, %v899
        %v1855 = vmul.f32 %v1837, %v899
        %v1856 = vmul.f32 %v1839, %v899
        %v1857 = vmul.f32 %v1841, %v899
        %v1858 = vadd.f32 %v1842, 1e-05
        %v1859 = vadd.f32 %v1843, 1e-05
        %v1860 = vadd.f32 %v1844, 1e-05
        %v1861 = vadd.f32 %v1845, 1e-05
        %v1862 = vadd.f32 %v1846, 1e-05
        %v1863 = vadd.f32 %v1847, 1e-05
        %v1864 = vadd.f32 %v1848, 1e-05
        %v1865 = vadd.f32 %v1849, 1e-05
        %v1866 = vadd.f32 %v1850, 1e-05
        %v1867 = vadd.f32 %v1851, 1e-05
        %v1868 = vadd.f32 %v1852, 1e-05
        %v1869 = vadd.f32 %v1853, 1e-05
        %v1870 = vadd.f32 %v1854, 1e-05
        %v1871 = vadd.f32 %v1855, 1e-05
        %v1872 = vadd.f32 %v1856, 1e-05
        %v1873 = vadd.f32 %v1857, 1e-05
        %v1874 = vrsqrt.pop %v1858
        %v1875 = vmul.f32 %v1874, %v1858
        %v1876 = vmul.f32 %v1875, %v1874
        %v1877 = vmul.f32 0.5, %v1876
        %v1878 = vsub.f32 1.5, %v1877
        %v1879 = vmul.f32 %v1874, %v1878
        %vm1880 = vweird.f32 %v1858
        %vm1881 = vweird.f32 %v1874
        %vm1882 = vmor %vm1880, %vm1881
        %v1883 = vsel %vm1882, %v1874, %v1879
        %v1884 = vrsqrt.pop %v1859
        %v1885 = vmul.f32 %v1884, %v1859
        %v1886 = vmul.f32 %v1885, %v1884
        %v1887 = vmul.f32 0.5, %v1886
        %v1888 = vsub.f32 1.5, %v1887
        %v1889 = vmul.f32 %v1884, %v1888
        %vm1890 = vweird.f32 %v1859
        %vm1891 = vweird.f32 %v1884
        %vm1892 = vmor %vm1890, %vm1891
        %v1893 = vsel %vm1892, %v1884, %v1889
        %v1894 = vrsqrt.pop %v1860
        %v1895 = vmul.f32 %v1894, %v1860
        %v1896 = vmul.f32 %v1895, %v1894
        %v1897 = vmul.f32 0.5, %v1896
        %v1898 = vsub.f32 1.5, %v1897
        %v1899 = vmul.f32 %v1894, %v1898
        %vm1900 = vweird.f32 %v1860
        %vm1901 = vweird.f32 %v1894
        %vm1902 = vmor %vm1900, %vm1901
        %v1903 = vsel %vm1902, %v1894, %v1899
        %v1904 = vrsqrt.pop %v1861
        %v1905 = vmul.f32 %v1904, %v1861
        %v1906 = vmul.f32 %v1905, %v1904
        %v1907 = vmul.f32 0.5, %v1906
        %v1908 = vsub.f32 1.5, %v1907
        %v1909 = vmul.f32 %v1904, %v1908
        %vm1910 = vweird.f32 %v1861
        %vm1911 = vweird.f32 %v1904
        %vm1912 = vmor %vm1910, %vm1911
        %v1913 = vsel %vm1912, %v1904, %v1909
        %v1914 = vrsqrt.pop %v1862
        %v1915 = vmul.f32 %v1914, %v1862
        %v1916 = vmul.f32 %v1915, %v1914
        %v1917 = vmul.f32 0.5, %v1916
        %v1918 = vsub.f32 1.5, %v1917
        %v1919 = vmul.f32 %v1914, %v1918
        %vm1920 = vweird.f32 %v1862
        %vm1921 = vweird.f32 %v1914
        %vm1922 = vmor %vm1920, %vm1921
        %v1923 = vsel %vm1922, %v1914, %v1919
        %v1924 = vrsqrt.pop %v1863
        %v1925 = vmul.f32 %v1924, %v1863
        %v1926 = vmul.f32 %v1925, %v1924
        %v1927 = vmul.f32 0.5, %v1926
        %v1928 = vsub.f32 1.5, %v1927
        %v1929 = vmul.f32 %v1924, %v1928
        %vm1930 = vweird.f32 %v1863
        %vm1931 = vweird.f32 %v1924
        %vm1932 = vmor %vm1930, %vm1931
        %v1933 = vsel %vm1932, %v1924, %v1929
        %v1934 = vrsqrt.pop %v1864
        %v1935 = vmul.f32 %v1934, %v1864
        %v1936 = vmul.f32 %v1935, %v1934
        %v1937 = vmul.f32 0.5, %v1936
        %v1938 = vsub.f32 1.5, %v1937
        %v1939 = vmul.f32 %v1934, %v1938
        %vm1940 = vweird.f32 %v1864
        %vm1941 = vweird.f32 %v1934
        %vm1942 = vmor %vm1940, %vm1941
        %v1943 = vsel %vm1942, %v1934, %v1939
        %v1944 = vrsqrt.pop %v1865
        %v1945 = vmul.f32 %v1944, %v1865
        %v1946 = vmul.f32 %v1945, %v1944
        %v1947 = vmul.f32 0.5, %v1946
        %v1948 = vsub.f32 1.5, %v1947
        %v1949 = vmul.f32 %v1944, %v1948
        %vm1950 = vweird.f32 %v1865
        %vm1951 = vweird.f32 %v1944
        %vm1952 = vmor %vm1950, %vm1951
        %v1953 = vsel %vm1952, %v1944, %v1949
        %v1954 = vrsqrt.pop %v1866
        %v1955 = vmul.f32 %v1954, %v1866
        %v1956 = vmul.f32 %v1955, %v1954
        %v1957 = vmul.f32 0.5, %v1956
        %v1958 = vsub.f32 1.5, %v1957
        %v1959 = vmul.f32 %v1954, %v1958
        %vm1960 = vweird.f32 %v1866
        %vm1961 = vweird.f32 %v1954
        %vm1962 = vmor %vm1960, %vm1961
        %v1963 = vsel %vm1962, %v1954, %v1959
        %v1964 = vrsqrt.pop %v1867
        %v1965 = vmul.f32 %v1964, %v1867
        %v1966 = vmul.f32 %v1965, %v1964
        %v1967 = vmul.f32 0.5, %v1966
        %v1968 = vsub.f32 1.5, %v1967
        %v1969 = vmul.f32 %v1964, %v1968
        %vm1970 = vweird.f32 %v1867
        %vm1971 = vweird.f32 %v1964
        %vm1972 = vmor %vm1970, %vm1971
        %v1973 = vsel %vm1972, %v1964, %v1969
        %v1974 = vrsqrt.pop %v1868
        %v1975 = vmul.f32 %v1974, %v1868
        %v1976 = vmul.f32 %v1975, %v1974
        %v1977 = vmul.f32 0.5, %v1976
        %v1978 = vsub.f32 1.5, %v1977
        %v1979 = vmul.f32 %v1974, %v1978
        %vm1980 = vweird.f32 %v1868
        %vm1981 = vweird.f32 %v1974
        %vm1982 = vmor %vm1980, %vm1981
        %v1983 = vsel %vm1982, %v1974, %v1979
        %v1984 = vrsqrt.pop %v1869
        %v1985 = vmul.f32 %v1984, %v1869
        %v1986 = vmul.f32 %v1985, %v1984
        %v1987 = vmul.f32 0.5, %v1986
        %v1988 = vsub.f32 1.5, %v1987
        %v1989 = vmul.f32 %v1984, %v1988
        %vm1990 = vweird.f32 %v1869
        %vm1991 = vweird.f32 %v1984
        %vm1992 = vmor %vm1990, %vm1991
        %v1993 = vsel %vm1992, %v1984, %v1989
        %v1994 = vrsqrt.pop %v1870
        %v1995 = vmul.f32 %v1994, %v1870
        %v1996 = vmul.f32 %v1995, %v1994
        %v1997 = vmul.f32 0.5, %v1996
        %v1998 = vsub.f32 1.5, %v1997
        %v1999 = vmul.f32 %v1994, %v1998
        %vm2000 = vweird.f32 %v1870
        %vm2001 = vweird.f32 %v1994
        %vm2002 = vmor %vm2000, %vm2001
        %v2003 = vsel %vm2002, %v1994, %v1999
        %v2004 = vrsqrt.pop %v1871
        %v2005 = vmul.f32 %v2004, %v1871
        %v2006 = vmul.f32 %v2005, %v2004
        %v2007 = vmul.f32 0.5, %v2006
        %v2008 = vsub.f32 1.5, %v2007
        %v2009 = vmul.f32 %v2004, %v2008
        %vm2010 = vweird.f32 %v1871
        %vm2011 = vweird.f32 %v2004
        %vm2012 = vmor %vm2010, %vm2011
        %v2013 = vsel %vm2012, %v2004, %v2009
        %v2014 = vrsqrt.pop %v1872
        %v2015 = vmul.f32 %v2014, %v1872
        %v2016 = vmul.f32 %v2015, %v2014
        %v2017 = vmul.f32 0.5, %v2016
        %v2018 = vsub.f32 1.5, %v2017
        %v2019 = vmul.f32 %v2014, %v2018
        %vm2020 = vweird.f32 %v1872
        %vm2021 = vweird.f32 %v2014
        %vm2022 = vmor %vm2020, %vm2021
        %v2023 = vsel %vm2022, %v2014, %v2019
        %v2024 = vrsqrt.pop %v1873
        %v2025 = vmul.f32 %v2024, %v1873
        %v2026 = vmul.f32 %v2025, %v2024
        %v2027 = vmul.f32 0.5, %v2026
        %v2028 = vsub.f32 1.5, %v2027
        %v2029 = vmul.f32 %v2024, %v2028
        %vm2030 = vweird.f32 %v1873
        %vm2031 = vweird.f32 %v2024
        %vm2032 = vmor %vm2030, %vm2031
        %v2033 = vsel %vm2032, %v2024, %v2029
        %v2034 = vmul.f32 %v1778, %v1883
        %v2035 = vmul.f32 %v1779, %v1893
        %v2036 = vmul.f32 %v1780, %v1903
        %v2037 = vmul.f32 %v1781, %v1913
        %v2038 = vmul.f32 %v1782, %v1923
        %v2039 = vmul.f32 %v1783, %v1933
        %v2040 = vmul.f32 %v1784, %v1943
        %v2041 = vmul.f32 %v1785, %v1953
        %v2042 = vmul.f32 %v1786, %v1963
        %v2043 = vmul.f32 %v1787, %v1973
        %v2044 = vmul.f32 %v1788, %v1983
        %v2045 = vmul.f32 %v1789, %v1993
        %v2046 = vmul.f32 %v1790, %v2003
        %v2047 = vmul.f32 %v1791, %v2013
        %v2048 = vmul.f32 %v1792, %v2023
        %v2049 = vmul.f32 %v1793, %v2033
        %v2051 = vperm.slane %v1728, 0
        %v2053 = vmul.f32 %v2034, %v2051
        %v2054 = vmul.f32 %v2035, %v2051
        %v2055 = vmul.f32 %v2036, %v2051
        %v2056 = vmul.f32 %v2037, %v2051
        %v2057 = vmul.f32 %v2038, %v2051
        %v2058 = vmul.f32 %v2039, %v2051
        %v2059 = vmul.f32 %v2040, %v2051
        %v2060 = vmul.f32 %v2041, %v2051
        %v2061 = vmul.f32 %v2042, %v2051
        %v2062 = vmul.f32 %v2043, %v2051
        %v2063 = vmul.f32 %v2044, %v2051
        %v2064 = vmul.f32 %v2045, %v2051
        %v2065 = vmul.f32 %v2046, %v2051
        %v2066 = vmul.f32 %v2047, %v2051
        %v2067 = vmul.f32 %v2048, %v2051
        %v2068 = vmul.f32 %v2049, %v2051
        %v2070 = vperm.slane %v1729, 0
        %v2072 = vadd.f32 %v2053, %v2070
        %v2073 = vadd.f32 %v2054, %v2070
        %v2074 = vadd.f32 %v2055, %v2070
        %v2075 = vadd.f32 %v2056, %v2070
        %v2076 = vadd.f32 %v2057, %v2070
        %v2077 = vadd.f32 %v2058, %v2070
        %v2078 = vadd.f32 %v2059, %v2070
        %v2079 = vadd.f32 %v2060, %v2070
        %v2080 = vadd.f32 %v2061, %v2070
        %v2081 = vadd.f32 %v2062, %v2070
        %v2082 = vadd.f32 %v2063, %v2070
        %v2083 = vadd.f32 %v2064, %v2070
        %v2084 = vadd.f32 %v2065, %v2070
        %v2085 = vadd.f32 %v2066, %v2070
        %v2086 = vadd.f32 %v2067, %v2070
        %v2087 = vadd.f32 %v2068, %v2070
        %v2088 = vpack.c.bf16 %v2073, %v2072
        %v2089 = vpack.c.bf16 %v2075, %v2074
        %v2090 = vpack.c.bf16 %v2077, %v2076
        %v2091 = vpack.c.bf16 %v2079, %v2078
        %v2092 = vpack.c.bf16 %v2081, %v2080
        %v2093 = vpack.c.bf16 %v2083, %v2082
        %v2094 = vpack.c.bf16 %v2085, %v2084
        %v2095 = vpack.c.bf16 %v2087, %v2086
        %s2096 = scalar_lea.vmem %s3, 64
        %v2097 = vld [vmem:[%s2096] sm:$0xf]
        %v2098 = vld [vmem:[%s2096 + $0x4] sm:$0xf]
        %v2099 = vld [vmem:[%s2096 + $0x8] sm:$0xf]
        %v2100 = vld [vmem:[%s2096 + $0xc] sm:$0xf]
        %v2101 = vld [vmem:[%s2096 + $0x10] sm:$0xf]
        %v2102 = vld [vmem:[%s2096 + $0x14] sm:$0xf]
        %v2103 = vld [vmem:[%s2096 + $0x18] sm:$0xf]
        %v2104 = vld [vmem:[%s2096 + $0x1c] sm:$0xf]
        %v2105 = vld [vmem:[%s2096 + $0x20] sm:$0xf]
        %v2106 = vld [vmem:[%s2096 + $0x24] sm:$0xf]
        %v2107 = vld [vmem:[%s2096 + $0x28] sm:$0xf]
        %v2108 = vld [vmem:[%s2096 + $0x2c] sm:$0xf]
        %v2109 = vld [vmem:[%s2096 + $0x30] sm:$0xf]
        %v2110 = vld [vmem:[%s2096 + $0x34] sm:$0xf]
        %v2111 = vld [vmem:[%s2096 + $0x38] sm:$0xf]
        %v2112 = vld [vmem:[%s2096 + $0x3c] sm:$0xf]
        %s2113 = scalar_lea.vmem %s4, 1
        %v2114 = vld [vmem:[%s2113] sm:$0x1]
        %v2116 = vperm.slane %v2114, 0
        %v2134 = vunpack.c.l.b16 %v2097
        %v2135 = vunpack.c.l.b16 %v2098
        %v2136 = vunpack.c.l.b16 %v2099
        %v2137 = vunpack.c.l.b16 %v2100
        %v2138 = vunpack.c.l.b16 %v2101
        %v2139 = vunpack.c.l.b16 %v2102
        %v2140 = vunpack.c.l.b16 %v2103
        %v2141 = vunpack.c.l.b16 %v2104
        %v2142 = vunpack.c.l.b16 %v2105
        %v2143 = vunpack.c.l.b16 %v2106
        %v2144 = vunpack.c.l.b16 %v2107
        %v2145 = vunpack.c.l.b16 %v2108
        %v2146 = vunpack.c.l.b16 %v2109
        %v2147 = vunpack.c.l.b16 %v2110
        %v2148 = vunpack.c.l.b16 %v2111
        %v2149 = vunpack.c.l.b16 %v2112
        %v2150 = vpack.c.b16 %v2135, %v2134
        %v2151 = vpack.c.b16 %v2137, %v2136
        %v2152 = vpack.c.b16 %v2139, %v2138
        %v2153 = vpack.c.b16 %v2141, %v2140
        %v2154 = vpack.c.b16 %v2143, %v2142
        %v2155 = vpack.c.b16 %v2145, %v2144
        %v2156 = vpack.c.b16 %v2147, %v2146
        %v2157 = vpack.c.b16 %v2149, %v2148
        %2166 = vmatpush.bf16.msra.mxu0 %v2157
        %2167 = vmatpush.bf16.msra.mxu0 %v2156
        %2168 = vmatpush.bf16.msra.mxu0 %v2155
        %2169 = vmatpush.bf16.msra.mxu0 %v2154
        %2170 = vmatpush.bf16.msra.mxu0 %v2153
        %2171 = vmatpush.bf16.msra.mxu0 %v2152
        %2172 = vmatpush.bf16.msra.mxu0 %v2151
        %2173 = vmatpush.bf16.msra.mxu0 %v2150
        %2174 = vmatmul.bf16.gmra.mxu0 %v2088
        %v2175 = vpop.f32.mrf.mxu0
        %v2176 = vadd.f32 %v2116, %v2175
        %v2177 = vpop.f32.mrf.mxu0
        %v2178 = vadd.f32 %v2116, %v2177
        %2179 = vmatmul.bf16.gmra.mxu0 %v2089
        %v2180 = vpop.f32.mrf.mxu0
        %v2181 = vadd.f32 %v2116, %v2180
        %v2182 = vpop.f32.mrf.mxu0
        %v2183 = vadd.f32 %v2116, %v2182
        %2184 = vmatmul.bf16.gmra.mxu0 %v2090
        %v2185 = vpop.f32.mrf.mxu0
        %v2186 = vadd.f32 %v2116, %v2185
        %v2187 = vpop.f32.mrf.mxu0
        %v2188 = vadd.f32 %v2116, %v2187
        %2189 = vmatmul.bf16.gmra.mxu0 %v2091
        %v2190 = vpop.f32.mrf.mxu0
        %v2191 = vadd.f32 %v2116, %v2190
        %v2192 = vpop.f32.mrf.mxu0
        %v2193 = vadd.f32 %v2116, %v2192
        %2194 = vmatmul.bf16.gmra.mxu0 %v2092
        %v2195 = vpop.f32.mrf.mxu0
        %v2196 = vadd.f32 %v2116, %v2195
        %v2197 = vpop.f32.mrf.mxu0
        %v2198 = vadd.f32 %v2116, %v2197
        %2199 = vmatmul.bf16.gmra.mxu0 %v2093
        %v2200 = vpop.f32.mrf.mxu0
        %v2201 = vadd.f32 %v2116, %v2200
        %v2202 = vpop.f32.mrf.mxu0
        %v2203 = vadd.f32 %v2116, %v2202
        %2204 = vmatmul.bf16.gmra.mxu0 %v2094
        %v2205 = vpop.f32.mrf.mxu0
        %v2206 = vadd.f32 %v2116, %v2205
        %v2207 = vpop.f32.mrf.mxu0
        %v2208 = vadd.f32 %v2116, %v2207
        %2209 = vmatmul.bf16.gmra.mxu0 %v2095
        %v2210 = vpop.f32.mrf.mxu0
        %v2211 = vadd.f32 %v2116, %v2210
        %v2212 = vpop.f32.mrf.mxu0
        %v2213 = vadd.f32 %v2116, %v2212
        %2214 = vdwg.mxu0
        %v2215 = vadd.f32 %v2072, %v2176
        %v2216 = vadd.f32 %v2073, %v2178
        %v2217 = vadd.f32 %v2074, %v2181
        %v2218 = vadd.f32 %v2075, %v2183
        %v2219 = vadd.f32 %v2076, %v2186
        %v2220 = vadd.f32 %v2077, %v2188
        %v2221 = vadd.f32 %v2078, %v2191
        %v2222 = vadd.f32 %v2079, %v2193
        %v2223 = vadd.f32 %v2080, %v2196
        %v2224 = vadd.f32 %v2081, %v2198
        %v2225 = vadd.f32 %v2082, %v2201
        %v2226 = vadd.f32 %v2083, %v2203
        %v2227 = vadd.f32 %v2084, %v2206
        %v2228 = vadd.f32 %v2085, %v2208
        %v2229 = vadd.f32 %v2086, %v2211
        %v2230 = vadd.f32 %v2087, %v2213
        %s2231 = scalar_lea.vmem %s5, 1
        %v2232 = vld [vmem:[%s2231] sm:$0x1]
        %s2233 = scalar_lea.vmem %s6, 1
        %v2234 = vld [vmem:[%s2233] sm:$0x1]
        %2235 = vadd.xlane.f32.xlu0 %v2215
        %v2236 = vpop.xlane.xlu0 %2235
        %2237 = vadd.xlane.f32.xlu0 %v2216
        %v2238 = vpop.xlane.xlu0 %2237
        %2239 = vadd.xlane.f32.xlu0 %v2217
        %v2240 = vpop.xlane.xlu0 %2239
        %2241 = vadd.xlane.f32.xlu0 %v2218
        %v2242 = vpop.xlane.xlu0 %2241
        %2243 = vadd.xlane.f32.xlu0 %v2219
        %v2244 = vpop.xlane.xlu0 %2243
        %2245 = vadd.xlane.f32.xlu0 %v2220
        %v2246 = vpop.xlane.xlu0 %2245
        %2247 = vadd.xlane.f32.xlu0 %v2221
        %v2248 = vpop.xlane.xlu0 %2247
        %2249 = vadd.xlane.f32.xlu0 %v2222
        %v2250 = vpop.xlane.xlu0 %2249
        %2251 = vadd.xlane.f32.xlu0 %v2223
        %v2252 = vpop.xlane.xlu0 %2251
        %2253 = vadd.xlane.f32.xlu0 %v2224
        %v2254 = vpop.xlane.xlu0 %2253
        %2255 = vadd.xlane.f32.xlu0 %v2225
        %v2256 = vpop.xlane.xlu0 %2255
        %2257 = vadd.xlane.f32.xlu0 %v2226
        %v2258 = vpop.xlane.xlu0 %2257
        %2259 = vadd.xlane.f32.xlu0 %v2227
        %v2260 = vpop.xlane.xlu0 %2259
        %2261 = vadd.xlane.f32.xlu0 %v2228
        %v2262 = vpop.xlane.xlu0 %2261
        %2263 = vadd.xlane.f32.xlu0 %v2229
        %v2264 = vpop.xlane.xlu0 %2263
        %2265 = vadd.xlane.f32.xlu0 %v2230
        %v2266 = vpop.xlane.xlu0 %2265
        %v2267 = vmul.f32 %v2236, %v899
        %v2268 = vmul.f32 %v2238, %v899
        %v2269 = vmul.f32 %v2240, %v899
        %v2270 = vmul.f32 %v2242, %v899
        %v2271 = vmul.f32 %v2244, %v899
        %v2272 = vmul.f32 %v2246, %v899
        %v2273 = vmul.f32 %v2248, %v899
        %v2274 = vmul.f32 %v2250, %v899
        %v2275 = vmul.f32 %v2252, %v899
        %v2276 = vmul.f32 %v2254, %v899
        %v2277 = vmul.f32 %v2256, %v899
        %v2278 = vmul.f32 %v2258, %v899
        %v2279 = vmul.f32 %v2260, %v899
        %v2280 = vmul.f32 %v2262, %v899
        %v2281 = vmul.f32 %v2264, %v899
        %v2282 = vmul.f32 %v2266, %v899
        %v2283 = vsub.f32 %v2215, %v2267
        %v2284 = vsub.f32 %v2216, %v2268
        %v2285 = vsub.f32 %v2217, %v2269
        %v2286 = vsub.f32 %v2218, %v2270
        %v2287 = vsub.f32 %v2219, %v2271
        %v2288 = vsub.f32 %v2220, %v2272
        %v2289 = vsub.f32 %v2221, %v2273
        %v2290 = vsub.f32 %v2222, %v2274
        %v2291 = vsub.f32 %v2223, %v2275
        %v2292 = vsub.f32 %v2224, %v2276
        %v2293 = vsub.f32 %v2225, %v2277
        %v2294 = vsub.f32 %v2226, %v2278
        %v2295 = vsub.f32 %v2227, %v2279
        %v2296 = vsub.f32 %v2228, %v2280
        %v2297 = vsub.f32 %v2229, %v2281
        %v2298 = vsub.f32 %v2230, %v2282
        %v2299 = vmul.f32 %v2283, %v2283
        %v2300 = vmul.f32 %v2284, %v2284
        %v2301 = vmul.f32 %v2285, %v2285
        %v2302 = vmul.f32 %v2286, %v2286
        %v2303 = vmul.f32 %v2287, %v2287
        %v2304 = vmul.f32 %v2288, %v2288
        %v2305 = vmul.f32 %v2289, %v2289
        %v2306 = vmul.f32 %v2290, %v2290
        %v2307 = vmul.f32 %v2291, %v2291
        %v2308 = vmul.f32 %v2292, %v2292
        %v2309 = vmul.f32 %v2293, %v2293
        %v2310 = vmul.f32 %v2294, %v2294
        %v2311 = vmul.f32 %v2295, %v2295
        %v2312 = vmul.f32 %v2296, %v2296
        %v2313 = vmul.f32 %v2297, %v2297
        %v2314 = vmul.f32 %v2298, %v2298
        %2315 = vadd.xlane.f32.xlu0 %v2299
        %v2316 = vpop.xlane.xlu0 %2315
        %2317 = vadd.xlane.f32.xlu0 %v2300
        %v2318 = vpop.xlane.xlu0 %2317
        %2319 = vadd.xlane.f32.xlu0 %v2301
        %v2320 = vpop.xlane.xlu0 %2319
        %2321 = vadd.xlane.f32.xlu0 %v2302
        %v2322 = vpop.xlane.xlu0 %2321
        %2323 = vadd.xlane.f32.xlu0 %v2303
        %v2324 = vpop.xlane.xlu0 %2323
        %2325 = vadd.xlane.f32.xlu0 %v2304
        %v2326 = vpop.xlane.xlu0 %2325
        %2327 = vadd.xlane.f32.xlu0 %v2305
        %v2328 = vpop.xlane.xlu0 %2327
        %2329 = vadd.xlane.f32.xlu0 %v2306
        %v2330 = vpop.xlane.xlu0 %2329
        %2331 = vadd.xlane.f32.xlu0 %v2307
        %v2332 = vpop.xlane.xlu0 %2331
        %2333 = vadd.xlane.f32.xlu0 %v2308
        %v2334 = vpop.xlane.xlu0 %2333
        %2335 = vadd.xlane.f32.xlu0 %v2309
        %v2336 = vpop.xlane.xlu0 %2335
        %2337 = vadd.xlane.f32.xlu0 %v2310
        %v2338 = vpop.xlane.xlu0 %2337
        %2339 = vadd.xlane.f32.xlu0 %v2311
        %v2340 = vpop.xlane.xlu0 %2339
        %2341 = vadd.xlane.f32.xlu0 %v2312
        %v2342 = vpop.xlane.xlu0 %2341
        %2343 = vadd.xlane.f32.xlu0 %v2313
        %v2344 = vpop.xlane.xlu0 %2343
        %2345 = vadd.xlane.f32.xlu0 %v2314
        %v2346 = vpop.xlane.xlu0 %2345
        %v2347 = vmul.f32 %v2316, %v899
        %v2348 = vmul.f32 %v2318, %v899
        %v2349 = vmul.f32 %v2320, %v899
        %v2350 = vmul.f32 %v2322, %v899
        %v2351 = vmul.f32 %v2324, %v899
        %v2352 = vmul.f32 %v2326, %v899
        %v2353 = vmul.f32 %v2328, %v899
        %v2354 = vmul.f32 %v2330, %v899
        %v2355 = vmul.f32 %v2332, %v899
        %v2356 = vmul.f32 %v2334, %v899
        %v2357 = vmul.f32 %v2336, %v899
        %v2358 = vmul.f32 %v2338, %v899
        %v2359 = vmul.f32 %v2340, %v899
        %v2360 = vmul.f32 %v2342, %v899
        %v2361 = vmul.f32 %v2344, %v899
        %v2362 = vmul.f32 %v2346, %v899
        %v2363 = vadd.f32 %v2347, 1e-05
        %v2364 = vadd.f32 %v2348, 1e-05
        %v2365 = vadd.f32 %v2349, 1e-05
        %v2366 = vadd.f32 %v2350, 1e-05
        %v2367 = vadd.f32 %v2351, 1e-05
        %v2368 = vadd.f32 %v2352, 1e-05
        %v2369 = vadd.f32 %v2353, 1e-05
        %v2370 = vadd.f32 %v2354, 1e-05
        %v2371 = vadd.f32 %v2355, 1e-05
        %v2372 = vadd.f32 %v2356, 1e-05
        %v2373 = vadd.f32 %v2357, 1e-05
        %v2374 = vadd.f32 %v2358, 1e-05
        %v2375 = vadd.f32 %v2359, 1e-05
        %v2376 = vadd.f32 %v2360, 1e-05
        %v2377 = vadd.f32 %v2361, 1e-05
        %v2378 = vadd.f32 %v2362, 1e-05
        %v2379 = vrsqrt.pop %v2363
        %v2380 = vmul.f32 %v2379, %v2363
        %v2381 = vmul.f32 %v2380, %v2379
        %v2382 = vmul.f32 0.5, %v2381
        %v2383 = vsub.f32 1.5, %v2382
        %v2384 = vmul.f32 %v2379, %v2383
        %vm2385 = vweird.f32 %v2363
        %vm2386 = vweird.f32 %v2379
        %vm2387 = vmor %vm2385, %vm2386
        %v2388 = vsel %vm2387, %v2379, %v2384
        %v2389 = vrsqrt.pop %v2364
        %v2390 = vmul.f32 %v2389, %v2364
        %v2391 = vmul.f32 %v2390, %v2389
        %v2392 = vmul.f32 0.5, %v2391
        %v2393 = vsub.f32 1.5, %v2392
        %v2394 = vmul.f32 %v2389, %v2393
        %vm2395 = vweird.f32 %v2364
        %vm2396 = vweird.f32 %v2389
        %vm2397 = vmor %vm2395, %vm2396
        %v2398 = vsel %vm2397, %v2389, %v2394
        %v2399 = vrsqrt.pop %v2365
        %v2400 = vmul.f32 %v2399, %v2365
        %v2401 = vmul.f32 %v2400, %v2399
        %v2402 = vmul.f32 0.5, %v2401
        %v2403 = vsub.f32 1.5, %v2402
        %v2404 = vmul.f32 %v2399, %v2403
        %vm2405 = vweird.f32 %v2365
        %vm2406 = vweird.f32 %v2399
        %vm2407 = vmor %vm2405, %vm2406
        %v2408 = vsel %vm2407, %v2399, %v2404
        %v2409 = vrsqrt.pop %v2366
        %v2410 = vmul.f32 %v2409, %v2366
        %v2411 = vmul.f32 %v2410, %v2409
        %v2412 = vmul.f32 0.5, %v2411
        %v2413 = vsub.f32 1.5, %v2412
        %v2414 = vmul.f32 %v2409, %v2413
        %vm2415 = vweird.f32 %v2366
        %vm2416 = vweird.f32 %v2409
        %vm2417 = vmor %vm2415, %vm2416
        %v2418 = vsel %vm2417, %v2409, %v2414
        %v2419 = vrsqrt.pop %v2367
        %v2420 = vmul.f32 %v2419, %v2367
        %v2421 = vmul.f32 %v2420, %v2419
        %v2422 = vmul.f32 0.5, %v2421
        %v2423 = vsub.f32 1.5, %v2422
        %v2424 = vmul.f32 %v2419, %v2423
        %vm2425 = vweird.f32 %v2367
        %vm2426 = vweird.f32 %v2419
        %vm2427 = vmor %vm2425, %vm2426
        %v2428 = vsel %vm2427, %v2419, %v2424
        %v2429 = vrsqrt.pop %v2368
        %v2430 = vmul.f32 %v2429, %v2368
        %v2431 = vmul.f32 %v2430, %v2429
        %v2432 = vmul.f32 0.5, %v2431
        %v2433 = vsub.f32 1.5, %v2432
        %v2434 = vmul.f32 %v2429, %v2433
        %vm2435 = vweird.f32 %v2368
        %vm2436 = vweird.f32 %v2429
        %vm2437 = vmor %vm2435, %vm2436
        %v2438 = vsel %vm2437, %v2429, %v2434
        %v2439 = vrsqrt.pop %v2369
        %v2440 = vmul.f32 %v2439, %v2369
        %v2441 = vmul.f32 %v2440, %v2439
        %v2442 = vmul.f32 0.5, %v2441
        %v2443 = vsub.f32 1.5, %v2442
        %v2444 = vmul.f32 %v2439, %v2443
        %vm2445 = vweird.f32 %v2369
        %vm2446 = vweird.f32 %v2439
        %vm2447 = vmor %vm2445, %vm2446
        %v2448 = vsel %vm2447, %v2439, %v2444
        %v2449 = vrsqrt.pop %v2370
        %v2450 = vmul.f32 %v2449, %v2370
        %v2451 = vmul.f32 %v2450, %v2449
        %v2452 = vmul.f32 0.5, %v2451
        %v2453 = vsub.f32 1.5, %v2452
        %v2454 = vmul.f32 %v2449, %v2453
        %vm2455 = vweird.f32 %v2370
        %vm2456 = vweird.f32 %v2449
        %vm2457 = vmor %vm2455, %vm2456
        %v2458 = vsel %vm2457, %v2449, %v2454
        %v2459 = vrsqrt.pop %v2371
        %v2460 = vmul.f32 %v2459, %v2371
        %v2461 = vmul.f32 %v2460, %v2459
        %v2462 = vmul.f32 0.5, %v2461
        %v2463 = vsub.f32 1.5, %v2462
        %v2464 = vmul.f32 %v2459, %v2463
        %vm2465 = vweird.f32 %v2371
        %vm2466 = vweird.f32 %v2459
        %vm2467 = vmor %vm2465, %vm2466
        %v2468 = vsel %vm2467, %v2459, %v2464
        %v2469 = vrsqrt.pop %v2372
        %v2470 = vmul.f32 %v2469, %v2372
        %v2471 = vmul.f32 %v2470, %v2469
        %v2472 = vmul.f32 0.5, %v2471
        %v2473 = vsub.f32 1.5, %v2472
        %v2474 = vmul.f32 %v2469, %v2473
        %vm2475 = vweird.f32 %v2372
        %vm2476 = vweird.f32 %v2469
        %vm2477 = vmor %vm2475, %vm2476
        %v2478 = vsel %vm2477, %v2469, %v2474
        %v2479 = vrsqrt.pop %v2373
        %v2480 = vmul.f32 %v2479, %v2373
        %v2481 = vmul.f32 %v2480, %v2479
        %v2482 = vmul.f32 0.5, %v2481
        %v2483 = vsub.f32 1.5, %v2482
        %v2484 = vmul.f32 %v2479, %v2483
        %vm2485 = vweird.f32 %v2373
        %vm2486 = vweird.f32 %v2479
        %vm2487 = vmor %vm2485, %vm2486
        %v2488 = vsel %vm2487, %v2479, %v2484
        %v2489 = vrsqrt.pop %v2374
        %v2490 = vmul.f32 %v2489, %v2374
        %v2491 = vmul.f32 %v2490, %v2489
        %v2492 = vmul.f32 0.5, %v2491
        %v2493 = vsub.f32 1.5, %v2492
        %v2494 = vmul.f32 %v2489, %v2493
        %vm2495 = vweird.f32 %v2374
        %vm2496 = vweird.f32 %v2489
        %vm2497 = vmor %vm2495, %vm2496
        %v2498 = vsel %vm2497, %v2489, %v2494
        %v2499 = vrsqrt.pop %v2375
        %v2500 = vmul.f32 %v2499, %v2375
        %v2501 = vmul.f32 %v2500, %v2499
        %v2502 = vmul.f32 0.5, %v2501
        %v2503 = vsub.f32 1.5, %v2502
        %v2504 = vmul.f32 %v2499, %v2503
        %vm2505 = vweird.f32 %v2375
        %vm2506 = vweird.f32 %v2499
        %vm2507 = vmor %vm2505, %vm2506
        %v2508 = vsel %vm2507, %v2499, %v2504
        %v2509 = vrsqrt.pop %v2376
        %v2510 = vmul.f32 %v2509, %v2376
        %v2511 = vmul.f32 %v2510, %v2509
        %v2512 = vmul.f32 0.5, %v2511
        %v2513 = vsub.f32 1.5, %v2512
        %v2514 = vmul.f32 %v2509, %v2513
        %vm2515 = vweird.f32 %v2376
        %vm2516 = vweird.f32 %v2509
        %vm2517 = vmor %vm2515, %vm2516
        %v2518 = vsel %vm2517, %v2509, %v2514
        %v2519 = vrsqrt.pop %v2377
        %v2520 = vmul.f32 %v2519, %v2377
        %v2521 = vmul.f32 %v2520, %v2519
        %v2522 = vmul.f32 0.5, %v2521
        %v2523 = vsub.f32 1.5, %v2522
        %v2524 = vmul.f32 %v2519, %v2523
        %vm2525 = vweird.f32 %v2377
        %vm2526 = vweird.f32 %v2519
        %vm2527 = vmor %vm2525, %vm2526
        %v2528 = vsel %vm2527, %v2519, %v2524
        %v2529 = vrsqrt.pop %v2378
        %v2530 = vmul.f32 %v2529, %v2378
        %v2531 = vmul.f32 %v2530, %v2529
        %v2532 = vmul.f32 0.5, %v2531
        %v2533 = vsub.f32 1.5, %v2532
        %v2534 = vmul.f32 %v2529, %v2533
        %vm2535 = vweird.f32 %v2378
        %vm2536 = vweird.f32 %v2529
        %vm2537 = vmor %vm2535, %vm2536
        %v2538 = vsel %vm2537, %v2529, %v2534
        %v2539 = vmul.f32 %v2283, %v2388
        %v2540 = vmul.f32 %v2284, %v2398
        %v2541 = vmul.f32 %v2285, %v2408
        %v2542 = vmul.f32 %v2286, %v2418
        %v2543 = vmul.f32 %v2287, %v2428
        %v2544 = vmul.f32 %v2288, %v2438
        %v2545 = vmul.f32 %v2289, %v2448
        %v2546 = vmul.f32 %v2290, %v2458
        %v2547 = vmul.f32 %v2291, %v2468
        %v2548 = vmul.f32 %v2292, %v2478
        %v2549 = vmul.f32 %v2293, %v2488
        %v2550 = vmul.f32 %v2294, %v2498
        %v2551 = vmul.f32 %v2295, %v2508
        %v2552 = vmul.f32 %v2296, %v2518
        %v2553 = vmul.f32 %v2297, %v2528
        %v2554 = vmul.f32 %v2298, %v2538
        %v2556 = vperm.slane %v2232, 0
        %v2558 = vmul.f32 %v2539, %v2556
        %v2559 = vmul.f32 %v2540, %v2556
        %v2560 = vmul.f32 %v2541, %v2556
        %v2561 = vmul.f32 %v2542, %v2556
        %v2562 = vmul.f32 %v2543, %v2556
        %v2563 = vmul.f32 %v2544, %v2556
        %v2564 = vmul.f32 %v2545, %v2556
        %v2565 = vmul.f32 %v2546, %v2556
        %v2566 = vmul.f32 %v2547, %v2556
        %v2567 = vmul.f32 %v2548, %v2556
        %v2568 = vmul.f32 %v2549, %v2556
        %v2569 = vmul.f32 %v2550, %v2556
        %v2570 = vmul.f32 %v2551, %v2556
        %v2571 = vmul.f32 %v2552, %v2556
        %v2572 = vmul.f32 %v2553, %v2556
        %v2573 = vmul.f32 %v2554, %v2556
        %v2575 = vperm.slane %v2234, 0
        %v2577 = vadd.f32 %v2558, %v2575
        %v2578 = vadd.f32 %v2559, %v2575
        %v2579 = vadd.f32 %v2560, %v2575
        %v2580 = vadd.f32 %v2561, %v2575
        %v2581 = vadd.f32 %v2562, %v2575
        %v2582 = vadd.f32 %v2563, %v2575
        %v2583 = vadd.f32 %v2564, %v2575
        %v2584 = vadd.f32 %v2565, %v2575
        %v2585 = vadd.f32 %v2566, %v2575
        %v2586 = vadd.f32 %v2567, %v2575
        %v2587 = vadd.f32 %v2568, %v2575
        %v2588 = vadd.f32 %v2569, %v2575
        %v2589 = vadd.f32 %v2570, %v2575
        %v2590 = vadd.f32 %v2571, %v2575
        %v2591 = vadd.f32 %v2572, %v2575
        %v2592 = vadd.f32 %v2573, %v2575
        %v2593 = vpack.c.bf16 %v2578, %v2577
        %v2594 = vpack.c.bf16 %v2580, %v2579
        %v2595 = vpack.c.bf16 %v2582, %v2581
        %v2596 = vpack.c.bf16 %v2584, %v2583
        %v2597 = vpack.c.bf16 %v2586, %v2585
        %v2598 = vpack.c.bf16 %v2588, %v2587
        %v2599 = vpack.c.bf16 %v2590, %v2589
        %v2600 = vpack.c.bf16 %v2592, %v2591
        %s2601 = scalar_lea.vmem %s7, 128
        %v2602 = vld [vmem:[%s2601] sm:$0xff]
        %v2603 = vld [vmem:[%s2601 + $0x8] sm:$0xff]
        %v2604 = vld [vmem:[%s2601 + $0x10] sm:$0xff]
        %v2605 = vld [vmem:[%s2601 + $0x18] sm:$0xff]
        %v2606 = vld [vmem:[%s2601 + $0x20] sm:$0xff]
        %v2607 = vld [vmem:[%s2601 + $0x28] sm:$0xff]
        %v2608 = vld [vmem:[%s2601 + $0x30] sm:$0xff]
        %v2609 = vld [vmem:[%s2601 + $0x38] sm:$0xff]
        %v2610 = vld [vmem:[%s2601 + $0x40] sm:$0xff]
        %v2611 = vld [vmem:[%s2601 + $0x48] sm:$0xff]
        %v2612 = vld [vmem:[%s2601 + $0x50] sm:$0xff]
        %v2613 = vld [vmem:[%s2601 + $0x58] sm:$0xff]
        %v2614 = vld [vmem:[%s2601 + $0x60] sm:$0xff]
        %v2615 = vld [vmem:[%s2601 + $0x68] sm:$0xff]
        %v2616 = vld [vmem:[%s2601 + $0x70] sm:$0xff]
        %v2617 = vld [vmem:[%s2601 + $0x78] sm:$0xff]
        %s2618 = scalar_lea.vmem %s8, 2
        %v2619 = vld [vmem:[%s2618] sm:$0x3]
        %v2621 = vperm.slane %v2619, 0
        %v2622 = vperm.slane %v2619, 1
        %v2641 = vunpack.c.l.b16 %v2602
        %v2642 = vunpack.c.h.b16 %v2602
        %v2643 = vunpack.c.l.b16 %v2603
        %v2644 = vunpack.c.h.b16 %v2603
        %v2645 = vunpack.c.l.b16 %v2604
        %v2646 = vunpack.c.h.b16 %v2604
        %v2647 = vunpack.c.l.b16 %v2605
        %v2648 = vunpack.c.h.b16 %v2605
        %v2649 = vunpack.c.l.b16 %v2606
        %v2650 = vunpack.c.h.b16 %v2606
        %v2651 = vunpack.c.l.b16 %v2607
        %v2652 = vunpack.c.h.b16 %v2607
        %v2653 = vunpack.c.l.b16 %v2608
        %v2654 = vunpack.c.h.b16 %v2608
        %v2655 = vunpack.c.l.b16 %v2609
        %v2656 = vunpack.c.h.b16 %v2609
        %v2657 = vunpack.c.l.b16 %v2610
        %v2658 = vunpack.c.h.b16 %v2610
        %v2659 = vunpack.c.l.b16 %v2611
        %v2660 = vunpack.c.h.b16 %v2611
        %v2661 = vunpack.c.l.b16 %v2612
        %v2662 = vunpack.c.h.b16 %v2612
        %v2663 = vunpack.c.l.b16 %v2613
        %v2664 = vunpack.c.h.b16 %v2613
        %v2665 = vunpack.c.l.b16 %v2614
        %v2666 = vunpack.c.h.b16 %v2614
        %v2667 = vunpack.c.l.b16 %v2615
        %v2668 = vunpack.c.h.b16 %v2615
        %v2669 = vunpack.c.l.b16 %v2616
        %v2670 = vunpack.c.h.b16 %v2616
        %v2671 = vunpack.c.l.b16 %v2617
        %v2672 = vunpack.c.h.b16 %v2617
        %v2673 = vpack.c.b16 %v2643, %v2641
        %v2674 = vpack.c.b16 %v2644, %v2642
        %v2675 = vpack.c.b16 %v2647, %v2645
        %v2676 = vpack.c.b16 %v2648, %v2646
        %v2677 = vpack.c.b16 %v2651, %v2649
        %v2678 = vpack.c.b16 %v2652, %v2650
        %v2679 = vpack.c.b16 %v2655, %v2653
        %v2680 = vpack.c.b16 %v2656, %v2654
        %v2681 = vpack.c.b16 %v2659, %v2657
        %v2682 = vpack.c.b16 %v2660, %v2658
        %v2683 = vpack.c.b16 %v2663, %v2661
        %v2684 = vpack.c.b16 %v2664, %v2662
        %v2685 = vpack.c.b16 %v2667, %v2665
        %v2686 = vpack.c.b16 %v2668, %v2666
        %v2687 = vpack.c.b16 %v2671, %v2669
        %v2688 = vpack.c.b16 %v2672, %v2670
        %2705 = vmatpush.bf16.msra.mxu0 %v2687
        %2706 = vmatpush.bf16.msra.mxu0 %v2685
        %2707 = vmatpush.bf16.msra.mxu0 %v2683
        %2708 = vmatpush.bf16.msra.mxu0 %v2681
        %2709 = vmatpush.bf16.msra.mxu0 %v2679
        %2710 = vmatpush.bf16.msra.mxu0 %v2677
        %2711 = vmatpush.bf16.msra.mxu0 %v2675
        %2712 = vmatpush.bf16.msra.mxu0 %v2673
        %2713 = vmatmul.bf16.gmra.mxu0 %v2593
        %v2714 = vpop.f32.mrf.mxu0
        %v2715 = vadd.f32 %v2621, %v2714
        %v2716 = vpop.f32.mrf.mxu0
        %v2717 = vadd.f32 %v2621, %v2716
        %2718 = vmatmul.bf16.gmra.mxu0 %v2594
        %v2719 = vpop.f32.mrf.mxu0
        %v2720 = vadd.f32 %v2621, %v2719
        %v2721 = vpop.f32.mrf.mxu0
        %v2722 = vadd.f32 %v2621, %v2721
        %2723 = vmatmul.bf16.gmra.mxu0 %v2595
        %v2724 = vpop.f32.mrf.mxu0
        %v2725 = vadd.f32 %v2621, %v2724
        %v2726 = vpop.f32.mrf.mxu0
        %v2727 = vadd.f32 %v2621, %v2726
        %2728 = vmatmul.bf16.gmra.mxu0 %v2596
        %v2729 = vpop.f32.mrf.mxu0
        %v2730 = vadd.f32 %v2621, %v2729
        %v2731 = vpop.f32.mrf.mxu0
        %v2732 = vadd.f32 %v2621, %v2731
        %2733 = vmatmul.bf16.gmra.mxu0 %v2597
        %v2734 = vpop.f32.mrf.mxu0
        %v2735 = vadd.f32 %v2621, %v2734
        %v2736 = vpop.f32.mrf.mxu0
        %v2737 = vadd.f32 %v2621, %v2736
        %2738 = vmatmul.bf16.gmra.mxu0 %v2598
        %v2739 = vpop.f32.mrf.mxu0
        %v2740 = vadd.f32 %v2621, %v2739
        %v2741 = vpop.f32.mrf.mxu0
        %v2742 = vadd.f32 %v2621, %v2741
        %2743 = vmatmul.bf16.gmra.mxu0 %v2599
        %v2744 = vpop.f32.mrf.mxu0
        %v2745 = vadd.f32 %v2621, %v2744
        %v2746 = vpop.f32.mrf.mxu0
        %v2747 = vadd.f32 %v2621, %v2746
        %2748 = vmatmul.bf16.gmra.mxu0 %v2600
        %v2749 = vpop.f32.mrf.mxu0
        %v2750 = vadd.f32 %v2621, %v2749
        %v2751 = vpop.f32.mrf.mxu0
        %v2752 = vadd.f32 %v2621, %v2751
        %2753 = vdwg.mxu0
        %2754 = vmatpush.bf16.msra.mxu0 %v2688
        %2755 = vmatpush.bf16.msra.mxu0 %v2686
        %2756 = vmatpush.bf16.msra.mxu0 %v2684
        %2757 = vmatpush.bf16.msra.mxu0 %v2682
        %2758 = vmatpush.bf16.msra.mxu0 %v2680
        %2759 = vmatpush.bf16.msra.mxu0 %v2678
        %2760 = vmatpush.bf16.msra.mxu0 %v2676
        %2761 = vmatpush.bf16.msra.mxu0 %v2674
        %2762 = vmatmul.bf16.gmra.mxu0 %v2593
        %v2763 = vpop.f32.mrf.mxu0
        %v2764 = vadd.f32 %v2622, %v2763
        %v2765 = vpop.f32.mrf.mxu0
        %v2766 = vadd.f32 %v2622, %v2765
        %2767 = vmatmul.bf16.gmra.mxu0 %v2594
        %v2768 = vpop.f32.mrf.mxu0
        %v2769 = vadd.f32 %v2622, %v2768
        %v2770 = vpop.f32.mrf.mxu0
        %v2771 = vadd.f32 %v2622, %v2770
        %2772 = vmatmul.bf16.gmra.mxu0 %v2595
        %v2773 = vpop.f32.mrf.mxu0
        %v2774 = vadd.f32 %v2622, %v2773
        %v2775 = vpop.f32.mrf.mxu0
        %v2776 = vadd.f32 %v2622, %v2775
        %2777 = vmatmul.bf16.gmra.mxu0 %v2596
        %v2778 = vpop.f32.mrf.mxu0
        %v2779 = vadd.f32 %v2622, %v2778
        %v2780 = vpop.f32.mrf.mxu0
        %v2781 = vadd.f32 %v2622, %v2780
        %2782 = vmatmul.bf16.gmra.mxu0 %v2597
        %v2783 = vpop.f32.mrf.mxu0
        %v2784 = vadd.f32 %v2622, %v2783
        %v2785 = vpop.f32.mrf.mxu0
        %v2786 = vadd.f32 %v2622, %v2785
        %2787 = vmatmul.bf16.gmra.mxu0 %v2598
        %v2788 = vpop.f32.mrf.mxu0
        %v2789 = vadd.f32 %v2622, %v2788
        %v2790 = vpop.f32.mrf.mxu0
        %v2791 = vadd.f32 %v2622, %v2790
        %2792 = vmatmul.bf16.gmra.mxu0 %v2599
        %v2793 = vpop.f32.mrf.mxu0
        %v2794 = vadd.f32 %v2622, %v2793
        %v2795 = vpop.f32.mrf.mxu0
        %v2796 = vadd.f32 %v2622, %v2795
        %2797 = vmatmul.bf16.gmra.mxu0 %v2600
        %v2798 = vpop.f32.mrf.mxu0
        %v2799 = vadd.f32 %v2622, %v2798
        %v2800 = vpop.f32.mrf.mxu0
        %v2801 = vadd.f32 %v2622, %v2800
        %2802 = vdwg.mxu0
        %v2803 = vmax.f32 %v2715, 0.0
        %v2804 = vmax.f32 %v2764, 0.0
        %v2805 = vmax.f32 %v2717, 0.0
        %v2806 = vmax.f32 %v2766, 0.0
        %v2807 = vmax.f32 %v2720, 0.0
        %v2808 = vmax.f32 %v2769, 0.0
        %v2809 = vmax.f32 %v2722, 0.0
        %v2810 = vmax.f32 %v2771, 0.0
        %v2811 = vmax.f32 %v2725, 0.0
        %v2812 = vmax.f32 %v2774, 0.0
        %v2813 = vmax.f32 %v2727, 0.0
        %v2814 = vmax.f32 %v2776, 0.0
        %v2815 = vmax.f32 %v2730, 0.0
        %v2816 = vmax.f32 %v2779, 0.0
        %v2817 = vmax.f32 %v2732, 0.0
        %v2818 = vmax.f32 %v2781, 0.0
        %v2819 = vmax.f32 %v2735, 0.0
        %v2820 = vmax.f32 %v2784, 0.0
        %v2821 = vmax.f32 %v2737, 0.0
        %v2822 = vmax.f32 %v2786, 0.0
        %v2823 = vmax.f32 %v2740, 0.0
        %v2824 = vmax.f32 %v2789, 0.0
        %v2825 = vmax.f32 %v2742, 0.0
        %v2826 = vmax.f32 %v2791, 0.0
        %v2827 = vmax.f32 %v2745, 0.0
        %v2828 = vmax.f32 %v2794, 0.0
        %v2829 = vmax.f32 %v2747, 0.0
        %v2830 = vmax.f32 %v2796, 0.0
        %v2831 = vmax.f32 %v2750, 0.0
        %v2832 = vmax.f32 %v2799, 0.0
        %v2833 = vmax.f32 %v2752, 0.0
        %v2834 = vmax.f32 %v2801, 0.0
        %v2835 = vpack.c.bf16 %v2805, %v2803
        %v2836 = vpack.c.bf16 %v2806, %v2804
        %v2837 = vpack.c.bf16 %v2809, %v2807
        %v2838 = vpack.c.bf16 %v2810, %v2808
        %v2839 = vpack.c.bf16 %v2813, %v2811
        %v2840 = vpack.c.bf16 %v2814, %v2812
        %v2841 = vpack.c.bf16 %v2817, %v2815
        %v2842 = vpack.c.bf16 %v2818, %v2816
        %v2843 = vpack.c.bf16 %v2821, %v2819
        %v2844 = vpack.c.bf16 %v2822, %v2820
        %v2845 = vpack.c.bf16 %v2825, %v2823
        %v2846 = vpack.c.bf16 %v2826, %v2824
        %v2847 = vpack.c.bf16 %v2829, %v2827
        %v2848 = vpack.c.bf16 %v2830, %v2828
        %v2849 = vpack.c.bf16 %v2833, %v2831
        %v2850 = vpack.c.bf16 %v2834, %v2832
        %s2851 = scalar_lea.vmem %s9, 128
        %v2852 = vld [vmem:[%s2851] sm:$0xf]
        %v2853 = vld [vmem:[%s2851 + $0x4] sm:$0xf]
        %v2854 = vld [vmem:[%s2851 + $0x8] sm:$0xf]
        %v2855 = vld [vmem:[%s2851 + $0xc] sm:$0xf]
        %v2856 = vld [vmem:[%s2851 + $0x10] sm:$0xf]
        %v2857 = vld [vmem:[%s2851 + $0x14] sm:$0xf]
        %v2858 = vld [vmem:[%s2851 + $0x18] sm:$0xf]
        %v2859 = vld [vmem:[%s2851 + $0x1c] sm:$0xf]
        %v2860 = vld [vmem:[%s2851 + $0x20] sm:$0xf]
        %v2861 = vld [vmem:[%s2851 + $0x24] sm:$0xf]
        %v2862 = vld [vmem:[%s2851 + $0x28] sm:$0xf]
        %v2863 = vld [vmem:[%s2851 + $0x2c] sm:$0xf]
        %v2864 = vld [vmem:[%s2851 + $0x30] sm:$0xf]
        %v2865 = vld [vmem:[%s2851 + $0x34] sm:$0xf]
        %v2866 = vld [vmem:[%s2851 + $0x38] sm:$0xf]
        %v2867 = vld [vmem:[%s2851 + $0x3c] sm:$0xf]
        %v2868 = vld [vmem:[%s2851 + $0x40] sm:$0xf]
        %v2869 = vld [vmem:[%s2851 + $0x44] sm:$0xf]
        %v2870 = vld [vmem:[%s2851 + $0x48] sm:$0xf]
        %v2871 = vld [vmem:[%s2851 + $0x4c] sm:$0xf]
        %v2872 = vld [vmem:[%s2851 + $0x50] sm:$0xf]
        %v2873 = vld [vmem:[%s2851 + $0x54] sm:$0xf]
        %v2874 = vld [vmem:[%s2851 + $0x58] sm:$0xf]
        %v2875 = vld [vmem:[%s2851 + $0x5c] sm:$0xf]
        %v2876 = vld [vmem:[%s2851 + $0x60] sm:$0xf]
        %v2877 = vld [vmem:[%s2851 + $0x64] sm:$0xf]
        %v2878 = vld [vmem:[%s2851 + $0x68] sm:$0xf]
        %v2879 = vld [vmem:[%s2851 + $0x6c] sm:$0xf]
        %v2880 = vld [vmem:[%s2851 + $0x70] sm:$0xf]
        %v2881 = vld [vmem:[%s2851 + $0x74] sm:$0xf]
        %v2882 = vld [vmem:[%s2851 + $0x78] sm:$0xf]
        %v2883 = vld [vmem:[%s2851 + $0x7c] sm:$0xf]
        %s2884 = scalar_lea.vmem %s10, 1
        %v2885 = vld [vmem:[%s2884] sm:$0x1]
        %v2887 = vperm.slane %v2885, 0
        %v2921 = vunpack.c.l.b16 %v2852
        %v2922 = vunpack.c.l.b16 %v2853
        %v2923 = vunpack.c.l.b16 %v2854
        %v2924 = vunpack.c.l.b16 %v2855
        %v2925 = vunpack.c.l.b16 %v2856
        %v2926 = vunpack.c.l.b16 %v2857
        %v2927 = vunpack.c.l.b16 %v2858
        %v2928 = vunpack.c.l.b16 %v2859
        %v2929 = vunpack.c.l.b16 %v2860
        %v2930 = vunpack.c.l.b16 %v2861
        %v2931 = vunpack.c.l.b16 %v2862
        %v2932 = vunpack.c.l.b16 %v2863
        %v2933 = vunpack.c.l.b16 %v2864
        %v2934 = vunpack.c.l.b16 %v2865
        %v2935 = vunpack.c.l.b16 %v2866
        %v2936 = vunpack.c.l.b16 %v2867
        %v2937 = vunpack.c.l.b16 %v2868
        %v2938 = vunpack.c.l.b16 %v2869
        %v2939 = vunpack.c.l.b16 %v2870
        %v2940 = vunpack.c.l.b16 %v2871
        %v2941 = vunpack.c.l.b16 %v2872
        %v2942 = vunpack.c.l.b16 %v2873
        %v2943 = vunpack.c.l.b16 %v2874
        %v2944 = vunpack.c.l.b16 %v2875
        %v2945 = vunpack.c.l.b16 %v2876
        %v2946 = vunpack.c.l.b16 %v2877
        %v2947 = vunpack.c.l.b16 %v2878
        %v2948 = vunpack.c.l.b16 %v2879
        %v2949 = vunpack.c.l.b16 %v2880
        %v2950 = vunpack.c.l.b16 %v2881
        %v2951 = vunpack.c.l.b16 %v2882
        %v2952 = vunpack.c.l.b16 %v2883
        %v2953 = vpack.c.b16 %v2922, %v2921
        %v2954 = vpack.c.b16 %v2924, %v2923
        %v2955 = vpack.c.b16 %v2926, %v2925
        %v2956 = vpack.c.b16 %v2928, %v2927
        %v2957 = vpack.c.b16 %v2930, %v2929
        %v2958 = vpack.c.b16 %v2932, %v2931
        %v2959 = vpack.c.b16 %v2934, %v2933
        %v2960 = vpack.c.b16 %v2936, %v2935
        %v2961 = vpack.c.b16 %v2938, %v2937
        %v2962 = vpack.c.b16 %v2940, %v2939
        %v2963 = vpack.c.b16 %v2942, %v2941
        %v2964 = vpack.c.b16 %v2944, %v2943
        %v2965 = vpack.c.b16 %v2946, %v2945
        %v2966 = vpack.c.b16 %v2948, %v2947
        %v2967 = vpack.c.b16 %v2950, %v2949
        %v2968 = vpack.c.b16 %v2952, %v2951
        %2985 = vmatpush.bf16.msra.mxu0 %v2960
        %2986 = vmatpush.bf16.msra.mxu0 %v2959
        %2987 = vmatpush.bf16.msra.mxu0 %v2958
        %2988 = vmatpush.bf16.msra.mxu0 %v2957
        %2989 = vmatpush.bf16.msra.mxu0 %v2956
        %2990 = vmatpush.bf16.msra.mxu0 %v2955
        %2991 = vmatpush.bf16.msra.mxu0 %v2954
        %2992 = vmatpush.bf16.msra.mxu0 %v2953
        %2993 = vmatmul.bf16.gmra.mxu0 %v2835
        %v2994 = vpop.f32.mrf.mxu0
        %v2995 = vadd.f32 %v2887, %v2994
        %v2996 = vpop.f32.mrf.mxu0
        %v2997 = vadd.f32 %v2887, %v2996
        %2998 = vmatmul.bf16.gmra.mxu0 %v2837
        %v2999 = vpop.f32.mrf.mxu0
        %v3000 = vadd.f32 %v2887, %v2999
        %v3001 = vpop.f32.mrf.mxu0
        %v3002 = vadd.f32 %v2887, %v3001
        %3003 = vmatmul.bf16.gmra.mxu0 %v2839
        %v3004 = vpop.f32.mrf.mxu0
        %v3005 = vadd.f32 %v2887, %v3004
        %v3006 = vpop.f32.mrf.mxu0
        %v3007 = vadd.f32 %v2887, %v3006
        %3008 = vmatmul.bf16.gmra.mxu0 %v2841
        %v3009 = vpop.f32.mrf.mxu0
        %v3010 = vadd.f32 %v2887, %v3009
        %v3011 = vpop.f32.mrf.mxu0
        %v3012 = vadd.f32 %v2887, %v3011
        %3013 = vmatmul.bf16.gmra.mxu0 %v2843
        %v3014 = vpop.f32.mrf.mxu0
        %v3015 = vadd.f32 %v2887, %v3014
        %v3016 = vpop.f32.mrf.mxu0
        %v3017 = vadd.f32 %v2887, %v3016
        %3018 = vmatmul.bf16.gmra.mxu0 %v2845
        %v3019 = vpop.f32.mrf.mxu0
        %v3020 = vadd.f32 %v2887, %v3019
        %v3021 = vpop.f32.mrf.mxu0
        %v3022 = vadd.f32 %v2887, %v3021
        %3023 = vmatmul.bf16.gmra.mxu0 %v2847
        %v3024 = vpop.f32.mrf.mxu0
        %v3025 = vadd.f32 %v2887, %v3024
        %v3026 = vpop.f32.mrf.mxu0
        %v3027 = vadd.f32 %v2887, %v3026
        %3028 = vmatmul.bf16.gmra.mxu0 %v2849
        %v3029 = vpop.f32.mrf.mxu0
        %v3030 = vadd.f32 %v2887, %v3029
        %v3031 = vpop.f32.mrf.mxu0
        %v3032 = vadd.f32 %v2887, %v3031
        %3033 = vdwg.mxu0
        %3034 = vmatpush.bf16.msra.mxu0 %v2968
        %3035 = vmatpush.bf16.msra.mxu0 %v2967
        %3036 = vmatpush.bf16.msra.mxu0 %v2966
        %3037 = vmatpush.bf16.msra.mxu0 %v2965
        %3038 = vmatpush.bf16.msra.mxu0 %v2964
        %3039 = vmatpush.bf16.msra.mxu0 %v2963
        %3040 = vmatpush.bf16.msra.mxu0 %v2962
        %3041 = vmatpush.bf16.msra.mxu0 %v2961
        %3042 = vmatmul.bf16.gmra.mxu0 %v2836
        %v3043 = vpop.f32.mrf.mxu0
        %v3044 = vadd.f32 %v2995, %v3043
        %v3045 = vpop.f32.mrf.mxu0
        %v3046 = vadd.f32 %v2997, %v3045
        %3047 = vmatmul.bf16.gmra.mxu0 %v2838
        %v3048 = vpop.f32.mrf.mxu0
        %v3049 = vadd.f32 %v3000, %v3048
        %v3050 = vpop.f32.mrf.mxu0
        %v3051 = vadd.f32 %v3002, %v3050
        %3052 = vmatmul.bf16.gmra.mxu0 %v2840
        %v3053 = vpop.f32.mrf.mxu0
        %v3054 = vadd.f32 %v3005, %v3053
        %v3055 = vpop.f32.mrf.mxu0
        %v3056 = vadd.f32 %v3007, %v3055
        %3057 = vmatmul.bf16.gmra.mxu0 %v2842
        %v3058 = vpop.f32.mrf.mxu0
        %v3059 = vadd.f32 %v3010, %v3058
        %v3060 = vpop.f32.mrf.mxu0
        %v3061 = vadd.f32 %v3012, %v3060
        %3062 = vmatmul.bf16.gmra.mxu0 %v2844
        %v3063 = vpop.f32.mrf.mxu0
        %v3064 = vadd.f32 %v3015, %v3063
        %v3065 = vpop.f32.mrf.mxu0
        %v3066 = vadd.f32 %v3017, %v3065
        %3067 = vmatmul.bf16.gmra.mxu0 %v2846
        %v3068 = vpop.f32.mrf.mxu0
        %v3069 = vadd.f32 %v3020, %v3068
        %v3070 = vpop.f32.mrf.mxu0
        %v3071 = vadd.f32 %v3022, %v3070
        %3072 = vmatmul.bf16.gmra.mxu0 %v2848
        %v3073 = vpop.f32.mrf.mxu0
        %v3074 = vadd.f32 %v3025, %v3073
        %v3075 = vpop.f32.mrf.mxu0
        %v3076 = vadd.f32 %v3027, %v3075
        %3077 = vmatmul.bf16.gmra.mxu0 %v2850
        %v3078 = vpop.f32.mrf.mxu0
        %v3079 = vadd.f32 %v3030, %v3078
        %v3080 = vpop.f32.mrf.mxu0
        %v3081 = vadd.f32 %v3032, %v3080
        %3082 = vdwg.mxu0
        %v3083 = vadd.f32 %v2577, %v3044
        %v3084 = vadd.f32 %v2578, %v3046
        %v3085 = vadd.f32 %v2579, %v3049
        %v3086 = vadd.f32 %v2580, %v3051
        %v3087 = vadd.f32 %v2581, %v3054
        %v3088 = vadd.f32 %v2582, %v3056
        %v3089 = vadd.f32 %v2583, %v3059
        %v3090 = vadd.f32 %v2584, %v3061
        %v3091 = vadd.f32 %v2585, %v3064
        %v3092 = vadd.f32 %v2586, %v3066
        %v3093 = vadd.f32 %v2587, %v3069
        %v3094 = vadd.f32 %v2588, %v3071
        %v3095 = vadd.f32 %v2589, %v3074
        %v3096 = vadd.f32 %v2590, %v3076
        %v3097 = vadd.f32 %v2591, %v3079
        %v3098 = vadd.f32 %v2592, %v3081
        %s3099 = scalar_lea.vmem %s11, 1
        %v3100 = vld [vmem:[%s3099] sm:$0x1]
        %s3101 = scalar_lea.vmem %s12, 1
        %v3102 = vld [vmem:[%s3101] sm:$0x1]
        %3103 = vadd.xlane.f32.xlu0 %v3083
        %v3104 = vpop.xlane.xlu0 %3103
        %3105 = vadd.xlane.f32.xlu0 %v3084
        %v3106 = vpop.xlane.xlu0 %3105
        %3107 = vadd.xlane.f32.xlu0 %v3085
        %v3108 = vpop.xlane.xlu0 %3107
        %3109 = vadd.xlane.f32.xlu0 %v3086
        %v3110 = vpop.xlane.xlu0 %3109
        %3111 = vadd.xlane.f32.xlu0 %v3087
        %v3112 = vpop.xlane.xlu0 %3111
        %3113 = vadd.xlane.f32.xlu0 %v3088
        %v3114 = vpop.xlane.xlu0 %3113
        %3115 = vadd.xlane.f32.xlu0 %v3089
        %v3116 = vpop.xlane.xlu0 %3115
        %3117 = vadd.xlane.f32.xlu0 %v3090
        %v3118 = vpop.xlane.xlu0 %3117
        %3119 = vadd.xlane.f32.xlu0 %v3091
        %v3120 = vpop.xlane.xlu0 %3119
        %3121 = vadd.xlane.f32.xlu0 %v3092
        %v3122 = vpop.xlane.xlu0 %3121
        %3123 = vadd.xlane.f32.xlu0 %v3093
        %v3124 = vpop.xlane.xlu0 %3123
        %3125 = vadd.xlane.f32.xlu0 %v3094
        %v3126 = vpop.xlane.xlu0 %3125
        %3127 = vadd.xlane.f32.xlu0 %v3095
        %v3128 = vpop.xlane.xlu0 %3127
        %3129 = vadd.xlane.f32.xlu0 %v3096
        %v3130 = vpop.xlane.xlu0 %3129
        %3131 = vadd.xlane.f32.xlu0 %v3097
        %v3132 = vpop.xlane.xlu0 %3131
        %3133 = vadd.xlane.f32.xlu0 %v3098
        %v3134 = vpop.xlane.xlu0 %3133
        %v3135 = vmul.f32 %v3104, %v899
        %v3136 = vmul.f32 %v3106, %v899
        %v3137 = vmul.f32 %v3108, %v899
        %v3138 = vmul.f32 %v3110, %v899
        %v3139 = vmul.f32 %v3112, %v899
        %v3140 = vmul.f32 %v3114, %v899
        %v3141 = vmul.f32 %v3116, %v899
        %v3142 = vmul.f32 %v3118, %v899
        %v3143 = vmul.f32 %v3120, %v899
        %v3144 = vmul.f32 %v3122, %v899
        %v3145 = vmul.f32 %v3124, %v899
        %v3146 = vmul.f32 %v3126, %v899
        %v3147 = vmul.f32 %v3128, %v899
        %v3148 = vmul.f32 %v3130, %v899
        %v3149 = vmul.f32 %v3132, %v899
        %v3150 = vmul.f32 %v3134, %v899
        %v3151 = vsub.f32 %v3083, %v3135
        %v3152 = vsub.f32 %v3084, %v3136
        %v3153 = vsub.f32 %v3085, %v3137
        %v3154 = vsub.f32 %v3086, %v3138
        %v3155 = vsub.f32 %v3087, %v3139
        %v3156 = vsub.f32 %v3088, %v3140
        %v3157 = vsub.f32 %v3089, %v3141
        %v3158 = vsub.f32 %v3090, %v3142
        %v3159 = vsub.f32 %v3091, %v3143
        %v3160 = vsub.f32 %v3092, %v3144
        %v3161 = vsub.f32 %v3093, %v3145
        %v3162 = vsub.f32 %v3094, %v3146
        %v3163 = vsub.f32 %v3095, %v3147
        %v3164 = vsub.f32 %v3096, %v3148
        %v3165 = vsub.f32 %v3097, %v3149
        %v3166 = vsub.f32 %v3098, %v3150
        %v3167 = vmul.f32 %v3151, %v3151
        %v3168 = vmul.f32 %v3152, %v3152
        %v3169 = vmul.f32 %v3153, %v3153
        %v3170 = vmul.f32 %v3154, %v3154
        %v3171 = vmul.f32 %v3155, %v3155
        %v3172 = vmul.f32 %v3156, %v3156
        %v3173 = vmul.f32 %v3157, %v3157
        %v3174 = vmul.f32 %v3158, %v3158
        %v3175 = vmul.f32 %v3159, %v3159
        %v3176 = vmul.f32 %v3160, %v3160
        %v3177 = vmul.f32 %v3161, %v3161
        %v3178 = vmul.f32 %v3162, %v3162
        %v3179 = vmul.f32 %v3163, %v3163
        %v3180 = vmul.f32 %v3164, %v3164
        %v3181 = vmul.f32 %v3165, %v3165
        %v3182 = vmul.f32 %v3166, %v3166
        %3183 = vadd.xlane.f32.xlu0 %v3167
        %v3184 = vpop.xlane.xlu0 %3183
        %3185 = vadd.xlane.f32.xlu0 %v3168
        %v3186 = vpop.xlane.xlu0 %3185
        %3187 = vadd.xlane.f32.xlu0 %v3169
        %v3188 = vpop.xlane.xlu0 %3187
        %3189 = vadd.xlane.f32.xlu0 %v3170
        %v3190 = vpop.xlane.xlu0 %3189
        %3191 = vadd.xlane.f32.xlu0 %v3171
        %v3192 = vpop.xlane.xlu0 %3191
        %3193 = vadd.xlane.f32.xlu0 %v3172
        %v3194 = vpop.xlane.xlu0 %3193
        %3195 = vadd.xlane.f32.xlu0 %v3173
        %v3196 = vpop.xlane.xlu0 %3195
        %3197 = vadd.xlane.f32.xlu0 %v3174
        %v3198 = vpop.xlane.xlu0 %3197
        %3199 = vadd.xlane.f32.xlu0 %v3175
        %v3200 = vpop.xlane.xlu0 %3199
        %3201 = vadd.xlane.f32.xlu0 %v3176
        %v3202 = vpop.xlane.xlu0 %3201
        %3203 = vadd.xlane.f32.xlu0 %v3177
        %v3204 = vpop.xlane.xlu0 %3203
        %3205 = vadd.xlane.f32.xlu0 %v3178
        %v3206 = vpop.xlane.xlu0 %3205
        %3207 = vadd.xlane.f32.xlu0 %v3179
        %v3208 = vpop.xlane.xlu0 %3207
        %3209 = vadd.xlane.f32.xlu0 %v3180
        %v3210 = vpop.xlane.xlu0 %3209
        %3211 = vadd.xlane.f32.xlu0 %v3181
        %v3212 = vpop.xlane.xlu0 %3211
        %3213 = vadd.xlane.f32.xlu0 %v3182
        %v3214 = vpop.xlane.xlu0 %3213
        %v3215 = vmul.f32 %v3184, %v899
        %v3216 = vmul.f32 %v3186, %v899
        %v3217 = vmul.f32 %v3188, %v899
        %v3218 = vmul.f32 %v3190, %v899
        %v3219 = vmul.f32 %v3192, %v899
        %v3220 = vmul.f32 %v3194, %v899
        %v3221 = vmul.f32 %v3196, %v899
        %v3222 = vmul.f32 %v3198, %v899
        %v3223 = vmul.f32 %v3200, %v899
        %v3224 = vmul.f32 %v3202, %v899
        %v3225 = vmul.f32 %v3204, %v899
        %v3226 = vmul.f32 %v3206, %v899
        %v3227 = vmul.f32 %v3208, %v899
        %v3228 = vmul.f32 %v3210, %v899
        %v3229 = vmul.f32 %v3212, %v899
        %v3230 = vmul.f32 %v3214, %v899
        %v3231 = vadd.f32 %v3215, 1e-05
        %v3232 = vadd.f32 %v3216, 1e-05
        %v3233 = vadd.f32 %v3217, 1e-05
        %v3234 = vadd.f32 %v3218, 1e-05
        %v3235 = vadd.f32 %v3219, 1e-05
        %v3236 = vadd.f32 %v3220, 1e-05
        %v3237 = vadd.f32 %v3221, 1e-05
        %v3238 = vadd.f32 %v3222, 1e-05
        %v3239 = vadd.f32 %v3223, 1e-05
        %v3240 = vadd.f32 %v3224, 1e-05
        %v3241 = vadd.f32 %v3225, 1e-05
        %v3242 = vadd.f32 %v3226, 1e-05
        %v3243 = vadd.f32 %v3227, 1e-05
        %v3244 = vadd.f32 %v3228, 1e-05
        %v3245 = vadd.f32 %v3229, 1e-05
        %v3246 = vadd.f32 %v3230, 1e-05
        %v3247 = vrsqrt.pop %v3231
        %v3248 = vmul.f32 %v3247, %v3231
        %v3249 = vmul.f32 %v3248, %v3247
        %v3250 = vmul.f32 0.5, %v3249
        %v3251 = vsub.f32 1.5, %v3250
        %v3252 = vmul.f32 %v3247, %v3251
        %vm3253 = vweird.f32 %v3231
        %vm3254 = vweird.f32 %v3247
        %vm3255 = vmor %vm3253, %vm3254
        %v3256 = vsel %vm3255, %v3247, %v3252
        %v3257 = vrsqrt.pop %v3232
        %v3258 = vmul.f32 %v3257, %v3232
        %v3259 = vmul.f32 %v3258, %v3257
        %v3260 = vmul.f32 0.5, %v3259
        %v3261 = vsub.f32 1.5, %v3260
        %v3262 = vmul.f32 %v3257, %v3261
        %vm3263 = vweird.f32 %v3232
        %vm3264 = vweird.f32 %v3257
        %vm3265 = vmor %vm3263, %vm3264
        %v3266 = vsel %vm3265, %v3257, %v3262
        %v3267 = vrsqrt.pop %v3233
        %v3268 = vmul.f32 %v3267, %v3233
        %v3269 = vmul.f32 %v3268, %v3267
        %v3270 = vmul.f32 0.5, %v3269
        %v3271 = vsub.f32 1.5, %v3270
        %v3272 = vmul.f32 %v3267, %v3271
        %vm3273 = vweird.f32 %v3233
        %vm3274 = vweird.f32 %v3267
        %vm3275 = vmor %vm3273, %vm3274
        %v3276 = vsel %vm3275, %v3267, %v3272
        %v3277 = vrsqrt.pop %v3234
        %v3278 = vmul.f32 %v3277, %v3234
        %v3279 = vmul.f32 %v3278, %v3277
        %v3280 = vmul.f32 0.5, %v3279
        %v3281 = vsub.f32 1.5, %v3280
        %v3282 = vmul.f32 %v3277, %v3281
        %vm3283 = vweird.f32 %v3234
        %vm3284 = vweird.f32 %v3277
        %vm3285 = vmor %vm3283, %vm3284
        %v3286 = vsel %vm3285, %v3277, %v3282
        %v3287 = vrsqrt.pop %v3235
        %v3288 = vmul.f32 %v3287, %v3235
        %v3289 = vmul.f32 %v3288, %v3287
        %v3290 = vmul.f32 0.5, %v3289
        %v3291 = vsub.f32 1.5, %v3290
        %v3292 = vmul.f32 %v3287, %v3291
        %vm3293 = vweird.f32 %v3235
        %vm3294 = vweird.f32 %v3287
        %vm3295 = vmor %vm3293, %vm3294
        %v3296 = vsel %vm3295, %v3287, %v3292
        %v3297 = vrsqrt.pop %v3236
        %v3298 = vmul.f32 %v3297, %v3236
        %v3299 = vmul.f32 %v3298, %v3297
        %v3300 = vmul.f32 0.5, %v3299
        %v3301 = vsub.f32 1.5, %v3300
        %v3302 = vmul.f32 %v3297, %v3301
        %vm3303 = vweird.f32 %v3236
        %vm3304 = vweird.f32 %v3297
        %vm3305 = vmor %vm3303, %vm3304
        %v3306 = vsel %vm3305, %v3297, %v3302
        %v3307 = vrsqrt.pop %v3237
        %v3308 = vmul.f32 %v3307, %v3237
        %v3309 = vmul.f32 %v3308, %v3307
        %v3310 = vmul.f32 0.5, %v3309
        %v3311 = vsub.f32 1.5, %v3310
        %v3312 = vmul.f32 %v3307, %v3311
        %vm3313 = vweird.f32 %v3237
        %vm3314 = vweird.f32 %v3307
        %vm3315 = vmor %vm3313, %vm3314
        %v3316 = vsel %vm3315, %v3307, %v3312
        %v3317 = vrsqrt.pop %v3238
        %v3318 = vmul.f32 %v3317, %v3238
        %v3319 = vmul.f32 %v3318, %v3317
        %v3320 = vmul.f32 0.5, %v3319
        %v3321 = vsub.f32 1.5, %v3320
        %v3322 = vmul.f32 %v3317, %v3321
        %vm3323 = vweird.f32 %v3238
        %vm3324 = vweird.f32 %v3317
        %vm3325 = vmor %vm3323, %vm3324
        %v3326 = vsel %vm3325, %v3317, %v3322
        %v3327 = vrsqrt.pop %v3239
        %v3328 = vmul.f32 %v3327, %v3239
        %v3329 = vmul.f32 %v3328, %v3327
        %v3330 = vmul.f32 0.5, %v3329
        %v3331 = vsub.f32 1.5, %v3330
        %v3332 = vmul.f32 %v3327, %v3331
        %vm3333 = vweird.f32 %v3239
        %vm3334 = vweird.f32 %v3327
        %vm3335 = vmor %vm3333, %vm3334
        %v3336 = vsel %vm3335, %v3327, %v3332
        %v3337 = vrsqrt.pop %v3240
        %v3338 = vmul.f32 %v3337, %v3240
        %v3339 = vmul.f32 %v3338, %v3337
        %v3340 = vmul.f32 0.5, %v3339
        %v3341 = vsub.f32 1.5, %v3340
        %v3342 = vmul.f32 %v3337, %v3341
        %vm3343 = vweird.f32 %v3240
        %vm3344 = vweird.f32 %v3337
        %vm3345 = vmor %vm3343, %vm3344
        %v3346 = vsel %vm3345, %v3337, %v3342
        %v3347 = vrsqrt.pop %v3241
        %v3348 = vmul.f32 %v3347, %v3241
        %v3349 = vmul.f32 %v3348, %v3347
        %v3350 = vmul.f32 0.5, %v3349
        %v3351 = vsub.f32 1.5, %v3350
        %v3352 = vmul.f32 %v3347, %v3351
        %vm3353 = vweird.f32 %v3241
        %vm3354 = vweird.f32 %v3347
        %vm3355 = vmor %vm3353, %vm3354
        %v3356 = vsel %vm3355, %v3347, %v3352
        %v3357 = vrsqrt.pop %v3242
        %v3358 = vmul.f32 %v3357, %v3242
        %v3359 = vmul.f32 %v3358, %v3357
        %v3360 = vmul.f32 0.5, %v3359
        %v3361 = vsub.f32 1.5, %v3360
        %v3362 = vmul.f32 %v3357, %v3361
        %vm3363 = vweird.f32 %v3242
        %vm3364 = vweird.f32 %v3357
        %vm3365 = vmor %vm3363, %vm3364
        %v3366 = vsel %vm3365, %v3357, %v3362
        %v3367 = vrsqrt.pop %v3243
        %v3368 = vmul.f32 %v3367, %v3243
        %v3369 = vmul.f32 %v3368, %v3367
        %v3370 = vmul.f32 0.5, %v3369
        %v3371 = vsub.f32 1.5, %v3370
        %v3372 = vmul.f32 %v3367, %v3371
        %vm3373 = vweird.f32 %v3243
        %vm3374 = vweird.f32 %v3367
        %vm3375 = vmor %vm3373, %vm3374
        %v3376 = vsel %vm3375, %v3367, %v3372
        %v3377 = vrsqrt.pop %v3244
        %v3378 = vmul.f32 %v3377, %v3244
        %v3379 = vmul.f32 %v3378, %v3377
        %v3380 = vmul.f32 0.5, %v3379
        %v3381 = vsub.f32 1.5, %v3380
        %v3382 = vmul.f32 %v3377, %v3381
        %vm3383 = vweird.f32 %v3244
        %vm3384 = vweird.f32 %v3377
        %vm3385 = vmor %vm3383, %vm3384
        %v3386 = vsel %vm3385, %v3377, %v3382
        %v3387 = vrsqrt.pop %v3245
        %v3388 = vmul.f32 %v3387, %v3245
        %v3389 = vmul.f32 %v3388, %v3387
        %v3390 = vmul.f32 0.5, %v3389
        %v3391 = vsub.f32 1.5, %v3390
        %v3392 = vmul.f32 %v3387, %v3391
        %vm3393 = vweird.f32 %v3245
        %vm3394 = vweird.f32 %v3387
        %vm3395 = vmor %vm3393, %vm3394
        %v3396 = vsel %vm3395, %v3387, %v3392
        %v3397 = vrsqrt.pop %v3246
        %v3398 = vmul.f32 %v3397, %v3246
        %v3399 = vmul.f32 %v3398, %v3397
        %v3400 = vmul.f32 0.5, %v3399
        %v3401 = vsub.f32 1.5, %v3400
        %v3402 = vmul.f32 %v3397, %v3401
        %vm3403 = vweird.f32 %v3246
        %vm3404 = vweird.f32 %v3397
        %vm3405 = vmor %vm3403, %vm3404
        %v3406 = vsel %vm3405, %v3397, %v3402
        %v3407 = vmul.f32 %v3151, %v3256
        %v3408 = vmul.f32 %v3152, %v3266
        %v3409 = vmul.f32 %v3153, %v3276
        %v3410 = vmul.f32 %v3154, %v3286
        %v3411 = vmul.f32 %v3155, %v3296
        %v3412 = vmul.f32 %v3156, %v3306
        %v3413 = vmul.f32 %v3157, %v3316
        %v3414 = vmul.f32 %v3158, %v3326
        %v3415 = vmul.f32 %v3159, %v3336
        %v3416 = vmul.f32 %v3160, %v3346
        %v3417 = vmul.f32 %v3161, %v3356
        %v3418 = vmul.f32 %v3162, %v3366
        %v3419 = vmul.f32 %v3163, %v3376
        %v3420 = vmul.f32 %v3164, %v3386
        %v3421 = vmul.f32 %v3165, %v3396
        %v3422 = vmul.f32 %v3166, %v3406
        %v3424 = vperm.slane %v3100, 0
        %v3426 = vmul.f32 %v3407, %v3424
        %v3427 = vmul.f32 %v3408, %v3424
        %v3428 = vmul.f32 %v3409, %v3424
        %v3429 = vmul.f32 %v3410, %v3424
        %v3430 = vmul.f32 %v3411, %v3424
        %v3431 = vmul.f32 %v3412, %v3424
        %v3432 = vmul.f32 %v3413, %v3424
        %v3433 = vmul.f32 %v3414, %v3424
        %v3434 = vmul.f32 %v3415, %v3424
        %v3435 = vmul.f32 %v3416, %v3424
        %v3436 = vmul.f32 %v3417, %v3424
        %v3437 = vmul.f32 %v3418, %v3424
        %v3438 = vmul.f32 %v3419, %v3424
        %v3439 = vmul.f32 %v3420, %v3424
        %v3440 = vmul.f32 %v3421, %v3424
        %v3441 = vmul.f32 %v3422, %v3424
        %v3443 = vperm.slane %v3102, 0
        %v3445 = vadd.f32 %v3426, %v3443
        %v3446 = vadd.f32 %v3427, %v3443
        %v3447 = vadd.f32 %v3428, %v3443
        %v3448 = vadd.f32 %v3429, %v3443
        %v3449 = vadd.f32 %v3430, %v3443
        %v3450 = vadd.f32 %v3431, %v3443
        %v3451 = vadd.f32 %v3432, %v3443
        %v3452 = vadd.f32 %v3433, %v3443
        %v3453 = vadd.f32 %v3434, %v3443
        %v3454 = vadd.f32 %v3435, %v3443
        %v3455 = vadd.f32 %v3436, %v3443
        %v3456 = vadd.f32 %v3437, %v3443
        %v3457 = vadd.f32 %v3438, %v3443
        %v3458 = vadd.f32 %v3439, %v3443
        %v3459 = vadd.f32 %v3440, %v3443
        %v3460 = vadd.f32 %v3441, %v3443
        %3461 = vst [vmem:[%s523] sm:$0xff] %v3445
        %3462 = vst [vmem:[%s523 + $0x8] sm:$0xff] %v3446
        %3463 = vst [vmem:[%s523 + $0x10] sm:$0xff] %v3447
        %3464 = vst [vmem:[%s523 + $0x18] sm:$0xff] %v3448
        %3465 = vst [vmem:[%s523 + $0x20] sm:$0xff] %v3449
        %3466 = vst [vmem:[%s523 + $0x28] sm:$0xff] %v3450
        %3467 = vst [vmem:[%s523 + $0x30] sm:$0xff] %v3451
        %3468 = vst [vmem:[%s523 + $0x38] sm:$0xff] %v3452
        %3469 = vst [vmem:[%s523 + $0x40] sm:$0xff] %v3453
        %3470 = vst [vmem:[%s523 + $0x48] sm:$0xff] %v3454
        %3471 = vst [vmem:[%s523 + $0x50] sm:$0xff] %v3455
        %3472 = vst [vmem:[%s523 + $0x58] sm:$0xff] %v3456
        %3473 = vst [vmem:[%s523 + $0x60] sm:$0xff] %v3457
        %3474 = vst [vmem:[%s523 + $0x68] sm:$0xff] %v3458
        %3475 = vst [vmem:[%s523 + $0x70] sm:$0xff] %v3459
        %3476 = vst [vmem:[%s523 + $0x78] sm:$0xff] %v3460
        %v3477 = vpack.c.bf16 %v3446, %v3445
        %v3478 = vpack.c.bf16 %v3448, %v3447
        %v3479 = vpack.c.bf16 %v3450, %v3449
        %v3480 = vpack.c.bf16 %v3452, %v3451
        %v3481 = vpack.c.bf16 %v3454, %v3453
        %v3482 = vpack.c.bf16 %v3456, %v3455
        %v3483 = vpack.c.bf16 %v3458, %v3457
        %v3484 = vpack.c.bf16 %v3460, %v3459
        %v3485 = vld [vmem:[%s13] sm:$0xf]
        %v3486 = vld [vmem:[%s13 + $0x4] sm:$0xf]
        %v3487 = vld [vmem:[%s13 + $0x8] sm:$0xf]
        %v3488 = vld [vmem:[%s13 + $0xc] sm:$0xf]
        %v3489 = vld [vmem:[%s13 + $0x10] sm:$0xf]
        %v3490 = vld [vmem:[%s13 + $0x14] sm:$0xf]
        %v3491 = vld [vmem:[%s13 + $0x18] sm:$0xf]
        %v3492 = vld [vmem:[%s13 + $0x1c] sm:$0xf]
        %v3493 = vld [vmem:[%s13 + $0x20] sm:$0xf]
        %v3494 = vld [vmem:[%s13 + $0x24] sm:$0xf]
        %v3495 = vld [vmem:[%s13 + $0x28] sm:$0xf]
        %v3496 = vld [vmem:[%s13 + $0x2c] sm:$0xf]
        %v3497 = vld [vmem:[%s13 + $0x30] sm:$0xf]
        %v3498 = vld [vmem:[%s13 + $0x34] sm:$0xf]
        %v3499 = vld [vmem:[%s13 + $0x38] sm:$0xf]
        %v3500 = vld [vmem:[%s13 + $0x3c] sm:$0xf]
        %v3501 = vld [vmem:[%s14] sm:$0x1]
        %v3503 = vperm.slane %v3501, 0
        %v3521 = vunpack.c.l.b16 %v3485
        %v3522 = vunpack.c.l.b16 %v3486
        %v3523 = vunpack.c.l.b16 %v3487
        %v3524 = vunpack.c.l.b16 %v3488
        %v3525 = vunpack.c.l.b16 %v3489
        %v3526 = vunpack.c.l.b16 %v3490
        %v3527 = vunpack.c.l.b16 %v3491
        %v3528 = vunpack.c.l.b16 %v3492
        %v3529 = vunpack.c.l.b16 %v3493
        %v3530 = vunpack.c.l.b16 %v3494
        %v3531 = vunpack.c.l.b16 %v3495
        %v3532 = vunpack.c.l.b16 %v3496
        %v3533 = vunpack.c.l.b16 %v3497
        %v3534 = vunpack.c.l.b16 %v3498
        %v3535 = vunpack.c.l.b16 %v3499
        %v3536 = vunpack.c.l.b16 %v3500
        %v3537 = vpack.c.b16 %v3522, %v3521
        %v3538 = vpack.c.b16 %v3524, %v3523
        %v3539 = vpack.c.b16 %v3526, %v3525
        %v3540 = vpack.c.b16 %v3528, %v3527
        %v3541 = vpack.c.b16 %v3530, %v3529
        %v3542 = vpack.c.b16 %v3532, %v3531
        %v3543 = vpack.c.b16 %v3534, %v3533
        %v3544 = vpack.c.b16 %v3536, %v3535
        %3553 = vmatpush.bf16.msra.mxu0 %v3544
        %3554 = vmatpush.bf16.msra.mxu0 %v3543
        %3555 = vmatpush.bf16.msra.mxu0 %v3542
        %3556 = vmatpush.bf16.msra.mxu0 %v3541
        %3557 = vmatpush.bf16.msra.mxu0 %v3540
        %3558 = vmatpush.bf16.msra.mxu0 %v3539
        %3559 = vmatpush.bf16.msra.mxu0 %v3538
        %3560 = vmatpush.bf16.msra.mxu0 %v3537
        %3561 = vmatmul.bf16.gmra.mxu0 %v3477
        %v3562 = vpop.f32.mrf.mxu0
        %v3563 = vadd.f32 %v3503, %v3562
        %v3564 = vpop.f32.mrf.mxu0
        %v3565 = vadd.f32 %v3503, %v3564
        %3566 = vmatmul.bf16.gmra.mxu0 %v3478
        %v3567 = vpop.f32.mrf.mxu0
        %v3568 = vadd.f32 %v3503, %v3567
        %v3569 = vpop.f32.mrf.mxu0
        %v3570 = vadd.f32 %v3503, %v3569
        %3571 = vmatmul.bf16.gmra.mxu0 %v3479
        %v3572 = vpop.f32.mrf.mxu0
        %v3573 = vadd.f32 %v3503, %v3572
        %v3574 = vpop.f32.mrf.mxu0
        %v3575 = vadd.f32 %v3503, %v3574
        %3576 = vmatmul.bf16.gmra.mxu0 %v3480
        %v3577 = vpop.f32.mrf.mxu0
        %v3578 = vadd.f32 %v3503, %v3577
        %v3579 = vpop.f32.mrf.mxu0
        %v3580 = vadd.f32 %v3503, %v3579
        %3581 = vmatmul.bf16.gmra.mxu0 %v3481
        %v3582 = vpop.f32.mrf.mxu0
        %v3583 = vadd.f32 %v3503, %v3582
        %v3584 = vpop.f32.mrf.mxu0
        %v3585 = vadd.f32 %v3503, %v3584
        %3586 = vmatmul.bf16.gmra.mxu0 %v3482
        %v3587 = vpop.f32.mrf.mxu0
        %v3588 = vadd.f32 %v3503, %v3587
        %v3589 = vpop.f32.mrf.mxu0
        %v3590 = vadd.f32 %v3503, %v3589
        %3591 = vmatmul.bf16.gmra.mxu0 %v3483
        %v3592 = vpop.f32.mrf.mxu0
        %v3593 = vadd.f32 %v3503, %v3592
        %v3594 = vpop.f32.mrf.mxu0
        %v3595 = vadd.f32 %v3503, %v3594
        %3596 = vmatmul.bf16.gmra.mxu0 %v3484
        %v3597 = vpop.f32.mrf.mxu0
        %v3598 = vadd.f32 %v3503, %v3597
        %v3599 = vpop.f32.mrf.mxu0
        %v3600 = vadd.f32 %v3503, %v3599
        %3601 = vdwg.mxu0
        %3602 = vst [vmem:[%s534] sm:$0xff] %v3563
        %3603 = vst [vmem:[%s534 + $0x8] sm:$0xff] %v3565
        %3604 = vst [vmem:[%s534 + $0x10] sm:$0xff] %v3568
        %3605 = vst [vmem:[%s534 + $0x18] sm:$0xff] %v3570
        %3606 = vst [vmem:[%s534 + $0x20] sm:$0xff] %v3573
        %3607 = vst [vmem:[%s534 + $0x28] sm:$0xff] %v3575
        %3608 = vst [vmem:[%s534 + $0x30] sm:$0xff] %v3578
        %3609 = vst [vmem:[%s534 + $0x38] sm:$0xff] %v3580
        %3610 = vst [vmem:[%s534 + $0x40] sm:$0xff] %v3583
        %3611 = vst [vmem:[%s534 + $0x48] sm:$0xff] %v3585
        %3612 = vst [vmem:[%s534 + $0x50] sm:$0xff] %v3588
        %3613 = vst [vmem:[%s534 + $0x58] sm:$0xff] %v3590
        %3614 = vst [vmem:[%s534 + $0x60] sm:$0xff] %v3593
        %3615 = vst [vmem:[%s534 + $0x68] sm:$0xff] %v3595
        %3616 = vst [vmem:[%s534 + $0x70] sm:$0xff] %v3598
        %3617 = vst [vmem:[%s534 + $0x78] sm:$0xff] %v3600
        %s3618 = smul.u32 16, %s31
        %p3619 = scmp.lt.s32.totalorder %s3618, 31
        %s3620 = scalar_select %p3619, %s3618, 31
        %s3621 = smul.addr %s3620, 8
        %s3622 = scalar_lea.vmem %s15, %s3621
        %s3623 = sand.u32 %s385, 1
        %s3624 = scalar_lea.sflag [#allocation3], %s3623
        %s3625 = sand.u32 %s385, 1
        %s3626 = smul.addr %s3625, 128
        %s3627 = scalar_lea.vmem [#allocation2], %s3626
        // Predicated region
        $region81: #{transformer_encoder.1} parent=79 // pred_check
          %p3628 = pneg %p369
        $region82: #{transformer_encoder.1} parent=79 // pred_check_branch
          %3630 = sbr.rel (%p3628) target = $region84
        $region83: #{transformer_encoder.1} parent=79 // pred_region
          %s3631 = smul.u32 16, %s31
        $region84: #{transformer_encoder.1} parent=79 // pred_fallthru
          _
        // Predicated region
        $region85: #{transformer_encoder.1} parent=79 // pred_check
          %p3632 = pneg %p395
        $region86: #{transformer_encoder.1} parent=79 // pred_check_branch
          %3634 = sbr.rel (%p3632) target = $region88
        $region87: #{transformer_encoder.1} parent=79 // pred_region
          %s3635 = smul.u32 16, %s31
          %3637 = vsyncadd %s3624, 0
          %s3638 = smul.addr %s3635, 8
          %s3639 = scalar_lea.hbm %s16, %s3638
          %s3640 = sshll.u32 %s3627, 4
          %s3641 = int_to_ptr.vmem [resolvable:$true] %s3640
          %s3642 = sshll.u32 %s3639, 4
          %s3643 = int_to_ptr.hbm [resolvable:$true] %s3642
          %3648 = dma.vmem_to_hbm [thread:$0]  %s3641, 2048, %s3643, %s3624, 128, 128, 8
        $region88: #{transformer_encoder.1} parent=79 // pred_fallthru
          _
      $region80: #{transformer_encoder.1} parent=5 // pred_fallthru
        _
      %p3649 = scmp.le.s32.totalorder 2, %s26
      // Predicated region
      $region89: #{transformer_encoder.1} parent=5 // pred_check
        %p3650 = pneg %p3649
      $region90: #{transformer_encoder.1} parent=5 // pred_check_branch
        %3652 = sbr.rel (%p3650) target = $region92
      $region91: #{transformer_encoder.1} parent=5 // pred_region
        %s3653 = ssub.s32 %s26, 2
        // Predicated region
        $region93: #{transformer_encoder.1} parent=91 // pred_check
          %p3654 = pneg %p375
        $region94: #{transformer_encoder.1} parent=91 // pred_check_branch
          %3656 = sbr.rel (%p3654) target = $region96
        $region95: #{transformer_encoder.1} parent=91 // pred_region
          %s3657 = smul.u32 16, %s32
          %p3658 = scmp.lt.s32.totalorder %s3657, 31
          %s3659 = scalar_select %p3658, %s3657, 31
          %s3660 = smul.addr %s3659, 8
          %s3661 = scalar_lea.vmem %s15, %s3660
        $region96: #{transformer_encoder.1} parent=91 // pred_fallthru
          _
        // Predicated region
        $region97: #{transformer_encoder.1} parent=91 // pred_check
          %p3662 = pneg %p401
        $region98: #{transformer_encoder.1} parent=91 // pred_check_branch
          %3664 = sbr.rel (%p3662) target = $region100
        $region99: #{transformer_encoder.1} parent=91 // pred_region
          %s3665 = sand.u32 %s386, 1
          %s3666 = scalar_lea.sflag [#allocation3], %s3665
          %s3667 = sand.u32 %s386, 1
          %s3668 = smul.addr %s3667, 128
          %s3669 = scalar_lea.vmem [#allocation2], %s3668
          %3671 = dma.done %s3666, 2048
        $region100: #{transformer_encoder.1} parent=91 // pred_fallthru
          _
      $region92: #{transformer_encoder.1} parent=5 // pred_fallthru
        _
    $region6: #{transformer_encoder.1} parent=1 // loop_footer
      %s30 = sadd.s32 1, %s26
    $region7: #{transformer_encoder.1} parent=1 // loop_footer_branch
      %25 = sbr.rel target = $region3
    $region8: #{transformer_encoder.1} parent=1 // loop_exit
      _
    %3672 = vsyncpa [#allocation3], 1
    %s3673 = scalar_lea.sflag [#allocation3], 1
    %3674 = vsyncpa %s3673, 1

</llo_original>
